<compile_context>
chip_gen: v7x
topology: tpu7x:2x2x1
jax: 0.10.0
libtpu: 0.0.40
codegen_flags: <defaults>
</compile_context>

<pallas_src>
import functools

import jax
import jax.numpy as jnp
from jax.experimental import pallas as pl
from jax.experimental.pallas import tpu as pltpu

BN_EPS = 1e-5
COMPUTE_DTYPE = jnp.bfloat16   # MXU inputs / carried activations (f32 accumulate)


# --------------------------------------------------------------------------
# Fused whole-network kernel (cached builder: identical shapes share one kernel)
# --------------------------------------------------------------------------

@functools.lru_cache(maxsize=None)
def _network_call(B, T, CH, Cb, nf, ks, Kp, n_blocks, use_residual):
    """One pallas_call for the whole InceptionTime network.

    grid = (n_blocks, 3): block index (outer), module-within-block index (inner).
    Activations are carried across grid steps in VMEM scratch.
    """
    ks = tuple(ks)
    Kmax = max(ks)
    p_ref_c = Kmax // 2                       # reference tap center (largest kernel)
    pad_alloc = ((max(p_ref_c, Kp - 1 - p_ref_c) + 7) // 8) * 8
    off = pad_alloc - p_ref_c                 # slab offset of global tap 0
    Tp = T + 2 * pad_alloc
    D = Kp * Cb + CH                          # fused matmul contraction depth
    BT = B * T
    f32 = jnp.float32
    cdt = COMPUTE_DTYPE

    def kernel(*refs):
        if use_residual:
            (x_ref, wb_ref, wbig_ref, sc_ref, sh_ref,
             wres_ref, rsc_ref, rsh_ref,
             o_ref, act_ref, xbp_ref, blk_ref) = refs
        else:
            (x_ref, wb_ref, wbig_ref, sc_ref, sh_ref,
             o_ref, act_ref, xbp_ref) = refs

        bi = pl.program_id(0)                 # block index
        jm = pl.program_id(1)                 # module-within-block index

        # ---- once, at the very first grid step: load input, zero the halo ----
        @pl.when(jnp.logical_and(bi == 0, jm == 0))
        def _():
            act_ref[...] = x_ref[...]
            xbp_ref[:, :pad_alloc, :] = jnp.zeros((B, pad_alloc, Cb), cdt)
            xbp_ref[:, pad_alloc + T:, :] = jnp.zeros((B, pad_alloc, Cb), cdt)

        x_in = act_ref[...]                                  # (B, T, CH) bf16

        if use_residual:
            @pl.when(jm == 0)                                # save block input
            def _():
                blk_ref[...] = x_in

        # ---- bottleneck 1x1 conv into the zero-padded VMEM slab ----
        xf = x_in.reshape(BT, CH)
        xb = jnp.dot(xf, wb_ref[0], preferred_element_type=f32)      # (BT, Cb)
        xbp_ref[:, pad_alloc:pad_alloc + T, :] = xb.reshape(B, T, Cb).astype(cdt)

        # ---- im2col taps (padded to Kp for lane alignment) ----
        cols = [xbp_ref[:, off + k:off + k + T, :].reshape(BT, Cb)
                for k in range(Kp)]

        # ---- maxpool(3, stride 1, pad 1) along time (edge-replicated shifts) ----
        up = jnp.concatenate([x_in[:, :1, :], x_in[:, :T - 1, :]], axis=1)
        dn = jnp.concatenate([x_in[:, 1:, :], x_in[:, T - 1:, :]], axis=1)
        xmax = jnp.maximum(jnp.maximum(up, x_in), dn).reshape(BT, CH)

        # ---- single fused matmul: all three branch convs + maxpool 1x1 conv ----
        ops = jnp.concatenate(cols + [xmax], axis=-1)                 # (BT, D)
        z = jnp.dot(ops, wbig_ref[0], preferred_element_type=f32)     # (BT, CH)

        # ---- BatchNorm(eval) + ReLU epilogue (f32) ----
        y = jnp.maximum(z * sc_ref[0] + sh_ref[0], 0.0)               # (BT, CH)

        is_last_block = bi == n_blocks - 1

        if use_residual:
            @pl.when(jm == 2)
            def _():
                r = jnp.dot(blk_ref[...].reshape(BT, CH), wres_ref[0],
                            preferred_element_type=f32)
                r = r * rsc_ref[0] + rsh_ref[0]
                yr = jnp.maximum(y + r, 0.0)
                act_ref[...] = yr.reshape(B, T, CH).astype(cdt)

                @pl.when(is_last_block)
                def _():
                    o_ref[...] = yr.reshape(B, T, CH).astype(o_ref.dtype)

            @pl.when(jm != 2)
            def _():
                act_ref[...] = y.reshape(B, T, CH).astype(cdt)
        else:
            act_ref[...] = y.reshape(B, T, CH).astype(cdt)

            @pl.when(jnp.logical_and(jm == 2, is_last_block))
            def _():
                o_ref[...] = y.reshape(B, T, CH).astype(o_ref.dtype)

    in_specs = [
        pl.BlockSpec((B, T, CH), lambda bi, jm: (0, 0, 0)),            # padded input
        pl.BlockSpec((1, CH, Cb), lambda bi, jm: (bi * 3 + jm, 0, 0)),  # bottleneck w
        pl.BlockSpec((1, D, CH), lambda bi, jm: (bi * 3 + jm, 0, 0)),   # fused big w
        pl.BlockSpec((1, 1, CH), lambda bi, jm: (bi * 3 + jm, 0, 0)),   # bn scale
        pl.BlockSpec((1, 1, CH), lambda bi, jm: (bi * 3 + jm, 0, 0)),   # bn shift
    ]
    if use_residual:
        in_specs += [
            pl.BlockSpec((1, CH, CH), lambda bi, jm: (bi, 0, 0)),       # residual w
            pl.BlockSpec((1, 1, CH), lambda bi, jm: (bi, 0, 0)),        # residual scale
            pl.BlockSpec((1, 1, CH), lambda bi, jm: (bi, 0, 0)),        # residual shift
        ]

    scratch = [pltpu.VMEM((B, T, CH), cdt),     # carried activation
               pltpu.VMEM((B, Tp, Cb), cdt)]    # zero-padded bottleneck slab
    if use_residual:
        scratch.append(pltpu.VMEM((B, T, CH), cdt))   # block input (for residual)

    return pl.pallas_call(
        kernel,
        out_shape=jax.ShapeDtypeStruct((B, T, CH), jnp.float32),
        grid=(n_blocks, 3),
        in_specs=in_specs,
        out_specs=pl.BlockSpec((B, T, CH), lambda bi, jm: (0, 0, 0)),
        scratch_shapes=scratch,
        compiler_params=pltpu.CompilerParams(
            dimension_semantics=("arbitrary", "arbitrary"),
            vmem_limit_bytes=32 * 1024 * 1024,
        ),
    )


# --------------------------------------------------------------------------
# Wrapper-side parameter packing (constant-folded under jit)
# --------------------------------------------------------------------------

def _bn_fold(bn, bias=None):
    scale = bn["gamma"] / jnp.sqrt(bn["var"] + BN_EPS)
    shift = bn["beta"] - bn["mean"] * scale
    if bias is not None:
        shift = shift + bias * scale
    return scale, shift


def _pad_taps(Kmax, Cb):
    """Smallest Kp >= Kmax with Kp*Cb a multiple of 128 lanes (fallback: Kmax)."""
    Kp = Kmax
    while (Kp * Cb) % 128 != 0 and Kp < Kmax + 128:
        Kp += 1
    return Kp if (Kp * Cb) % 128 == 0 else Kmax


def _pack_module(p, ks, Kp, Cb, CH, nf, dtype):
    """Pack one Inception module's weights into the fused-kernel layout."""
    Kmax = max(ks)
    p_ref_c = Kmax // 2
    # bottleneck 1x1 conv -> (CH, Cb), input channels zero-padded to CH
    if p["bottleneck_w"] is None:           # pass_through (in_channels == 1)
        wb = jnp.zeros((CH, Cb), jnp.float32).at[0, 0].set(1.0)
        b_in = 1
    else:
        w = p["bottleneck_w"][:, :, 0]      # (Cb, Cin)
        cin = w.shape[1]
        wb = jnp.zeros((CH, Cb), jnp.float32).at[:cin, :].set(jnp.transpose(w))
        b_in = Cb
    # branch convs -> (Kp*Cb, 3*nf), tap-major / channel-minor, taps centered
    branch = []
    for w, K in zip((p["w1"], p["w2"], p["w3"]), ks):
        lead = p_ref_c - K // 2             # assumes odd kernel sizes
        wt = jnp.transpose(w, (2, 1, 0))    # (K, b_in, nf)
        wt = jnp.pad(wt, ((lead, Kp - K - lead), (0, Cb - b_in), (0, 0)))
        branch.append(wt.reshape(Kp * Cb, nf))
    wbr = jnp.concatenate(branch, axis=-1)  # (Kp*Cb, 3*nf)
    # maxpool-branch 1x1 conv -> (CH, nf), input channels zero-padded to CH
    w4 = p["w4"][:, :, 0]                   # (nf, Cin)
    cin4 = w4.shape[1]
    w4t = jnp.zeros((CH, nf), jnp.float32).at[:cin4, :].set(jnp.transpose(w4))
    # block-structured fused weight (Kp*Cb + CH, 4*nf)
    D = Kp * Cb + CH
    wbig = jnp.zeros((D, 4 * nf), jnp.float32)
    wbig = wbig.at[:Kp * Cb, :3 * nf].set(wbr)
    wbig = wbig.at[Kp * Cb:, 3 * nf:].set(w4t)
    sc, sh = _bn_fold(p["bn"])
    return (wb.astype(dtype), wbig.astype(dtype),
            sc.reshape(1, -1).astype(jnp.float32),
            sh.reshape(1, -1).astype(jnp.float32))


def _pack_network(params, ks, Kp, Cb, CH, nf, use_residual, dtype):
    WB, WBIG, SC, SH = [], [], [], []
    WRES, RSC, RSH = [], [], []
    for blk in params:
        for name in ("inc1", "inc2", "inc3"):
            wb, wbig, sc, sh = _pack_module(blk[name], ks, Kp, Cb, CH, nf, dtype)
            WB.append(wb); WBIG.append(wbig); SC.append(sc); SH.append(sh)
        if use_residual:
            w = blk["res_w"][:, :, 0]       # (CH, Cin)
            cin = w.shape[1]
            wres = jnp.zeros((CH, CH), jnp.float32).at[:cin, :].set(jnp.transpose(w))
            rsc, rsh = _bn_fold(blk["res_bn"], bias=blk["res_b"])
            WRES.append(wres.astype(dtype))
            RSC.append(rsc.reshape(1, -1).astype(jnp.float32))
            RSH.append(rsh.reshape(1, -1).astype(jnp.float32))
    args = [jnp.stack(WB), jnp.stack(WBIG), jnp.stack(SC), jnp.stack(SH)]
    if use_residual:
        args += [jnp.stack(WRES), jnp.stack(RSC), jnp.stack(RSH)]
    return args


def inception_time_forward(x_nct, params, ks, use_residual=True):
    """x_nct: (B, C_in, T) PyTorch layout. Returns (B, 4*n_filters, T) float32."""
    B, Cin, T = x_nct.shape
    nf = params[0]["inc1"]["w1"].shape[0]
    CH = 4 * nf
    assert Cin <= CH, "channel padding assumes in_channels <= 4*n_filters"
    bw = params[0]["inc1"]["bottleneck_w"]
    Cb = bw.shape[0] if bw is not None else params[0]["inc2"]["bottleneck_w"].shape[0]
    Kp = _pad_taps(max(ks), Cb)

    # channels-last, bf16, channels zero-padded to a lane-dense CH width
    x = jnp.transpose(x_nct, (0, 2, 1)).astype(COMPUTE_DTYPE)       # (B, T, Cin)
    x = jnp.pad(x, ((0, 0), (0, 0), (0, CH - Cin)))                 # (B, T, CH)

    w_args = _pack_network(params, tuple(ks), Kp, Cb, CH, nf, use_residual,
                           COMPUTE_DTYPE)
    call = _network_call(B, T, CH, Cb, nf, tuple(ks), Kp, len(params), use_residual)
    out = call(x, *w_args)                                          # (B, T, CH) f32
    return jnp.transpose(out, (0, 2, 1))                            # (B, CH, T)


# --------------------------------------------------------------------------
# Deterministic parameter initialisation (synthetic, PyTorch weight layouts)
# --------------------------------------------------------------------------

def _conv_w(key, cout, cin, K):
    return jax.random.normal(key, (cout, cin, K), jnp.float32) / jnp.sqrt(cin * K)


def _bn_params(c):
    return dict(gamma=jnp.ones((c,), jnp.float32),
                beta=jnp.zeros((c,), jnp.float32),
                mean=jnp.zeros((c,), jnp.float32),
                var=jnp.ones((c,), jnp.float32))


def init_inception(key, in_c, nf, ks, bc):
    k = jax.random.split(key, 5)
    p = {}
    if in_c > 1:
        p["bottleneck_w"] = _conv_w(k[0], bc, in_c, 1)
        b_in = bc
    else:
        p["bottleneck_w"] = None
        b_in = 1
    p["w1"] = _conv_w(k[1], nf, b_in, ks[0])
    p["w2"] = _conv_w(k[2], nf, b_in, ks[1])
    p["w3"] = _conv_w(k[3], nf, b_in, ks[2])
    p["w4"] = _conv_w(k[4], nf, in_c, 1)
    p["bn"] = _bn_params(4 * nf)
    return p


def init_block(key, in_c, nf, ks, bc, use_residual=True):
    k = jax.random.split(key, 5)
    p = dict(
        inc1=init_inception(k[0], in_c, nf, ks, bc),
        inc2=init_inception(k[1], 4 * nf, nf, ks, bc),
        inc3=init_inception(k[2], 4 * nf, nf, ks, bc),
    )
    if use_residual:
        p["res_w"] = _conv_w(k[3], 4 * nf, in_c, 1)
        p["res_b"] = 0.01 * jax.random.normal(k[4], (4 * nf,), jnp.float32)
        p["res_bn"] = _bn_params(4 * nf)
    return p


def init_inception_time(key, in_c, nf, ks, bc, use_residual=True):
    keys = jax.random.split(key, 6)
    blocks = [init_block(keys[0], in_c, nf, ks, bc, use_residual)]
    for i in range(1, 6):
        blocks.append(init_block(keys[i], 4 * nf, nf, ks, bc, use_residual))
    return blocks


# --------------------------------------------------------------------------
# Demo
# --------------------------------------------------------------------------

if __name__ == "__main__":
    key = jax.random.PRNGKey(0)
    kx, kp = jax.random.split(key)

    # Small shapes consistent with the module (n_filters/bottleneck defaults = 32
    # -> 4*nf = 128 output channels, lane-dense activations).
    B, C_IN, T = 2, 4, 16
    N_FILTERS = 32
    BOTTLENECK = 32
    KERNEL_SIZES = (9, 19, 39)

    x = jax.random.normal(kx, (B, C_IN, T), jnp.float32)   # PyTorch NCL input
    params = init_inception_time(kp, C_IN, N_FILTERS, KERNEL_SIZES, BOTTLENECK,
                                 use_residual=True)

    fwd = jax.jit(lambda inp: inception_time_forward(inp, params, KERNEL_SIZES,
                                                     use_residual=True))
    out = jax.block_until_ready(fwd(x))

    assert out.shape == (B, 4 * N_FILTERS, T), out.shape
    assert bool(jnp.all(jnp.isfinite(out)))
    print("KERNEL_OK")
</pallas_src>

<mosaic_0001>
module attributes {stable_mosaic.version = 11 : i64} {
  func.func @kernel(%arg0: i32, %arg1: i32, %arg2: memref<2x16x128xbf16, #tpu.memory_space<vmem>>, %arg3: memref<1x128x32xbf16, #tpu.memory_space<vmem>>, %arg4: memref<1x1408x128xbf16, #tpu.memory_space<vmem>>, %arg5: memref<1x1x128xf32, #tpu.memory_space<vmem>>, %arg6: memref<1x1x128xf32, #tpu.memory_space<vmem>>, %arg7: memref<1x128x128xbf16, #tpu.memory_space<vmem>>, %arg8: memref<1x1x128xf32, #tpu.memory_space<vmem>>, %arg9: memref<1x1x128xf32, #tpu.memory_space<vmem>>, %arg10: memref<2x16x128xf32, #tpu.memory_space<vmem>>, %arg11: memref<2x16x128xbf16, #tpu.memory_space<vmem>>, %arg12: memref<2x64x32xbf16, #tpu.memory_space<vmem>>, %arg13: memref<2x16x128xbf16, #tpu.memory_space<vmem>>) attributes {dimension_semantics = [#tpu.dimension_semantics<arbitrary>, #tpu.dimension_semantics<arbitrary>], iteration_bounds = array<i64: 6, 3>, scalar_prefetch = 0 : i64, scratch_operands = 3 : i64, tpu.core_type = #tpu.core_type<tc>, window_params = [{pipeline_mode = #tpu.pipeline_mode<synchronous>, transform_indices = @transform_0, window_bounds = array<i64: 2, 16, 128>}, {transform_indices = @transform_1, window_bounds = array<i64: 1, 128, 32>}, {transform_indices = @transform_2, window_bounds = array<i64: 1, 1408, 128>}, {transform_indices = @transform_3, window_bounds = array<i64: 1, 1, 128>}, {transform_indices = @transform_4, window_bounds = array<i64: 1, 1, 128>}, {transform_indices = @transform_5, window_bounds = array<i64: 1, 128, 128>}, {transform_indices = @transform_6, window_bounds = array<i64: 1, 1, 128>}, {transform_indices = @transform_7, window_bounds = array<i64: 1, 1, 128>}, {pipeline_mode = #tpu.pipeline_mode<synchronous>, transform_indices = @transform_8, window_bounds = array<i64: 2, 16, 128>}]} {
    %c0_i32 = arith.constant 0 : i32
    %0 = arith.cmpi eq, %arg0, %c0_i32 : i32
    %c0_i32_0 = arith.constant 0 : i32
    %1 = arith.cmpi eq, %arg1, %c0_i32_0 : i32
    %2 = arith.andi %0, %1 : i1
    %3 = arith.extui %2 : i1 to i32
    %c0_i32_1 = arith.constant 0 : i32
    %4 = arith.cmpi ne, %3, %c0_i32_1 : i32
    scf.if %4 {
      %c0_106 = arith.constant 0 : index
      %c0_107 = arith.constant 0 : index
      %c0_108 = arith.constant 0 : index
      %129 = vector.load %arg2[%c0_106, %c0_107, %c0_108] : memref<2x16x128xbf16, #tpu.memory_space<vmem>>, vector<2x16x128xbf16>
      %c0_109 = arith.constant 0 : index
      %c0_110 = arith.constant 0 : index
      %c0_111 = arith.constant 0 : index
      %130 = vector.load %arg11[%c0_109, %c0_110, %c0_111] : memref<2x16x128xbf16, #tpu.memory_space<vmem>>, vector<2x16x128xbf16>
      tpu.vector_store %arg11[%c0_109, %c0_110, %c0_111], %129 {strides = array<i32>} : memref<2x16x128xbf16, #tpu.memory_space<vmem>>, vector<2x16x128xbf16>,
      %cst_112 = arith.constant 0.000000e+00 : bf16
      %131 = vector.broadcast %cst_112 : bf16 to vector<2x24x32xbf16>
      %c0_113 = arith.constant 0 : index
      %c0_114 = arith.constant 0 : index
      %c0_115 = arith.constant 0 : index
      %132 = vector.load %arg12[%c0_113, %c0_114, %c0_115] : memref<2x64x32xbf16, #tpu.memory_space<vmem>>, vector<2x24x32xbf16>
      tpu.vector_store %arg12[%c0_113, %c0_114, %c0_115], %131 {strides = array<i32>} : memref<2x64x32xbf16, #tpu.memory_space<vmem>>, vector<2x24x32xbf16>,
      %cst_116 = arith.constant 0.000000e+00 : bf16
      %133 = vector.broadcast %cst_116 : bf16 to vector<2x24x32xbf16>
      %c0_117 = arith.constant 0 : index
      %c40_118 = arith.constant 40 : index
      %c0_119 = arith.constant 0 : index
      %134 = vector.load %arg12[%c0_117, %c40_118, %c0_119] : memref<2x64x32xbf16, #tpu.memory_space<vmem>>, vector<2x24x32xbf16>
      tpu.vector_store %arg12[%c0_117, %c40_118, %c0_119], %133 {strides = array<i32>} : memref<2x64x32xbf16, #tpu.memory_space<vmem>>, vector<2x24x32xbf16>,
    } else {
    }
    %c0 = arith.constant 0 : index
    %c0_2 = arith.constant 0 : index
    %c0_3 = arith.constant 0 : index
    %5 = vector.load %arg11[%c0, %c0_2, %c0_3] : memref<2x16x128xbf16, #tpu.memory_space<vmem>>, vector<2x16x128xbf16>
    %c0_i32_4 = arith.constant 0 : i32
    %6 = arith.cmpi eq, %arg1, %c0_i32_4 : i32
    %7 = arith.extui %6 : i1 to i32
    %c0_i32_5 = arith.constant 0 : i32
    %8 = arith.cmpi ne, %7, %c0_i32_5 : i32
    scf.if %8 {
      %c0_106 = arith.constant 0 : index
      %c0_107 = arith.constant 0 : index
      %c0_108 = arith.constant 0 : index
      %129 = vector.load %arg13[%c0_106, %c0_107, %c0_108] : memref<2x16x128xbf16, #tpu.memory_space<vmem>>, vector<2x16x128xbf16>
      tpu.vector_store %arg13[%c0_106, %c0_107, %c0_108], %5 {strides = array<i32>} : memref<2x16x128xbf16, #tpu.memory_space<vmem>>, vector<2x16x128xbf16>,
    } else {
    }
    %9 = vector.shape_cast %5 : vector<2x16x128xbf16> to vector<32x128xbf16>
    %c0_6 = arith.constant 0 : index
    %c0_7 = arith.constant 0 : index
    %c0_8 = arith.constant 0 : index
    %10 = vector.load %arg3[%c0_6, %c0_7, %c0_8] : memref<1x128x32xbf16, #tpu.memory_space<vmem>>, vector<1x128x32xbf16>
    %11 = vector.shape_cast %10 : vector<1x128x32xbf16> to vector<128x32xbf16>
    %cst = arith.constant dense<0.000000e+00> : vector<32x32xf32>
    %12 = tpu.matmul %9, %11, %cst {dimension_numbers = #tpu.dot_dimension_numbers<[1], [0], [0], [1], [0, 0, 1, 1], [], []>} : vector<32x128xbf16>, vector<128x32xbf16>, vector<32x32xf32> -> vector<32x32xf32>
    %13 = vector.shape_cast %12 : vector<32x32xf32> to vector<2x16x32xf32>
    %14 = arith.truncf %13 : vector<2x16x32xf32> to vector<2x16x32xbf16>
    %c0_9 = arith.constant 0 : index
    %c24 = arith.constant 24 : index
    %c0_10 = arith.constant 0 : index
    %15 = vector.load %arg12[%c0_9, %c24, %c0_10] : memref<2x64x32xbf16, #tpu.memory_space<vmem>>, vector<2x16x32xbf16>
    tpu.vector_store %arg12[%c0_9, %c24, %c0_10], %14 {strides = array<i32>} : memref<2x64x32xbf16, #tpu.memory_space<vmem>>, vector<2x16x32xbf16>,
    %c0_11 = arith.constant 0 : index
    %c5 = arith.constant 5 : index
    %c0_12 = arith.constant 0 : index
    %16 = vector.load %arg12[%c0_11, %c5, %c0_12] : memref<2x64x32xbf16, #tpu.memory_space<vmem>>, vector<2x16x32xbf16>
    %17 = vector.shape_cast %16 : vector<2x16x32xbf16> to vector<32x32xbf16>
    %c0_13 = arith.constant 0 : index
    %c6 = arith.constant 6 : index
    %c0_14 = arith.constant 0 : index
    %18 = vector.load %arg12[%c0_13, %c6, %c0_14] : memref<2x64x32xbf16, #tpu.memory_space<vmem>>, vector<2x16x32xbf16>
    %19 = vector.shape_cast %18 : vector<2x16x32xbf16> to vector<32x32xbf16>
    %c0_15 = arith.constant 0 : index
    %c7 = arith.constant 7 : index
    %c0_16 = arith.constant 0 : index
    %20 = vector.load %arg12[%c0_15, %c7, %c0_16] : memref<2x64x32xbf16, #tpu.memory_space<vmem>>, vector<2x16x32xbf16>
    %21 = vector.shape_cast %20 : vector<2x16x32xbf16> to vector<32x32xbf16>
    %c0_17 = arith.constant 0 : index
    %c8 = arith.constant 8 : index
    %c0_18 = arith.constant 0 : index
    %22 = vector.load %arg12[%c0_17, %c8, %c0_18] : memref<2x64x32xbf16, #tpu.memory_space<vmem>>, vector<2x16x32xbf16>
    %23 = vector.shape_cast %22 : vector<2x16x32xbf16> to vector<32x32xbf16>
    %c0_19 = arith.constant 0 : index
    %c9 = arith.constant 9 : index
    %c0_20 = arith.constant 0 : index
    %24 = vector.load %arg12[%c0_19, %c9, %c0_20] : memref<2x64x32xbf16, #tpu.memory_space<vmem>>, vector<2x16x32xbf16>
    %25 = vector.shape_cast %24 : vector<2x16x32xbf16> to vector<32x32xbf16>
    %c0_21 = arith.constant 0 : index
    %c10 = arith.constant 10 : index
    %c0_22 = arith.constant 0 : index
    %26 = vector.load %arg12[%c0_21, %c10, %c0_22] : memref<2x64x32xbf16, #tpu.memory_space<vmem>>, vector<2x16x32xbf16>
    %27 = vector.shape_cast %26 : vector<2x16x32xbf16> to vector<32x32xbf16>
    %c0_23 = arith.constant 0 : index
    %c11 = arith.constant 11 : index
    %c0_24 = arith.constant 0 : index
    %28 = vector.load %arg12[%c0_23, %c11, %c0_24] : memref<2x64x32xbf16, #tpu.memory_space<vmem>>, vector<2x16x32xbf16>
    %29 = vector.shape_cast %28 : vector<2x16x32xbf16> to vector<32x32xbf16>
    %c0_25 = arith.constant 0 : index
    %c12 = arith.constant 12 : index
    %c0_26 = arith.constant 0 : index
    %30 = vector.load %arg12[%c0_25, %c12, %c0_26] : memref<2x64x32xbf16, #tpu.memory_space<vmem>>, vector<2x16x32xbf16>
    %31 = vector.shape_cast %30 : vector<2x16x32xbf16> to vector<32x32xbf16>
    %c0_27 = arith.constant 0 : index
    %c13 = arith.constant 13 : index
    %c0_28 = arith.constant 0 : index
    %32 = vector.load %arg12[%c0_27, %c13, %c0_28] : memref<2x64x32xbf16, #tpu.memory_space<vmem>>, vector<2x16x32xbf16>
    %33 = vector.shape_cast %32 : vector<2x16x32xbf16> to vector<32x32xbf16>
    %c0_29 = arith.constant 0 : index
    %c14 = arith.constant 14 : index
    %c0_30 = arith.constant 0 : index
    %34 = vector.load %arg12[%c0_29, %c14, %c0_30] : memref<2x64x32xbf16, #tpu.memory_space<vmem>>, vector<2x16x32xbf16>
    %35 = vector.shape_cast %34 : vector<2x16x32xbf16> to vector<32x32xbf16>
    %c0_31 = arith.constant 0 : index
    %c15 = arith.constant 15 : index
    %c0_32 = arith.constant 0 : index
    %36 = vector.load %arg12[%c0_31, %c15, %c0_32] : memref<2x64x32xbf16, #tpu.memory_space<vmem>>, vector<2x16x32xbf16>
    %37 = vector.shape_cast %36 : vector<2x16x32xbf16> to vector<32x32xbf16>
    %c0_33 = arith.constant 0 : index
    %c16 = arith.constant 16 : index
    %c0_34 = arith.constant 0 : index
    %38 = vector.load %arg12[%c0_33, %c16, %c0_34] : memref<2x64x32xbf16, #tpu.memory_space<vmem>>, vector<2x16x32xbf16>
    %39 = vector.shape_cast %38 : vector<2x16x32xbf16> to vector<32x32xbf16>
    %c0_35 = arith.constant 0 : index
    %c17 = arith.constant 17 : index
    %c0_36 = arith.constant 0 : index
    %40 = vector.load %arg12[%c0_35, %c17, %c0_36] : memref<2x64x32xbf16, #tpu.memory_space<vmem>>, vector<2x16x32xbf16>
    %41 = vector.shape_cast %40 : vector<2x16x32xbf16> to vector<32x32xbf16>
    %c0_37 = arith.constant 0 : index
    %c18 = arith.constant 18 : index
    %c0_38 = arith.constant 0 : index
    %42 = vector.load %arg12[%c0_37, %c18, %c0_38] : memref<2x64x32xbf16, #tpu.memory_space<vmem>>, vector<2x16x32xbf16>
    %43 = vector.shape_cast %42 : vector<2x16x32xbf16> to vector<32x32xbf16>
    %c0_39 = arith.constant 0 : index
    %c19 = arith.constant 19 : index
    %c0_40 = arith.constant 0 : index
    %44 = vector.load %arg12[%c0_39, %c19, %c0_40] : memref<2x64x32xbf16, #tpu.memory_space<vmem>>, vector<2x16x32xbf16>
    %45 = vector.shape_cast %44 : vector<2x16x32xbf16> to vector<32x32xbf16>
    %c0_41 = arith.constant 0 : index
    %c20 = arith.constant 20 : index
    %c0_42 = arith.constant 0 : index
    %46 = vector.load %arg12[%c0_41, %c20, %c0_42] : memref<2x64x32xbf16, #tpu.memory_space<vmem>>, vector<2x16x32xbf16>
    %47 = vector.shape_cast %46 : vector<2x16x32xbf16> to vector<32x32xbf16>
    %c0_43 = arith.constant 0 : index
    %c21 = arith.constant 21 : index
    %c0_44 = arith.constant 0 : index
    %48 = vector.load %arg12[%c0_43, %c21, %c0_44] : memref<2x64x32xbf16, #tpu.memory_space<vmem>>, vector<2x16x32xbf16>
    %49 = vector.shape_cast %48 : vector<2x16x32xbf16> to vector<32x32xbf16>
    %c0_45 = arith.constant 0 : index
    %c22 = arith.constant 22 : index
    %c0_46 = arith.constant 0 : index
    %50 = vector.load %arg12[%c0_45, %c22, %c0_46] : memref<2x64x32xbf16, #tpu.memory_space<vmem>>, vector<2x16x32xbf16>
    %51 = vector.shape_cast %50 : vector<2x16x32xbf16> to vector<32x32xbf16>
    %c0_47 = arith.constant 0 : index
    %c23 = arith.constant 23 : index
    %c0_48 = arith.constant 0 : index
    %52 = vector.load %arg12[%c0_47, %c23, %c0_48] : memref<2x64x32xbf16, #tpu.memory_space<vmem>>, vector<2x16x32xbf16>
    %53 = vector.shape_cast %52 : vector<2x16x32xbf16> to vector<32x32xbf16>
    %c0_49 = arith.constant 0 : index
    %c24_50 = arith.constant 24 : index
    %c0_51 = arith.constant 0 : index
    %54 = vector.load %arg12[%c0_49, %c24_50, %c0_51] : memref<2x64x32xbf16, #tpu.memory_space<vmem>>, vector<2x16x32xbf16>
    %55 = vector.shape_cast %54 : vector<2x16x32xbf16> to vector<32x32xbf16>
    %c0_52 = arith.constant 0 : index
    %c25 = arith.constant 25 : index
    %c0_53 = arith.constant 0 : index
    %56 = vector.load %arg12[%c0_52, %c25, %c0_53] : memref<2x64x32xbf16, #tpu.memory_space<vmem>>, vector<2x16x32xbf16>
    %57 = vector.shape_cast %56 : vector<2x16x32xbf16> to vector<32x32xbf16>
    %c0_54 = arith.constant 0 : index
    %c26 = arith.constant 26 : index
    %c0_55 = arith.constant 0 : index
    %58 = vector.load %arg12[%c0_54, %c26, %c0_55] : memref<2x64x32xbf16, #tpu.memory_space<vmem>>, vector<2x16x32xbf16>
    %59 = vector.shape_cast %58 : vector<2x16x32xbf16> to vector<32x32xbf16>
    %c0_56 = arith.constant 0 : index
    %c27 = arith.constant 27 : index
    %c0_57 = arith.constant 0 : index
    %60 = vector.load %arg12[%c0_56, %c27, %c0_57] : memref<2x64x32xbf16, #tpu.memory_space<vmem>>, vector<2x16x32xbf16>
    %61 = vector.shape_cast %60 : vector<2x16x32xbf16> to vector<32x32xbf16>
    %c0_58 = arith.constant 0 : index
    %c28 = arith.constant 28 : index
    %c0_59 = arith.constant 0 : index
    %62 = vector.load %arg12[%c0_58, %c28, %c0_59] : memref<2x64x32xbf16, #tpu.memory_space<vmem>>, vector<2x16x32xbf16>
    %63 = vector.shape_cast %62 : vector<2x16x32xbf16> to vector<32x32xbf16>
    %c0_60 = arith.constant 0 : index
    %c29 = arith.constant 29 : index
    %c0_61 = arith.constant 0 : index
    %64 = vector.load %arg12[%c0_60, %c29, %c0_61] : memref<2x64x32xbf16, #tpu.memory_space<vmem>>, vector<2x16x32xbf16>
    %65 = vector.shape_cast %64 : vector<2x16x32xbf16> to vector<32x32xbf16>
    %c0_62 = arith.constant 0 : index
    %c30 = arith.constant 30 : index
    %c0_63 = arith.constant 0 : index
    %66 = vector.load %arg12[%c0_62, %c30, %c0_63] : memref<2x64x32xbf16, #tpu.memory_space<vmem>>, vector<2x16x32xbf16>
    %67 = vector.shape_cast %66 : vector<2x16x32xbf16> to vector<32x32xbf16>
    %c0_64 = arith.constant 0 : index
    %c31 = arith.constant 31 : index
    %c0_65 = arith.constant 0 : index
    %68 = vector.load %arg12[%c0_64, %c31, %c0_65] : memref<2x64x32xbf16, #tpu.memory_space<vmem>>, vector<2x16x32xbf16>
    %69 = vector.shape_cast %68 : vector<2x16x32xbf16> to vector<32x32xbf16>
    %c0_66 = arith.constant 0 : index
    %c32 = arith.constant 32 : index
    %c0_67 = arith.constant 0 : index
    %70 = vector.load %arg12[%c0_66, %c32, %c0_67] : memref<2x64x32xbf16, #tpu.memory_space<vmem>>, vector<2x16x32xbf16>
    %71 = vector.shape_cast %70 : vector<2x16x32xbf16> to vector<32x32xbf16>
    %c0_68 = arith.constant 0 : index
    %c33 = arith.constant 33 : index
    %c0_69 = arith.constant 0 : index
    %72 = vector.load %arg12[%c0_68, %c33, %c0_69] : memref<2x64x32xbf16, #tpu.memory_space<vmem>>, vector<2x16x32xbf16>
    %73 = vector.shape_cast %72 : vector<2x16x32xbf16> to vector<32x32xbf16>
    %c0_70 = arith.constant 0 : index
    %c34 = arith.constant 34 : index
    %c0_71 = arith.constant 0 : index
    %74 = vector.load %arg12[%c0_70, %c34, %c0_71] : memref<2x64x32xbf16, #tpu.memory_space<vmem>>, vector<2x16x32xbf16>
    %75 = vector.shape_cast %74 : vector<2x16x32xbf16> to vector<32x32xbf16>
    %c0_72 = arith.constant 0 : index
    %c35 = arith.constant 35 : index
    %c0_73 = arith.constant 0 : index
    %76 = vector.load %arg12[%c0_72, %c35, %c0_73] : memref<2x64x32xbf16, #tpu.memory_space<vmem>>, vector<2x16x32xbf16>
    %77 = vector.shape_cast %76 : vector<2x16x32xbf16> to vector<32x32xbf16>
    %c0_74 = arith.constant 0 : index
    %c36 = arith.constant 36 : index
    %c0_75 = arith.constant 0 : index
    %78 = vector.load %arg12[%c0_74, %c36, %c0_75] : memref<2x64x32xbf16, #tpu.memory_space<vmem>>, vector<2x16x32xbf16>
    %79 = vector.shape_cast %78 : vector<2x16x32xbf16> to vector<32x32xbf16>
    %c0_76 = arith.constant 0 : index
    %c37 = arith.constant 37 : index
    %c0_77 = arith.constant 0 : index
    %80 = vector.load %arg12[%c0_76, %c37, %c0_77] : memref<2x64x32xbf16, #tpu.memory_space<vmem>>, vector<2x16x32xbf16>
    %81 = vector.shape_cast %80 : vector<2x16x32xbf16> to vector<32x32xbf16>
    %c0_78 = arith.constant 0 : index
    %c38 = arith.constant 38 : index
    %c0_79 = arith.constant 0 : index
    %82 = vector.load %arg12[%c0_78, %c38, %c0_79] : memref<2x64x32xbf16, #tpu.memory_space<vmem>>, vector<2x16x32xbf16>
    %83 = vector.shape_cast %82 : vector<2x16x32xbf16> to vector<32x32xbf16>
    %c0_80 = arith.constant 0 : index
    %c39 = arith.constant 39 : index
    %c0_81 = arith.constant 0 : index
    %84 = vector.load %arg12[%c0_80, %c39, %c0_81] : memref<2x64x32xbf16, #tpu.memory_space<vmem>>, vector<2x16x32xbf16>
    %85 = vector.shape_cast %84 : vector<2x16x32xbf16> to vector<32x32xbf16>
    %c0_82 = arith.constant 0 : index
    %c40 = arith.constant 40 : index
    %c0_83 = arith.constant 0 : index
    %86 = vector.load %arg12[%c0_82, %c40, %c0_83] : memref<2x64x32xbf16, #tpu.memory_space<vmem>>, vector<2x16x32xbf16>
    %87 = vector.shape_cast %86 : vector<2x16x32xbf16> to vector<32x32xbf16>
    %c0_84 = arith.constant 0 : index
    %c41 = arith.constant 41 : index
    %c0_85 = arith.constant 0 : index
    %88 = vector.load %arg12[%c0_84, %c41, %c0_85] : memref<2x64x32xbf16, #tpu.memory_space<vmem>>, vector<2x16x32xbf16>
    %89 = vector.shape_cast %88 : vector<2x16x32xbf16> to vector<32x32xbf16>
    %c0_86 = arith.constant 0 : index
    %c42 = arith.constant 42 : index
    %c0_87 = arith.constant 0 : index
    %90 = vector.load %arg12[%c0_86, %c42, %c0_87] : memref<2x64x32xbf16, #tpu.memory_space<vmem>>, vector<2x16x32xbf16>
    %91 = vector.shape_cast %90 : vector<2x16x32xbf16> to vector<32x32xbf16>
    %c0_88 = arith.constant 0 : index
    %c43 = arith.constant 43 : index
    %c0_89 = arith.constant 0 : index
    %92 = vector.load %arg12[%c0_88, %c43, %c0_89] : memref<2x64x32xbf16, #tpu.memory_space<vmem>>, vector<2x16x32xbf16>
    %93 = vector.shape_cast %92 : vector<2x16x32xbf16> to vector<32x32xbf16>
    %c0_90 = arith.constant 0 : index
    %c44 = arith.constant 44 : index
    %c0_91 = arith.constant 0 : index
    %94 = vector.load %arg12[%c0_90, %c44, %c0_91] : memref<2x64x32xbf16, #tpu.memory_space<vmem>>, vector<2x16x32xbf16>
    %95 = vector.shape_cast %94 : vector<2x16x32xbf16> to vector<32x32xbf16>
    %96 = vector.extract_strided_slice %5 {offsets = [0, 0, 0], sizes = [2, 1, 128], strides = [1, 1, 1]} : vector<2x16x128xbf16> to vector<2x1x128xbf16>
    %97 = vector.extract_strided_slice %5 {offsets = [0, 0, 0], sizes = [2, 15, 128], strides = [1, 1, 1]} : vector<2x16x128xbf16> to vector<2x15x128xbf16>
    %98 = tpu.concatenate %96, %97 in 1 : vector<2x1x128xbf16>, vector<2x15x128xbf16> -> vector<2x16x128xbf16>
    %99 = vector.extract_strided_slice %5 {offsets = [0, 1, 0], sizes = [2, 15, 128], strides = [1, 1, 1]} : vector<2x16x128xbf16> to vector<2x15x128xbf16>
    %100 = vector.extract_strided_slice %5 {offsets = [0, 15, 0], sizes = [2, 1, 128], strides = [1, 1, 1]} : vector<2x16x128xbf16> to vector<2x1x128xbf16>
    %101 = tpu.concatenate %99, %100 in 1 : vector<2x15x128xbf16>, vector<2x1x128xbf16> -> vector<2x16x128xbf16>
    %102 = arith.maximumf %98, %5 : vector<2x16x128xbf16>
    %103 = arith.maximumf %102, %101 : vector<2x16x128xbf16>
    %104 = vector.shape_cast %103 : vector<2x16x128xbf16> to vector<32x128xbf16>
    %105 = tpu.concatenate %17, %19, %21, %23, %25, %27, %29, %31, %33, %35, %37, %39, %41, %43, %45, %47 in 1 : vector<32x32xbf16>, vector<32x32xbf16>, vector<32x32xbf16>, vector<32x32xbf16>, vector<32x32xbf16>, vector<32x32xbf16>, vector<32x32xbf16>, vector<32x32xbf16>, vector<32x32xbf16>, vector<32x32xbf16>, vector<32x32xbf16>, vector<32x32xbf16>, vector<32x32xbf16>, vector<32x32xbf16>, vector<32x32xbf16>, vector<32x32xbf16> -> vector<32x512xbf16>
    %106 = tpu.concatenate %49, %51, %53, %55, %57, %59, %61, %63, %65, %67, %69, %71, %73, %75, %77, %79 in 1 : vector<32x32xbf16>, vector<32x32xbf16>, vector<32x32xbf16>, vector<32x32xbf16>, vector<32x32xbf16>, vector<32x32xbf16>, vector<32x32xbf16>, vector<32x32xbf16>, vector<32x32xbf16>, vector<32x32xbf16>, vector<32x32xbf16>, vector<32x32xbf16>, vector<32x32xbf16>, vector<32x32xbf16>, vector<32x32xbf16>, vector<32x32xbf16> -> vector<32x512xbf16>
    %107 = tpu.concatenate %81, %83, %85, %87, %89, %91, %93, %95, %104 in 1 : vector<32x32xbf16>, vector<32x32xbf16>, vector<32x32xbf16>, vector<32x32xbf16>, vector<32x32xbf16>, vector<32x32xbf16>, vector<32x32xbf16>, vector<32x32xbf16>, vector<32x128xbf16> -> vector<32x384xbf16>
    %108 = tpu.concatenate %105, %106, %107 in 1 : vector<32x512xbf16>, vector<32x512xbf16>, vector<32x384xbf16> -> vector<32x1408xbf16>
    %c0_92 = arith.constant 0 : index
    %c0_93 = arith.constant 0 : index
    %c0_94 = arith.constant 0 : index
    %109 = vector.load %arg4[%c0_92, %c0_93, %c0_94] : memref<1x1408x128xbf16, #tpu.memory_space<vmem>>, vector<1x1408x128xbf16>
    %110 = vector.shape_cast %109 : vector<1x1408x128xbf16> to vector<1408x128xbf16>
    %cst_95 = arith.constant dense<0.000000e+00> : vector<32x128xf32>
    %111 = tpu.matmul %108, %110, %cst_95 {dimension_numbers = #tpu.dot_dimension_numbers<[1], [0], [0], [1], [0, 0, 1, 1], [], []>} : vector<32x1408xbf16>, vector<1408x128xbf16>, vector<32x128xf32> -> vector<32x128xf32>
    %c0_96 = arith.constant 0 : index
    %c0_97 = arith.constant 0 : index
    %c0_98 = arith.constant 0 : index
    %112 = vector.load %arg5[%c0_96, %c0_97, %c0_98] : memref<1x1x128xf32, #tpu.memory_space<vmem>>, vector<1x1x128xf32>
    %113 = vector.shape_cast %112 : vector<1x1x128xf32> to vector<1x128xf32>
    %114 = vector.broadcast %113 : vector<1x128xf32> to vector<32x128xf32>
    %115 = arith.mulf %111, %114 : vector<32x128xf32>
    %c0_99 = arith.constant 0 : index
    %c0_100 = arith.constant 0 : index
    %c0_101 = arith.constant 0 : index
    %116 = vector.load %arg6[%c0_99, %c0_100, %c0_101] : memref<1x1x128xf32, #tpu.memory_space<vmem>>, vector<1x1x128xf32>
    %117 = vector.shape_cast %116 : vector<1x1x128xf32> to vector<1x128xf32>
    %118 = vector.broadcast %117 : vector<1x128xf32> to vector<32x128xf32>
    %119 = arith.addf %115, %118 : vector<32x128xf32>
    %cst_102 = arith.constant 0.000000e+00 : f32
    %120 = vector.broadcast %cst_102 : f32 to vector<32x128xf32>
    %121 = arith.maximumf %119, %120 : vector<32x128xf32>
    %c5_i32 = arith.constant 5 : i32
    %122 = arith.cmpi eq, %arg0, %c5_i32 : i32
    %c2_i32 = arith.constant 2 : i32
    %123 = arith.cmpi eq, %arg1, %c2_i32 : i32
    %124 = arith.extui %123 : i1 to i32
    %c0_i32_103 = arith.constant 0 : i32
    %125 = arith.cmpi ne, %124, %c0_i32_103 : i32
    scf.if %125 {
      %c0_106 = arith.constant 0 : index
      %c0_107 = arith.constant 0 : index
      %c0_108 = arith.constant 0 : index
      %129 = vector.load %arg13[%c0_106, %c0_107, %c0_108] : memref<2x16x128xbf16, #tpu.memory_space<vmem>>, vector<2x16x128xbf16>
      %130 = vector.shape_cast %129 : vector<2x16x128xbf16> to vector<32x128xbf16>
      %c0_109 = arith.constant 0 : index
      %c0_110 = arith.constant 0 : index
      %c0_111 = arith.constant 0 : index
      %131 = vector.load %arg7[%c0_109, %c0_110, %c0_111] : memref<1x128x128xbf16, #tpu.memory_space<vmem>>, vector<1x128x128xbf16>
      %132 = vector.shape_cast %131 : vector<1x128x128xbf16> to vector<128x128xbf16>
      %cst_112 = arith.constant dense<0.000000e+00> : vector<32x128xf32>
      %133 = tpu.matmul %130, %132, %cst_112 {dimension_numbers = #tpu.dot_dimension_numbers<[1], [0], [0], [1], [0, 0, 1, 1], [], []>} : vector<32x128xbf16>, vector<128x128xbf16>, vector<32x128xf32> -> vector<32x128xf32>
      %c0_113 = arith.constant 0 : index
      %c0_114 = arith.constant 0 : index
      %c0_115 = arith.constant 0 : index
      %134 = vector.load %arg8[%c0_113, %c0_114, %c0_115] : memref<1x1x128xf32, #tpu.memory_space<vmem>>, vector<1x1x128xf32>
      %135 = vector.shape_cast %134 : vector<1x1x128xf32> to vector<1x128xf32>
      %136 = vector.broadcast %135 : vector<1x128xf32> to vector<32x128xf32>
      %137 = arith.mulf %133, %136 : vector<32x128xf32>
      %c0_116 = arith.constant 0 : index
      %c0_117 = arith.constant 0 : index
      %c0_118 = arith.constant 0 : index
      %138 = vector.load %arg9[%c0_116, %c0_117, %c0_118] : memref<1x1x128xf32, #tpu.memory_space<vmem>>, vector<1x1x128xf32>
      %139 = vector.shape_cast %138 : vector<1x1x128xf32> to vector<1x128xf32>
      %140 = vector.broadcast %139 : vector<1x128xf32> to vector<32x128xf32>
      %141 = arith.addf %137, %140 : vector<32x128xf32>
      %142 = arith.addf %121, %141 : vector<32x128xf32>
      %cst_119 = arith.constant 0.000000e+00 : f32
      %143 = vector.broadcast %cst_119 : f32 to vector<32x128xf32>
      %144 = arith.maximumf %142, %143 : vector<32x128xf32>
      %145 = vector.shape_cast %144 : vector<32x128xf32> to vector<2x16x128xf32>
      %146 = arith.truncf %145 : vector<2x16x128xf32> to vector<2x16x128xbf16>
      %c0_120 = arith.constant 0 : index
      %c0_121 = arith.constant 0 : index
      %c0_122 = arith.constant 0 : index
      %147 = vector.load %arg11[%c0_120, %c0_121, %c0_122] : memref<2x16x128xbf16, #tpu.memory_space<vmem>>, vector<2x16x128xbf16>
      tpu.vector_store %arg11[%c0_120, %c0_121, %c0_122], %146 {strides = array<i32>} : memref<2x16x128xbf16, #tpu.memory_space<vmem>>, vector<2x16x128xbf16>,
      %148 = arith.extui %122 : i1 to i32
      %c0_i32_123 = arith.constant 0 : i32
      %149 = arith.cmpi ne, %148, %c0_i32_123 : i32
      scf.if %149 {
        %150 = vector.shape_cast %144 : vector<32x128xf32> to vector<2x16x128xf32>
        %c0_124 = arith.constant 0 : index
        %c0_125 = arith.constant 0 : index
        %c0_126 = arith.constant 0 : index
        %151 = vector.load %arg10[%c0_124, %c0_125, %c0_126] : memref<2x16x128xf32, #tpu.memory_space<vmem>>, vector<2x16x128xf32>
        tpu.vector_store %arg10[%c0_124, %c0_125, %c0_126], %150 {strides = array<i32>} : memref<2x16x128xf32, #tpu.memory_space<vmem>>, vector<2x16x128xf32>,
      } else {
      }
    } else {
    }
    %c2_i32_104 = arith.constant 2 : i32
    %126 = arith.cmpi ne, %arg1, %c2_i32_104 : i32
    %127 = arith.extui %126 : i1 to i32
    %c0_i32_105 = arith.constant 0 : i32
    %128 = arith.cmpi ne, %127, %c0_i32_105 : i32
    scf.if %128 {
      %129 = vector.shape_cast %121 : vector<32x128xf32> to vector<2x16x128xf32>
      %130 = arith.truncf %129 : vector<2x16x128xf32> to vector<2x16x128xbf16>
      %c0_106 = arith.constant 0 : index
      %c0_107 = arith.constant 0 : index
      %c0_108 = arith.constant 0 : index
      %131 = vector.load %arg11[%c0_106, %c0_107, %c0_108] : memref<2x16x128xbf16, #tpu.memory_space<vmem>>, vector<2x16x128xbf16>
      tpu.vector_store %arg11[%c0_106, %c0_107, %c0_108], %130 {strides = array<i32>} : memref<2x16x128xbf16, #tpu.memory_space<vmem>>, vector<2x16x128xbf16>,
    } else {
    }
    return
  }
  func.func @transform_0(%arg0: i32, %arg1: i32) -> (i32, i32, i32) {
    %c0_i32 = arith.constant 0 : i32
    %c0_i32_0 = arith.constant 0 : i32
    %c0_i32_1 = arith.constant 0 : i32
    %c0_i32_2 = arith.constant 0 : i32
    return %c0_i32, %c0_i32_0, %c0_i32_1 : i32, i32, i32
  }
  func.func @transform_1(%arg0: i32, %arg1: i32) -> (i32, i32, i32) {
    %c3_i32 = arith.constant 3 : i32
    %0 = arith.muli %arg0, %c3_i32 : i32
    %1 = arith.addi %0, %arg1 : i32
    %c0_i32 = arith.constant 0 : i32
    %c0_i32_0 = arith.constant 0 : i32
    %c0_i32_1 = arith.constant 0 : i32
    return %1, %c0_i32, %c0_i32_0 : i32, i32, i32
  }
  func.func @transform_2(%arg0: i32, %arg1: i32) -> (i32, i32, i32) {
    %c3_i32 = arith.constant 3 : i32
    %0 = arith.muli %arg0, %c3_i32 : i32
    %1 = arith.addi %0, %arg1 : i32
    %c0_i32 = arith.constant 0 : i32
    %c0_i32_0 = arith.constant 0 : i32
    %c0_i32_1 = arith.constant 0 : i32
    return %1, %c0_i32, %c0_i32_0 : i32, i32, i32
  }
  func.func @transform_3(%arg0: i32, %arg1: i32) -> (i32, i32, i32) {
    %c3_i32 = arith.constant 3 : i32
    %0 = arith.muli %arg0, %c3_i32 : i32
    %1 = arith.addi %0, %arg1 : i32
    %c0_i32 = arith.constant 0 : i32
    %c0_i32_0 = arith.constant 0 : i32
    %c0_i32_1 = arith.constant 0 : i32
    return %1, %c0_i32, %c0_i32_0 : i32, i32, i32
  }
  func.func @transform_4(%arg0: i32, %arg1: i32) -> (i32, i32, i32) {
    %c3_i32 = arith.constant 3 : i32
    %0 = arith.muli %arg0, %c3_i32 : i32
    %1 = arith.addi %0, %arg1 : i32
    %c0_i32 = arith.constant 0 : i32
    %c0_i32_0 = arith.constant 0 : i32
    %c0_i32_1 = arith.constant 0 : i32
    return %1, %c0_i32, %c0_i32_0 : i32, i32, i32
  }
  func.func @transform_5(%arg0: i32, %arg1: i32) -> (i32, i32, i32) {
    %c0_i32 = arith.constant 0 : i32
    %c0_i32_0 = arith.constant 0 : i32
    %c0_i32_1 = arith.constant 0 : i32
    return %arg0, %c0_i32, %c0_i32_0 : i32, i32, i32
  }
  func.func @transform_6(%arg0: i32, %arg1: i32) -> (i32, i32, i32) {
    %c0_i32 = arith.constant 0 : i32
    %c0_i32_0 = arith.constant 0 : i32
    %c0_i32_1 = arith.constant 0 : i32
    return %arg0, %c0_i32, %c0_i32_0 : i32, i32, i32
  }
  func.func @transform_7(%arg0: i32, %arg1: i32) -> (i32, i32, i32) {
    %c0_i32 = arith.constant 0 : i32
    %c0_i32_0 = arith.constant 0 : i32
    %c0_i32_1 = arith.constant 0 : i32
    return %arg0, %c0_i32, %c0_i32_0 : i32, i32, i32
  }
  func.func @transform_8(%arg0: i32, %arg1: i32) -> (i32, i32, i32) {
    %c0_i32 = arith.constant 0 : i32
    %c0_i32_0 = arith.constant 0 : i32
    %c0_i32_1 = arith.constant 0 : i32
    %c0_i32_2 = arith.constant 0 : i32
    return %c0_i32, %c0_i32_0, %c0_i32_1 : i32, i32, i32
  }
}

</mosaic_0001>

<llo_original>
// kernel: _lambda_.1
$region0: #{_lambda_.1}
  #allocation0 [shape = 'u32[]', space=smem, size = 0x4, offset = 0x4, fixed_abs, tag = 'smem constant byte address 0x4 - core index']
  #allocation1 [shape = 'u32[144,128]{1,0:T(1,128)}', space=vmem, size = 0x12000, scoped, tag = 'internal scratch']
  #allocation2 [shape = 'bf16[2,16,128]{2,1,0:T(16,128)(2,1)}', space=vmem, size = 0x2000, scoped, tag = 'scratch operand']
  #allocation3 [shape = 'bf16[2,64,32]{2,1,0:T(16,128)(2,1)}', space=vmem, size = 0x8000, scoped, tag = 'scratch operand']
  #allocation4 [shape = 'bf16[2,16,128]{2,1,0:T(16,128)(2,1)}', space=vmem, size = 0x2000, scoped, tag = 'scratch operand']
  %s0 = inlined_call_operand.vmem [shape: bf16[2,16,128], index: 0, kind: input, shape index: {}]
  %s1 = inlined_call_operand.hbm [shape: bf16[18,128,32], index: 1, kind: input, shape index: {}]
  %s2 = inlined_call_operand.hbm [shape: bf16[18,1408,128], index: 2, kind: input, shape index: {}]
  %s3 = inlined_call_operand.vmem [shape: f32[18,1,128], index: 3, kind: input, shape index: {}]
  %s4 = inlined_call_operand.vmem [shape: f32[18,1,128], index: 4, kind: input, shape index: {}]
  %s5 = inlined_call_operand.hbm [shape: bf16[6,128,128], index: 5, kind: input, shape index: {}]
  %s6 = inlined_call_operand.vmem [shape: f32[6,1,128], index: 6, kind: input, shape index: {}]
  %s7 = inlined_call_operand.hbm [shape: f32[6,1,128], index: 7, kind: input, shape index: {}]
  %s8 = inlined_call_operand.hbm [shape: f32[2,16,128], index: 8, kind: output, shape index: {}]
  %s9 = sld [smem:[#allocation0]]
  $region101: #{_lambda_.1} parent=0
    _
  %s11 = ssub.s32 1, %s9
  %s12 = scalar_select 0, %s11, %s9
  $region1: #{_lambda_.1} parent=0
    #allocation5 [shape = 'u8[65536]{0}', space=vmem, size = 0x10000, scoped, tag = 'input window, operand 1']
    #allocation6 [shape = 's32[2]{0}', space=sflag, size = 0x8, scoped, tag = 'scoped memory for _lambda_.1']
    #allocation7 [shape = 's32[2]{0}', space=sflag, size = 0x8, scoped, tag = 'scoped memory for _lambda_.1']
    #allocation8 [shape = 'u8[720896]{0}', space=vmem, size = 0xb0000, scoped, tag = 'input window, operand 2']
    #allocation9 [shape = 's32[2]{0}', space=sflag, size = 0x8, scoped, tag = 'scoped memory for _lambda_.1']
    #allocation10 [shape = 'u8[65536]{0}', space=vmem, size = 0x10000, scoped, tag = 'input window, operand 5']
    #allocation11 [shape = 'u8[1024]{0}', space=vmem, size = 0x400, scoped, tag = 'input window, operand 7']
    #allocation12 [shape = 's32[2]{0}', space=sflag, size = 0x8, scoped, tag = 'scoped memory for _lambda_.1']
    #allocation13 [shape = 'u8[16384]{0}', space=vmem, size = 0x4000, scoped, tag = 'output window, operand 0, single buffered']
    %13 = vsyncpa [#allocation6], 0
    %s14 = scalar_lea.sflag [#allocation6], 1
    %15 = vsyncpa %s14, 0
    %16 = vsyncpa [#allocation9], 0
    %s17 = scalar_lea.sflag [#allocation9], 1
    %18 = vsyncpa %s17, 0
    %19 = vsyncpa [#allocation12], 0
    %s20 = scalar_lea.sflag [#allocation12], 1
    %21 = vsyncpa %s20, 0
    %22 = vsyncpa [#allocation7], 0
    loop: start=0, step=1, limit=20
    $region2: #{_lambda_.1} parent=1 // loop_pre_header
      _
    $region3: #{_lambda_.1} parent=1 // loop_header
      %s24 = sphi 0, %s28
      %p25 = scmp.ge.s32.totalorder %s24, 20
      %s31 = sphi 0, %s43
      %s32 = sphi 0, %s39
      %s33 = sphi 0, %s31
      %s34 = sphi 0, %s32
      %s35 = sphi 0, %s33
      %s36 = sphi 0, %s34
      %s44 = sphi 0, %s44
      %s46 = sphi 0, %s44
      %s47 = sphi 0, %s46
      %s61 = sphi 0, %s47
      %s71 = sphi 0, %s73
      %s74 = sphi 0, %s71
      %s75 = sphi 0, %s74
      %s91 = sphi 0, %s75
      %s101 = sphi 0, %s103
      %s104 = sphi 0, %s101
      %s105 = sphi 0, %s104
      %s121 = sphi 0, %s105
      %s131 = sphi 0, %s133
      %s134 = sphi 0, %s131
      %s135 = sphi 0, %s134
      %s151 = sphi 0, %s135
      %s161 = sphi 0, %s163
      %s164 = sphi 0, %s161
      %s165 = sphi 0, %s164
      %s181 = sphi 0, %s165
      %s187 = sphi 0, %s189
      %s190 = sphi 0, %s187
      %s191 = sphi 0, %s190
      %s207 = sphi 0, %s191
      %s213 = sphi 0, %s215
      %s216 = sphi 0, %s213
      %s217 = sphi 0, %s216
      %s233 = sphi 0, %s217
      %s239 = sphi 0, %s241
      %s242 = sphi 0, %s239
      %s243 = sphi 0, %s242
      %s259 = sphi 0, %s243
      %s263 = sphi 0, %s263
      %s265 = sphi 0, %s263
      %s266 = sphi 0, %s265
      %s280 = sphi 0, %s266
    $region4: #{_lambda_.1} parent=1 // loop_header_branch
      %27 = sbr.rel (%p25) target = $region8
    $region5: #{_lambda_.1} parent=1 // loop_body
      %s29 = ssub.s32 %s24, 1
      %s30 = ssub.s32 %s24, 2
      %s37 = sadd.s32 1, %s32
      %p38 = scmp.ge.s32.totalorder %s37, 3
      %s39 = scalar_select %p38, 0, %s37
      %s40 = sadd.s32 1, %s31
      %s41 = scalar_select %p38, %s40, %s31
      %p42 = scmp.ge.s32.totalorder %s41, 6
      %s43 = scalar_select %p42, 0, %s41
      %s45 = sadd.s32 %s44, 1
      %p48 = scmp.eq.s32.totalorder %s24, 17
      %p49 = scmp.ne.s32.totalorder %s44, %s46
      %p50 = scmp.eq.s32.totalorder %s24, 0
      %p51 = por %p49, %p50
      %p52 = scmp.ne.s32.totalorder %s44, %s46
      %p53 = scmp.eq.s32.totalorder %s29, 17
      %p54 = por %p52, %p53
      %p55 = scmp.ne.s32.totalorder %s46, %s47
      %p56 = scmp.eq.s32.totalorder %s29, 0
      %p57 = por %p55, %p56
      %p58 = scmp.ne.s32.totalorder %s46, %s47
      %p59 = scmp.eq.s32.totalorder %s30, 17
      %p60 = por %p58, %p59
      %p62 = scmp.ne.s32.totalorder %s47, %s61
      %p63 = scmp.eq.s32.totalorder %s30, 0
      %p64 = por %p62, %p63
      %s65 = smul.u32 %s31, 3
      %s66 = sadd.s32 %s65, %s32
      %s67 = smul.u32 %s43, 3
      %s68 = sadd.s32 %s67, %s39
      %s69 = ssub.s32 %s66, %s68
      %p70 = scmp.eq.s32.totalorder %s69, 0
      %s72 = sadd.s32 %s71, 1
      %s73 = scalar_select %p70, %s71, %s72
      %p76 = pneg %p70
      %p77 = scmp.eq.s32.totalorder %s24, 17
      %p78 = por %p76, %p77
      %p79 = scmp.ne.s32.totalorder %s71, %s74
      %p80 = scmp.eq.s32.totalorder %s24, 0
      %p81 = por %p79, %p80
      %p82 = scmp.ne.s32.totalorder %s71, %s74
      %p83 = scmp.eq.s32.totalorder %s29, 17
      %p84 = por %p82, %p83
      %p85 = scmp.ne.s32.totalorder %s74, %s75
      %p86 = scmp.eq.s32.totalorder %s29, 0
      %p87 = por %p85, %p86
      %p88 = scmp.ne.s32.totalorder %s74, %s75
      %p89 = scmp.eq.s32.totalorder %s30, 17
      %p90 = por %p88, %p89
      %p92 = scmp.ne.s32.totalorder %s75, %s91
      %p93 = scmp.eq.s32.totalorder %s30, 0
      %p94 = por %p92, %p93
      %s95 = smul.u32 %s31, 3
      %s96 = sadd.s32 %s95, %s32
      %s97 = smul.u32 %s43, 3
      %s98 = sadd.s32 %s97, %s39
      %s99 = ssub.s32 %s96, %s98
      %p100 = scmp.eq.s32.totalorder %s99, 0
      %s102 = sadd.s32 %s101, 1
      %s103 = scalar_select %p100, %s101, %s102
      %p106 = pneg %p100
      %p107 = scmp.eq.s32.totalorder %s24, 17
      %p108 = por %p106, %p107
      %p109 = scmp.ne.s32.totalorder %s101, %s104
      %p110 = scmp.eq.s32.totalorder %s24, 0
      %p111 = por %p109, %p110
      %p112 = scmp.ne.s32.totalorder %s101, %s104
      %p113 = scmp.eq.s32.totalorder %s29, 17
      %p114 = por %p112, %p113
      %p115 = scmp.ne.s32.totalorder %s104, %s105
      %p116 = scmp.eq.s32.totalorder %s29, 0
      %p117 = por %p115, %p116
      %p118 = scmp.ne.s32.totalorder %s104, %s105
      %p119 = scmp.eq.s32.totalorder %s30, 17
      %p120 = por %p118, %p119
      %p122 = scmp.ne.s32.totalorder %s105, %s121
      %p123 = scmp.eq.s32.totalorder %s30, 0
      %p124 = por %p122, %p123
      %s125 = smul.u32 %s31, 3
      %s126 = sadd.s32 %s125, %s32
      %s127 = smul.u32 %s43, 3
      %s128 = sadd.s32 %s127, %s39
      %s129 = ssub.s32 %s126, %s128
      %p130 = scmp.eq.s32.totalorder %s129, 0
      %s132 = sadd.s32 %s131, 1
      %s133 = scalar_select %p130, %s131, %s132
      %p136 = pneg %p130
      %p137 = scmp.eq.s32.totalorder %s24, 17
      %p138 = por %p136, %p137
      %p139 = scmp.ne.s32.totalorder %s131, %s134
      %p140 = scmp.eq.s32.totalorder %s24, 0
      %p141 = por %p139, %p140
      %p142 = scmp.ne.s32.totalorder %s131, %s134
      %p143 = scmp.eq.s32.totalorder %s29, 17
      %p144 = por %p142, %p143
      %p145 = scmp.ne.s32.totalorder %s134, %s135
      %p146 = scmp.eq.s32.totalorder %s29, 0
      %p147 = por %p145, %p146
      %p148 = scmp.ne.s32.totalorder %s134, %s135
      %p149 = scmp.eq.s32.totalorder %s30, 17
      %p150 = por %p148, %p149
      %p152 = scmp.ne.s32.totalorder %s135, %s151
      %p153 = scmp.eq.s32.totalorder %s30, 0
      %p154 = por %p152, %p153
      %s155 = smul.u32 %s31, 3
      %s156 = sadd.s32 %s155, %s32
      %s157 = smul.u32 %s43, 3
      %s158 = sadd.s32 %s157, %s39
      %s159 = ssub.s32 %s156, %s158
      %p160 = scmp.eq.s32.totalorder %s159, 0
      %s162 = sadd.s32 %s161, 1
      %s163 = scalar_select %p160, %s161, %s162
      %p166 = pneg %p160
      %p167 = scmp.eq.s32.totalorder %s24, 17
      %p168 = por %p166, %p167
      %p169 = scmp.ne.s32.totalorder %s161, %s164
      %p170 = scmp.eq.s32.totalorder %s24, 0
      %p171 = por %p169, %p170
      %p172 = scmp.ne.s32.totalorder %s161, %s164
      %p173 = scmp.eq.s32.totalorder %s29, 17
      %p174 = por %p172, %p173
      %p175 = scmp.ne.s32.totalorder %s164, %s165
      %p176 = scmp.eq.s32.totalorder %s29, 0
      %p177 = por %p175, %p176
      %p178 = scmp.ne.s32.totalorder %s164, %s165
      %p179 = scmp.eq.s32.totalorder %s30, 17
      %p180 = por %p178, %p179
      %p182 = scmp.ne.s32.totalorder %s165, %s181
      %p183 = scmp.eq.s32.totalorder %s30, 0
      %p184 = por %p182, %p183
      %s185 = ssub.s32 %s31, %s43
      %p186 = scmp.eq.s32.totalorder %s185, 0
      %s188 = sadd.s32 %s187, 1
      %s189 = scalar_select %p186, %s187, %s188
      %p192 = pneg %p186
      %p193 = scmp.eq.s32.totalorder %s24, 17
      %p194 = por %p192, %p193
      %p195 = scmp.ne.s32.totalorder %s187, %s190
      %p196 = scmp.eq.s32.totalorder %s24, 0
      %p197 = por %p195, %p196
      %p198 = scmp.ne.s32.totalorder %s187, %s190
      %p199 = scmp.eq.s32.totalorder %s29, 17
      %p200 = por %p198, %p199
      %p201 = scmp.ne.s32.totalorder %s190, %s191
      %p202 = scmp.eq.s32.totalorder %s29, 0
      %p203 = por %p201, %p202
      %p204 = scmp.ne.s32.totalorder %s190, %s191
      %p205 = scmp.eq.s32.totalorder %s30, 17
      %p206 = por %p204, %p205
      %p208 = scmp.ne.s32.totalorder %s191, %s207
      %p209 = scmp.eq.s32.totalorder %s30, 0
      %p210 = por %p208, %p209
      %s211 = ssub.s32 %s31, %s43
      %p212 = scmp.eq.s32.totalorder %s211, 0
      %s214 = sadd.s32 %s213, 1
      %s215 = scalar_select %p212, %s213, %s214
      %p218 = pneg %p212
      %p219 = scmp.eq.s32.totalorder %s24, 17
      %p220 = por %p218, %p219
      %p221 = scmp.ne.s32.totalorder %s213, %s216
      %p222 = scmp.eq.s32.totalorder %s24, 0
      %p223 = por %p221, %p222
      %p224 = scmp.ne.s32.totalorder %s213, %s216
      %p225 = scmp.eq.s32.totalorder %s29, 17
      %p226 = por %p224, %p225
      %p227 = scmp.ne.s32.totalorder %s216, %s217
      %p228 = scmp.eq.s32.totalorder %s29, 0
      %p229 = por %p227, %p228
      %p230 = scmp.ne.s32.totalorder %s216, %s217
      %p231 = scmp.eq.s32.totalorder %s30, 17
      %p232 = por %p230, %p231
      %p234 = scmp.ne.s32.totalorder %s217, %s233
      %p235 = scmp.eq.s32.totalorder %s30, 0
      %p236 = por %p234, %p235
      %s237 = ssub.s32 %s31, %s43
      %p238 = scmp.eq.s32.totalorder %s237, 0
      %s240 = sadd.s32 %s239, 1
      %s241 = scalar_select %p238, %s239, %s240
      %p244 = pneg %p238
      %p245 = scmp.eq.s32.totalorder %s24, 17
      %p246 = por %p244, %p245
      %p247 = scmp.ne.s32.totalorder %s239, %s242
      %p248 = scmp.eq.s32.totalorder %s24, 0
      %p249 = por %p247, %p248
      %p250 = scmp.ne.s32.totalorder %s239, %s242
      %p251 = scmp.eq.s32.totalorder %s29, 17
      %p252 = por %p250, %p251
      %p253 = scmp.ne.s32.totalorder %s242, %s243
      %p254 = scmp.eq.s32.totalorder %s29, 0
      %p255 = por %p253, %p254
      %p256 = scmp.ne.s32.totalorder %s242, %s243
      %p257 = scmp.eq.s32.totalorder %s30, 17
      %p258 = por %p256, %p257
      %p260 = scmp.ne.s32.totalorder %s243, %s259
      %p261 = scmp.eq.s32.totalorder %s30, 0
      %p262 = por %p260, %p261
      %s264 = sadd.s32 %s263, 1
      %p267 = scmp.eq.s32.totalorder %s24, 17
      %p268 = scmp.ne.s32.totalorder %s263, %s265
      %p269 = scmp.eq.s32.totalorder %s24, 0
      %p270 = por %p268, %p269
      %p271 = scmp.ne.s32.totalorder %s263, %s265
      %p272 = scmp.eq.s32.totalorder %s29, 17
      %p273 = por %p271, %p272
      %p274 = scmp.ne.s32.totalorder %s265, %s266
      %p275 = scmp.eq.s32.totalorder %s29, 0
      %p276 = por %p274, %p275
      %p277 = scmp.ne.s32.totalorder %s265, %s266
      %p278 = scmp.eq.s32.totalorder %s30, 17
      %p279 = por %p277, %p278
      %p281 = scmp.ne.s32.totalorder %s266, %s280
      %p282 = scmp.eq.s32.totalorder %s30, 0
      %p283 = por %p281, %p282
      %p284 = scmp.le.s32.totalorder 1, %s24
      %p285 = scmp.lt.s32.totalorder %s24, 19
      %p286 = pnand %p284, %p285
      %p287 = pneg %p286
      // Predicated region
      $region9: #{_lambda_.1} parent=5 // pred_check
        _
      $region10: #{_lambda_.1} parent=5 // pred_check_branch
        %289 = sbr.rel (%p286) target = $region12
      $region11: #{_lambda_.1} parent=5 // pred_region
        %s290 = ssub.s32 %s24, 1
        // Predicated region
        $region13: #{_lambda_.1} parent=11 // pred_check
          %p291 = pneg %p57
        $region14: #{_lambda_.1} parent=11 // pred_check_branch
          %293 = sbr.rel (%p291) target = $region16
        $region15: #{_lambda_.1} parent=11 // pred_region
          _
        $region16: #{_lambda_.1} parent=11 // pred_fallthru
          _
      $region12: #{_lambda_.1} parent=5 // pred_fallthru
        _
      %p294 = scmp.lt.s32.totalorder %s24, 18
      // Predicated region
      $region17: #{_lambda_.1} parent=5 // pred_check
        %p295 = pneg %p294
      $region18: #{_lambda_.1} parent=5 // pred_check_branch
        %297 = sbr.rel (%p295) target = $region20
      $region19: #{_lambda_.1} parent=5 // pred_region
        // Predicated region
        $region21: #{_lambda_.1} parent=19 // pred_check
          %p298 = pneg %p81
        $region22: #{_lambda_.1} parent=19 // pred_check_branch
          %300 = sbr.rel (%p298) target = $region24
        $region23: #{_lambda_.1} parent=19 // pred_region
          %s301 = sand.u32 %s71, 1
          %s302 = scalar_lea.sflag [#allocation6], %s301
          %s303 = sand.u32 %s71, 1
          %s304 = smul.addr %s303, 64
          %s305 = scalar_lea.vmem [#allocation5], %s304
          %s306 = smul.u32 %s31, 3
          %s307 = sadd.s32 %s306, %s32
          %s309 = ssub.s32 1024, 1024
          %310 = vsyncadd %s302, %s309
          %s311 = smul.addr %s307, 16
          %s312 = smul.addr %s311, 64
          %s313 = scalar_lea.hbm %s1, %s312
          %s314 = sshll.u32 %s305, 4
          %s315 = int_to_ptr.vmem [resolvable:$true] %s314
          %320 = dma.hbm_to_vmem [thread:$0]  %s313, 1024, %s315, %s302, 64, 64, 4
        $region24: #{_lambda_.1} parent=19 // pred_fallthru
          _
        // Predicated region
        $region25: #{_lambda_.1} parent=19 // pred_check
          %p321 = pneg %p111
        $region26: #{_lambda_.1} parent=19 // pred_check_branch
          %323 = sbr.rel (%p321) target = $region28
        $region27: #{_lambda_.1} parent=19 // pred_region
          %s324 = sand.u32 %s24, 1
          %s325 = scalar_lea.sflag [#allocation9], %s324
          %s326 = sand.u32 %s101, 1
          %s327 = smul.addr %s326, 704
          %s328 = scalar_lea.vmem [#allocation8], %s327
          %s329 = smul.u32 %s31, 3
          %s330 = sadd.s32 %s329, %s32
          %s332 = ssub.s32 11264, 11264
          %333 = vsyncadd %s325, %s332
          %s334 = smul.addr %s330, 176
          %s335 = smul.addr %s334, 64
          %s336 = scalar_lea.hbm %s2, %s335
          %s337 = sshll.u32 %s328, 4
          %s338 = int_to_ptr.vmem [resolvable:$true] %s337
          %343 = dma.hbm_to_vmem [thread:$0]  %s336, 11264, %s338, %s325, 64, 64, 4
        $region28: #{_lambda_.1} parent=19 // pred_fallthru
          _
        // Predicated region
        $region29: #{_lambda_.1} parent=19 // pred_check
          %p344 = pneg %p141
        $region30: #{_lambda_.1} parent=19 // pred_check_branch
          %346 = sbr.rel (%p344) target = $region32
        $region31: #{_lambda_.1} parent=19 // pred_region
          %s347 = smul.u32 %s31, 3
          %s348 = sadd.s32 %s347, %s32
          %p349 = scmp.lt.s32.totalorder %s348, 17
          %s350 = scalar_select %p349, %s348, 17
          %s351 = scalar_lea.vmem %s3, %s350
          %s352 = smul.u32 %s31, 3
          %s353 = sadd.s32 %s352, %s32
        $region32: #{_lambda_.1} parent=19 // pred_fallthru
          _
        // Predicated region
        $region33: #{_lambda_.1} parent=19 // pred_check
          %p354 = pneg %p171
        $region34: #{_lambda_.1} parent=19 // pred_check_branch
          %356 = sbr.rel (%p354) target = $region36
        $region35: #{_lambda_.1} parent=19 // pred_region
          %s357 = smul.u32 %s31, 3
          %s358 = sadd.s32 %s357, %s32
          %p359 = scmp.lt.s32.totalorder %s358, 17
          %s360 = scalar_select %p359, %s358, 17
          %s361 = scalar_lea.vmem %s4, %s360
          %s362 = smul.u32 %s31, 3
          %s363 = sadd.s32 %s362, %s32
        $region36: #{_lambda_.1} parent=19 // pred_fallthru
          _
        // Predicated region
        $region37: #{_lambda_.1} parent=19 // pred_check
          %p364 = pneg %p197
        $region38: #{_lambda_.1} parent=19 // pred_check_branch
          %366 = sbr.rel (%p364) target = $region40
        $region39: #{_lambda_.1} parent=19 // pred_region
          %s367 = sand.u32 %s24, 1
          %s368 = scalar_lea.sflag [#allocation9], %s367
          %s369 = sand.u32 %s187, 1
          %s370 = smul.addr %s369, 64
          %s371 = scalar_lea.vmem [#allocation10], %s370
          %s373 = ssub.s32 1024, 1024
          %374 = vsyncadd %s368, %s373
          %s375 = smul.addr %s31, 16
          %s376 = smul.addr %s375, 64
          %s377 = scalar_lea.hbm %s5, %s376
          %s378 = sshll.u32 %s371, 4
          %s379 = int_to_ptr.vmem [resolvable:$true] %s378
          %384 = dma.hbm_to_vmem [thread:$0]  %s377, 1024, %s379, %s368, 64, 64, 4
        $region40: #{_lambda_.1} parent=19 // pred_fallthru
          _
        // Predicated region
        $region41: #{_lambda_.1} parent=19 // pred_check
          %p385 = pneg %p223
        $region42: #{_lambda_.1} parent=19 // pred_check_branch
          %387 = sbr.rel (%p385) target = $region44
        $region43: #{_lambda_.1} parent=19 // pred_region
          %p388 = scmp.lt.s32.totalorder %s31, 5
          %s389 = scalar_select %p388, %s31, 5
          %s390 = scalar_lea.vmem %s6, %s389
        $region44: #{_lambda_.1} parent=19 // pred_fallthru
          _
        // Predicated region
        $region45: #{_lambda_.1} parent=19 // pred_check
          %p391 = pneg %p249
        $region46: #{_lambda_.1} parent=19 // pred_check_branch
          %393 = sbr.rel (%p391) target = $region48
        $region47: #{_lambda_.1} parent=19 // pred_region
          %s394 = sand.u32 %s239, 1
          %s395 = scalar_lea.sflag [#allocation12], %s394
          %s396 = sand.u32 %s239, 1
          %s397 = scalar_lea.vmem [#allocation11], %s396
          %s399 = ssub.s32 16, 16
          %400 = vsyncadd %s395, %s399
          %s401 = smul.addr %s31, 16
          %s402 = scalar_lea.hbm %s7, %s401
          %s404 = sshll.u32 %s397, 4
          %s405 = int_to_ptr.vmem [resolvable:$true] %s404
          %407 = dma.hbm_to_vmem [thread:$0]  %s402, 16, %s405, %s395
        $region48: #{_lambda_.1} parent=19 // pred_fallthru
          _
      $region20: #{_lambda_.1} parent=5 // pred_fallthru
        _
      %p408 = scmp.le.s32.totalorder 1, %s24
      %p409 = scmp.lt.s32.totalorder %s24, 19
      %p410 = pnand %p408, %p409
      %p411 = pneg %p410
      // Predicated region
      $region49: #{_lambda_.1} parent=5 // pred_check
        _
      $region50: #{_lambda_.1} parent=5 // pred_check_branch
        %413 = sbr.rel (%p410) target = $region52
      $region51: #{_lambda_.1} parent=5 // pred_region
        %s414 = ssub.s32 %s24, 1
        %s415 = sand.u32 %s74, 1
        %s416 = scalar_lea.sflag [#allocation6], %s415
        %s417 = sand.u32 %s74, 1
        %s418 = smul.addr %s417, 64
        %s419 = scalar_lea.vmem [#allocation5], %s418
        // Predicated region
        $region53: #{_lambda_.1} parent=51 // pred_check
          %p420 = pneg %p87
        $region54: #{_lambda_.1} parent=51 // pred_check_branch
          %422 = sbr.rel (%p420) target = $region56
        $region55: #{_lambda_.1} parent=51 // pred_region
          %423 = dma.done %s416, 1024
        $region56: #{_lambda_.1} parent=51 // pred_fallthru
          _
        %s424 = sand.u32 %s29, 1
        %s425 = scalar_lea.sflag [#allocation9], %s424
        %s426 = sand.u32 %s104, 1
        %s427 = smul.addr %s426, 704
        %s428 = scalar_lea.vmem [#allocation8], %s427
        // Predicated region
        $region57: #{_lambda_.1} parent=51 // pred_check
          %p429 = pneg %p117
        $region58: #{_lambda_.1} parent=51 // pred_check_branch
          %431 = sbr.rel (%p429) target = $region60
        $region59: #{_lambda_.1} parent=51 // pred_region
          %432 = dma.done %s425, 11264
        $region60: #{_lambda_.1} parent=51 // pred_fallthru
          _
        %s433 = sand.u32 %s29, 1
        %s434 = scalar_lea.sflag [#allocation9], %s433
        %s435 = sand.u32 %s190, 1
        %s436 = smul.addr %s435, 64
        %s437 = scalar_lea.vmem [#allocation10], %s436
        // Predicated region
        $region61: #{_lambda_.1} parent=51 // pred_check
          %p438 = pneg %p203
        $region62: #{_lambda_.1} parent=51 // pred_check_branch
          %440 = sbr.rel (%p438) target = $region64
        $region63: #{_lambda_.1} parent=51 // pred_region
          %441 = dma.done %s434, 1024
        $region64: #{_lambda_.1} parent=51 // pred_fallthru
          _
        %s442 = sand.u32 %s242, 1
        %s443 = scalar_lea.sflag [#allocation12], %s442
        %s444 = sand.u32 %s242, 1
        %s445 = scalar_lea.vmem [#allocation11], %s444
        // Predicated region
        $region65: #{_lambda_.1} parent=51 // pred_check
          %p446 = pneg %p255
        $region66: #{_lambda_.1} parent=51 // pred_check_branch
          %448 = sbr.rel (%p446) target = $region68
        $region67: #{_lambda_.1} parent=51 // pred_region
          %449 = dma.done %s443, 16
        $region68: #{_lambda_.1} parent=51 // pred_fallthru
          _
        %p450 = pneg %p57
        %p451 = pneg %p54
        %s452 = sand.u32 %s74, 1
        %s453 = scalar_lea.sflag [#allocation6], %s452
        %s454 = sand.u32 %s74, 1
        %s455 = smul.addr %s454, 64
        %s456 = scalar_lea.vmem [#allocation5], %s455
        %p457 = pneg %p87
        %p458 = pneg %p84
        %s459 = sand.u32 %s29, 1
        %s460 = scalar_lea.sflag [#allocation9], %s459
        %s461 = sand.u32 %s104, 1
        %s462 = smul.addr %s461, 704
        %s463 = scalar_lea.vmem [#allocation8], %s462
        %p464 = pneg %p117
        %p465 = pneg %p114
        %s466 = smul.u32 %s33, 3
        %s467 = sadd.s32 %s466, %s34
        %p468 = scmp.lt.s32.totalorder %s467, 17
        %s469 = scalar_select %p468, %s467, 17
        %s470 = scalar_lea.vmem %s3, %s469
        %p471 = pneg %p147
        %p472 = pneg %p144
        %s473 = smul.u32 %s33, 3
        %s474 = sadd.s32 %s473, %s34
        %p475 = scmp.lt.s32.totalorder %s474, 17
        %s476 = scalar_select %p475, %s474, 17
        %s477 = scalar_lea.vmem %s4, %s476
        %p478 = pneg %p177
        %p479 = pneg %p174
        %s480 = sand.u32 %s29, 1
        %s481 = scalar_lea.sflag [#allocation9], %s480
        %s482 = sand.u32 %s190, 1
        %s483 = smul.addr %s482, 64
        %s484 = scalar_lea.vmem [#allocation10], %s483
        %p485 = pneg %p203
        %p486 = pneg %p200
        %p487 = scmp.lt.s32.totalorder %s33, 5
        %s488 = scalar_select %p487, %s33, 5
        %s489 = scalar_lea.vmem %s6, %s488
        %p490 = pneg %p229
        %p491 = pneg %p226
        %s492 = sand.u32 %s242, 1
        %s493 = scalar_lea.sflag [#allocation12], %s492
        %s494 = sand.u32 %s242, 1
        %s495 = scalar_lea.vmem [#allocation11], %s494
        %p496 = pneg %p255
        %p497 = pneg %p252
        %p498 = pneg %p276
        %p499 = pneg %p273
        %s500 = smul.u32 %s33, 3
        %s501 = sadd.s32 %s500, %s34
        %s502 = smul.u32 %s33, 3
        %s503 = sadd.s32 %s502, %s34
        %s504 = smul.u32 %s33, 3
        %s505 = sadd.s32 %s504, %s34
        %p506 = scmp.lt.s32.totalorder %s505, 17
        %s507 = scalar_select %p506, %s505, 17
        %s508 = scalar_lea.vmem %s3, %s507
        %s509 = smul.u32 %s33, 3
        %s510 = sadd.s32 %s509, %s34
        %s511 = smul.u32 %s33, 3
        %s512 = sadd.s32 %s511, %s34
        %p513 = scmp.lt.s32.totalorder %s512, 17
        %s514 = scalar_select %p513, %s512, 17
        %s515 = scalar_lea.vmem %s4, %s514
        %s516 = smul.u32 %s33, 3
        %s517 = sadd.s32 %s516, %s34
        %p518 = scmp.lt.s32.totalorder %s33, 5
        %s519 = scalar_select %p518, %s33, 5
        %s520 = scalar_lea.vmem %s6, %s519
        %p522 = scmp.eq.s32.totalorder %s33, 0
        %p523 = scmp.eq.s32.totalorder %s34, 0
        %p524 = pnand %p522, %p523
        %p525 = pneg %p524
        // Predicated region
        $region69: #{_lambda_.1} parent=51 // pred_check
          _
        $region70: #{_lambda_.1} parent=51 // pred_check_branch
          %527 = sbr.rel (%p524) target = $region72
        $region71: #{_lambda_.1} parent=51 // pred_region
          %v528 = vld [vmem:[%s0] sm:$0xf]
          %v529 = vld [vmem:[%s0 + $0x4] sm:$0xf]
          %v530 = vld [vmem:[%s0 + $0x8] sm:$0xf]
          %v531 = vld [vmem:[%s0 + $0xc] sm:$0xf]
          %v536 = vunpack.c.l.b16 %v528
          %v537 = vunpack.c.l.b16 %v529
          %v538 = vunpack.c.l.b16 %v530
          %v539 = vunpack.c.l.b16 %v531
          %v540 = vpack.c.b16 %v537, %v536
          %v541 = vpack.c.b16 %v539, %v538
          %544 = vst [vmem:[#allocation2] sm:$0xff] %v540
          %545 = vst [vmem:[#allocation2 + $0x8] sm:$0xff] %v541
          %vm546 = vcmask 261120
          %547 = vst.msk [vmem:[#allocation3] sm:$0xff] %vm546, 0
          %vm548 = vcmask 257024
          %549 = vst.msk [vmem:[#allocation3 + $0x8] sm:$0xf] %vm548, 0
          %550 = vst.msk [vmem:[#allocation3 + $0x20] sm:$0xff] %vm546, 0
          %551 = vst.msk [vmem:[#allocation3 + $0x28] sm:$0xf] %vm548, 0
          %vm552 = vcmask 261124
          %553 = vst.msk [vmem:[#allocation3 + $0x10] sm:$0xf0] %vm552, 0
          %554 = vst.msk [vmem:[#allocation3 + $0x18] sm:$0xff] %vm546, 0
          %555 = vst.msk [vmem:[#allocation3 + $0x30] sm:$0xf0] %vm552, 0
          %556 = vst.msk [vmem:[#allocation3 + $0x38] sm:$0xff] %vm546, 0
        $region72: #{_lambda_.1} parent=51 // pred_fallthru
          _
        %v557 = vld [vmem:[#allocation2] sm:$0xff]
        %v558 = vld [vmem:[#allocation2 + $0x8] sm:$0xff]
        // Predicated region
        $region73: #{_lambda_.1} parent=51 // pred_check
          %p559 = pneg %p523
        $region74: #{_lambda_.1} parent=51 // pred_check_branch
          %561 = sbr.rel (%p559) target = $region76
        $region75: #{_lambda_.1} parent=51 // pred_region
          %562 = vst [vmem:[#allocation4] sm:$0xff] %v557
          %563 = vst [vmem:[#allocation4 + $0x8] sm:$0xff] %v558
        $region76: #{_lambda_.1} parent=51 // pred_fallthru
          _
        %v564 = vld [vmem:[%s419] sm:$0xf]
        %v565 = vld [vmem:[%s419 + $0x4] sm:$0xf]
        %v566 = vld [vmem:[%s419 + $0x8] sm:$0xf]
        %v567 = vld [vmem:[%s419 + $0xc] sm:$0xf]
        %v568 = vld [vmem:[%s419 + $0x10] sm:$0xf]
        %v569 = vld [vmem:[%s419 + $0x14] sm:$0xf]
        %v570 = vld [vmem:[%s419 + $0x18] sm:$0xf]
        %v571 = vld [vmem:[%s419 + $0x1c] sm:$0xf]
        %v572 = vld [vmem:[%s419 + $0x20] sm:$0xf]
        %v573 = vld [vmem:[%s419 + $0x24] sm:$0xf]
        %v574 = vld [vmem:[%s419 + $0x28] sm:$0xf]
        %v575 = vld [vmem:[%s419 + $0x2c] sm:$0xf]
        %v576 = vld [vmem:[%s419 + $0x30] sm:$0xf]
        %v577 = vld [vmem:[%s419 + $0x34] sm:$0xf]
        %v578 = vld [vmem:[%s419 + $0x38] sm:$0xf]
        %v579 = vld [vmem:[%s419 + $0x3c] sm:$0xf]
        %v596 = vunpack.c.l.b16 %v564
        %v597 = vunpack.c.l.b16 %v565
        %v598 = vunpack.c.l.b16 %v566
        %v599 = vunpack.c.l.b16 %v567
        %v600 = vunpack.c.l.b16 %v568
        %v601 = vunpack.c.l.b16 %v569
        %v602 = vunpack.c.l.b16 %v570
        %v603 = vunpack.c.l.b16 %v571
        %v604 = vunpack.c.l.b16 %v572
        %v605 = vunpack.c.l.b16 %v573
        %v606 = vunpack.c.l.b16 %v574
        %v607 = vunpack.c.l.b16 %v575
        %v608 = vunpack.c.l.b16 %v576
        %v609 = vunpack.c.l.b16 %v577
        %v610 = vunpack.c.l.b16 %v578
        %v611 = vunpack.c.l.b16 %v579
        %v612 = vpack.c.b16 %v597, %v596
        %v613 = vpack.c.b16 %v599, %v598
        %v614 = vpack.c.b16 %v601, %v600
        %v615 = vpack.c.b16 %v603, %v602
        %v616 = vpack.c.b16 %v605, %v604
        %v617 = vpack.c.b16 %v607, %v606
        %v618 = vpack.c.b16 %v609, %v608
        %v619 = vpack.c.b16 %v611, %v610
        %628 = vmatprep.subr.bf16.mxu0 0
        %629 = vmatpush1.bf16.msra.mxu0 %v612
        %630 = vmatprep.subr.bf16.mxu0 0
        %631 = vmatpush1.bf16.msra.mxu0 %v613
        %632 = vmatprep.subr.bf16.mxu0 0
        %633 = vmatpush1.bf16.msra.mxu0 %v614
        %634 = vmatprep.subr.bf16.mxu0 0
        %635 = vmatpush1.bf16.msra.mxu0 %v615
        %636 = vmatprep.subr.bf16.mxu0 0
        %637 = vmatpush1.bf16.msra.mxu0 %v616
        %638 = vmatprep.subr.bf16.mxu0 0
        %639 = vmatpush1.bf16.msra.mxu0 %v617
        %640 = vmatprep.subr.bf16.mxu0 0
        %641 = vmatpush1.bf16.msra.mxu0 %v618
        %642 = vmatprep.subr.bf16.mxu0 0
        %643 = vmatpush1.bf16.msra.mxu0 %v619
        %644 = vmatprep.subr.bf16.mxu0 0
        %645 = vmatpush1.bf16.msra.mxu0 0
        %646 = vmatprep.subr.bf16.mxu0 0
        %647 = vmatpush1.bf16.msra.mxu0 0
        %648 = vmatprep.subr.bf16.mxu0 0
        %649 = vmatpush1.bf16.msra.mxu0 0
        %650 = vmatprep.subr.bf16.mxu0 0
        %651 = vmatpush1.bf16.msra.mxu0 0
        %652 = vmatprep.subr.bf16.mxu0 0
        %653 = vmatpush1.bf16.msra.mxu0 0
        %654 = vmatprep.subr.bf16.mxu0 0
        %655 = vmatpush1.bf16.msra.mxu0 0
        %656 = vmatprep.subr.bf16.mxu0 0
        %657 = vmatpush1.bf16.msra.mxu0 0
        %658 = vmatprep.subr.bf16.mxu0 0
        %659 = vmatpush1.bf16.msra.mxu0 0
        %660 = vmatprep.mubr.bf16.mxu0 0
        %661 = vmatmul.mubr.bf16.gmra.mrb[0].mxu0 %v557
        %v662 = vpop.f32.mrb[0].mxu0
        %v663 = vadd.f32 0.0, %v662
        %v664 = vpop.f32.mrb[0].mxu0
        %v665 = vpop.f32.mrb[0].mxu0
        %v666 = vadd.f32 0.0, %v665
        %v667 = vpop.f32.mrb[0].mxu0
        %668 = vmatprep.mubr.bf16.mxu0 0
        %669 = vmatmul.mubr.bf16.gmra.mrb[0].mxu0 %v558
        %v670 = vpop.f32.mrb[0].mxu0
        %v671 = vadd.f32 0.0, %v670
        %v672 = vpop.f32.mrb[0].mxu0
        %v673 = vpop.f32.mrb[0].mxu0
        %v674 = vadd.f32 0.0, %v673
        %v675 = vpop.f32.mrb[0].mxu0
        %676 = vdwg.mxu0
        %v677 = vpack.c.bf16 %v666, %v663
        %v678 = vpack.c.bf16 %v674, %v671
        %v681 = vrot.slane %v677, 4
        %v682 = vrot.slane %v678, 4
        %vm685 = vcmask 261124
        %686 = vst.msk [vmem:[#allocation3 + $0x8] sm:$0xf0] %vm685, %v681
        %vm687 = vcmask 257024
        %688 = vst.msk [vmem:[#allocation3 + $0x10] sm:$0xf] %vm687, %v681
        %689 = vst.msk [vmem:[#allocation3 + $0x28] sm:$0xf0] %vm685, %v682
        %690 = vst.msk [vmem:[#allocation3 + $0x30] sm:$0xf] %vm687, %v682
        %v691 = vld [vmem:[#allocation3] sm:$0xfc]
        %v692 = vld [vmem:[#allocation3 + $0x8] sm:$0x7]
        %v693 = vld [vmem:[#allocation3 + $0x20] sm:$0xfc]
        %v694 = vld [vmem:[#allocation3 + $0x28] sm:$0x7]
        %vm695 = vsmask.f32 5376
        %v697 = vshrl.u32 %v691, 16
        %v699 = vrot.slane %v697, 2
        %v700 = vshll.u32 %v691, 16
        %v702 = vrot.slane %v700, 3
        %v703 = vor.u32 %v699, %v702
        %v705 = vshrl.u32 %v692, 16
        %v707 = vrot.slane %v705, 2
        %v708 = vshll.u32 %v692, 16
        %v710 = vrot.slane %v708, 3
        %v711 = vor.u32 %v707, %v710
        %v712 = vsel %vm695, %v703, %v711
        %v714 = vshrl.u32 %v693, 16
        %v716 = vrot.slane %v714, 2
        %v717 = vshll.u32 %v693, 16
        %v719 = vrot.slane %v717, 3
        %v720 = vor.u32 %v716, %v719
        %v722 = vshrl.u32 %v694, 16
        %v724 = vrot.slane %v722, 2
        %v725 = vshll.u32 %v694, 16
        %v727 = vrot.slane %v725, 3
        %v728 = vor.u32 %v724, %v727
        %v729 = vsel %vm695, %v720, %v728
        %v730 = vld [vmem:[#allocation3] sm:$0xf8]
        %v731 = vld [vmem:[#allocation3 + $0x20] sm:$0xf8]
        %vm736 = vcmask 1044480
        %v737 = vrot.slane %v730, 3
        %v738 = vrot.slane %v692, 3
        %v739 = vsel %vm736, %v737, %v738
        %v740 = vrot.slane %v731, 3
        %v741 = vrot.slane %v694, 3
        %v742 = vsel %vm736, %v740, %v741
        %v743 = vld [vmem:[#allocation3 + $0x8] sm:$0xf]
        %v744 = vld [vmem:[#allocation3 + $0x28] sm:$0xf]
        %vm745 = vsmask.f32 4352
        %v747 = vshrl.u32 %v730, 16
        %v749 = vrot.slane %v747, 3
        %v750 = vshll.u32 %v730, 16
        %v752 = vrot.slane %v750, 4
        %v753 = vor.u32 %v749, %v752
        %v755 = vshrl.u32 %v743, 16
        %v757 = vrot.slane %v755, 3
        %v758 = vshll.u32 %v743, 16
        %v760 = vrot.slane %v758, 4
        %v761 = vor.u32 %v757, %v760
        %v762 = vsel %vm745, %v753, %v761
        %v764 = vshrl.u32 %v731, 16
        %v766 = vrot.slane %v764, 3
        %v767 = vshll.u32 %v731, 16
        %v769 = vrot.slane %v767, 4
        %v770 = vor.u32 %v766, %v769
        %v772 = vshrl.u32 %v744, 16
        %v774 = vrot.slane %v772, 3
        %v775 = vshll.u32 %v744, 16
        %v777 = vrot.slane %v775, 4
        %v778 = vor.u32 %v774, %v777
        %v779 = vsel %vm745, %v770, %v778
        %v780 = vld [vmem:[#allocation3] sm:$0xf0]
        %v781 = vld [vmem:[#allocation3 + $0x20] sm:$0xf0]
        %vm786 = vcmask 1043456
        %v787 = vrot.slane %v780, 4
        %v788 = vrot.slane %v743, 4
        %v789 = vsel %vm786, %v787, %v788
        %v790 = vrot.slane %v781, 4
        %v791 = vrot.slane %v744, 4
        %v792 = vsel %vm786, %v790, %v791
        %v793 = vld [vmem:[#allocation3 + $0x8] sm:$0x1f]
        %v794 = vld [vmem:[#allocation3 + $0x28] sm:$0x1f]
        %vm795 = vsmask.f32 3328
        %v797 = vshrl.u32 %v780, 16
        %v799 = vrot.slane %v797, 4
        %v800 = vshll.u32 %v780, 16
        %v802 = vrot.slane %v800, 5
        %v803 = vor.u32 %v799, %v802
        %v805 = vshrl.u32 %v793, 16
        %v807 = vrot.slane %v805, 4
        %v808 = vshll.u32 %v793, 16
        %v810 = vrot.slane %v808, 5
        %v811 = vor.u32 %v807, %v810
        %v812 = vsel %vm795, %v803, %v811
        %v814 = vshrl.u32 %v781, 16
        %v816 = vrot.slane %v814, 4
        %v817 = vshll.u32 %v781, 16
        %v819 = vrot.slane %v817, 5
        %v820 = vor.u32 %v816, %v819
        %v822 = vshrl.u32 %v794, 16
        %v824 = vrot.slane %v822, 4
        %v825 = vshll.u32 %v794, 16
        %v827 = vrot.slane %v825, 5
        %v828 = vor.u32 %v824, %v827
        %v829 = vsel %vm795, %v820, %v828
        %v830 = vld [vmem:[#allocation3] sm:$0xe0]
        %v831 = vld [vmem:[#allocation3 + $0x20] sm:$0xe0]
        %vm836 = vcmask 1042432
        %v837 = vrot.slane %v830, 5
        %v838 = vrot.slane %v793, 5
        %v839 = vsel %vm836, %v837, %v838
        %v840 = vrot.slane %v831, 5
        %v841 = vrot.slane %v794, 5
        %v842 = vsel %vm836, %v840, %v841
        %v843 = vld [vmem:[#allocation3 + $0x8] sm:$0x3f]
        %v844 = vld [vmem:[#allocation3 + $0x28] sm:$0x3f]
        %vm845 = vsmask.f32 2304
        %v847 = vshrl.u32 %v830, 16
        %v849 = vrot.slane %v847, 5
        %v850 = vshll.u32 %v830, 16
        %v852 = vrot.slane %v850, 6
        %v853 = vor.u32 %v849, %v852
        %v855 = vshrl.u32 %v843, 16
        %v857 = vrot.slane %v855, 5
        %v858 = vshll.u32 %v843, 16
        %v860 = vrot.slane %v858, 6
        %v861 = vor.u32 %v857, %v860
        %v862 = vsel %vm845, %v853, %v861
        %v864 = vshrl.u32 %v831, 16
        %v866 = vrot.slane %v864, 5
        %v867 = vshll.u32 %v831, 16
        %v869 = vrot.slane %v867, 6
        %v870 = vor.u32 %v866, %v869
        %v872 = vshrl.u32 %v844, 16
        %v874 = vrot.slane %v872, 5
        %v875 = vshll.u32 %v844, 16
        %v877 = vrot.slane %v875, 6
        %v878 = vor.u32 %v874, %v877
        %v879 = vsel %vm845, %v870, %v878
        %v880 = vld [vmem:[#allocation3] sm:$0xc0]
        %v881 = vld [vmem:[#allocation3 + $0x20] sm:$0xc0]
        %vm886 = vcmask 1041408
        %v887 = vrot.slane %v880, 6
        %v888 = vrot.slane %v843, 6
        %v889 = vsel %vm886, %v887, %v888
        %v890 = vrot.slane %v881, 6
        %v891 = vrot.slane %v844, 6
        %v892 = vsel %vm886, %v890, %v891
        %v893 = vld [vmem:[#allocation3 + $0x8] sm:$0x7f]
        %v894 = vld [vmem:[#allocation3 + $0x28] sm:$0x7f]
        %vm895 = vsmask.f32 1280
        %v897 = vshrl.u32 %v880, 16
        %v899 = vrot.slane %v897, 6
        %v900 = vshll.u32 %v880, 16
        %v902 = vrot.slane %v900, 7
        %v903 = vor.u32 %v899, %v902
        %v905 = vshrl.u32 %v893, 16
        %v907 = vrot.slane %v905, 6
        %v908 = vshll.u32 %v893, 16
        %v910 = vrot.slane %v908, 7
        %v911 = vor.u32 %v907, %v910
        %v912 = vsel %vm895, %v903, %v911
        %v914 = vshrl.u32 %v881, 16
        %v916 = vrot.slane %v914, 6
        %v917 = vshll.u32 %v881, 16
        %v919 = vrot.slane %v917, 7
        %v920 = vor.u32 %v916, %v919
        %v922 = vshrl.u32 %v894, 16
        %v924 = vrot.slane %v922, 6
        %v925 = vshll.u32 %v894, 16
        %v927 = vrot.slane %v925, 7
        %v928 = vor.u32 %v924, %v927
        %v929 = vsel %vm895, %v920, %v928
        %v930 = vld [vmem:[#allocation3] sm:$0x80]
        %v931 = vld [vmem:[#allocation3 + $0x20] sm:$0x80]
        %vm936 = vcmask 1040384
        %v937 = vrot.slane %v930, 7
        %v938 = vrot.slane %v893, 7
        %v939 = vsel %vm936, %v937, %v938
        %v940 = vrot.slane %v931, 7
        %v941 = vrot.slane %v894, 7
        %v942 = vsel %vm936, %v940, %v941
        %v943 = vld [vmem:[#allocation3 + $0x8] sm:$0xff]
        %v944 = vld [vmem:[#allocation3 + $0x28] sm:$0xff]
        %vm945 = vsmask.f32 256
        %v947 = vshrl.u32 %v930, 16
        %v949 = vrot.slane %v947, 7
        %v951 = vshrl.u32 %v943, 16
        %v953 = vrot.slane %v951, 7
        %v954 = vshll.u32 %v943, 16
        %v956 = vor.u32 %v953, %v954
        %v957 = vsel %vm945, %v949, %v956
        %v959 = vshrl.u32 %v931, 16
        %v961 = vrot.slane %v959, 7
        %v963 = vshrl.u32 %v944, 16
        %v965 = vrot.slane %v963, 7
        %v966 = vshll.u32 %v944, 16
        %v968 = vor.u32 %v965, %v966
        %v969 = vsel %vm945, %v961, %v968
        %v970 = vld [vmem:[#allocation3 + $0x10] sm:$0x1]
        %v971 = vld [vmem:[#allocation3 + $0x30] sm:$0x1]
        %vm972 = vsmask.f32 7424
        %v973 = vrot.slane %v954, 1
        %v974 = vor.u32 %v951, %v973
        %v976 = vshll.u32 %v970, 16
        %v978 = vrot.slane %v976, 1
        %v979 = vsel %vm972, %v974, %v978
        %v980 = vrot.slane %v966, 1
        %v981 = vor.u32 %v963, %v980
        %v983 = vshll.u32 %v971, 16
        %v985 = vrot.slane %v983, 1
        %v986 = vsel %vm972, %v981, %v985
        %v987 = vld [vmem:[#allocation3 + $0x8] sm:$0xfe]
        %v988 = vld [vmem:[#allocation3 + $0x28] sm:$0xfe]
        %vm993 = vcmask 1046528
        %v994 = vrot.slane %v987, 1
        %v995 = vrot.slane %v970, 1
        %v996 = vsel %vm993, %v994, %v995
        %v997 = vrot.slane %v988, 1
        %v998 = vrot.slane %v971, 1
        %v999 = vsel %vm993, %v997, %v998
        %v1000 = vld [vmem:[#allocation3 + $0x10] sm:$0x3]
        %v1001 = vld [vmem:[#allocation3 + $0x30] sm:$0x3]
        %vm1002 = vsmask.f32 6400
        %v1004 = vshrl.u32 %v987, 16
        %v1006 = vrot.slane %v1004, 1
        %v1007 = vshll.u32 %v987, 16
        %v1009 = vrot.slane %v1007, 2
        %v1010 = vor.u32 %v1006, %v1009
        %v1012 = vshrl.u32 %v1000, 16
        %v1014 = vrot.slane %v1012, 1
        %v1015 = vshll.u32 %v1000, 16
        %v1017 = vrot.slane %v1015, 2
        %v1018 = vor.u32 %v1014, %v1017
        %v1019 = vsel %vm1002, %v1010, %v1018
        %v1021 = vshrl.u32 %v988, 16
        %v1023 = vrot.slane %v1021, 1
        %v1024 = vshll.u32 %v988, 16
        %v1026 = vrot.slane %v1024, 2
        %v1027 = vor.u32 %v1023, %v1026
        %v1029 = vshrl.u32 %v1001, 16
        %v1031 = vrot.slane %v1029, 1
        %v1032 = vshll.u32 %v1001, 16
        %v1034 = vrot.slane %v1032, 2
        %v1035 = vor.u32 %v1031, %v1034
        %v1036 = vsel %vm1002, %v1027, %v1035
        %v1037 = vld [vmem:[#allocation3 + $0x8] sm:$0xfc]
        %v1038 = vld [vmem:[#allocation3 + $0x28] sm:$0xfc]
        %vm1043 = vcmask 1045504
        %v1044 = vrot.slane %v1037, 2
        %v1045 = vrot.slane %v1000, 2
        %v1046 = vsel %vm1043, %v1044, %v1045
        %v1047 = vrot.slane %v1038, 2
        %v1048 = vrot.slane %v1001, 2
        %v1049 = vsel %vm1043, %v1047, %v1048
        %v1050 = vld [vmem:[#allocation3 + $0x10] sm:$0x7]
        %v1051 = vld [vmem:[#allocation3 + $0x30] sm:$0x7]
        %v1053 = vshrl.u32 %v1037, 16
        %v1055 = vrot.slane %v1053, 2
        %v1056 = vshll.u32 %v1037, 16
        %v1058 = vrot.slane %v1056, 3
        %v1059 = vor.u32 %v1055, %v1058
        %v1061 = vshrl.u32 %v1050, 16
        %v1063 = vrot.slane %v1061, 2
        %v1064 = vshll.u32 %v1050, 16
        %v1066 = vrot.slane %v1064, 3
        %v1067 = vor.u32 %v1063, %v1066
        %v1068 = vsel %vm695, %v1059, %v1067
        %v1070 = vshrl.u32 %v1038, 16
        %v1072 = vrot.slane %v1070, 2
        %v1073 = vshll.u32 %v1038, 16
        %v1075 = vrot.slane %v1073, 3
        %v1076 = vor.u32 %v1072, %v1075
        %v1078 = vshrl.u32 %v1051, 16
        %v1080 = vrot.slane %v1078, 2
        %v1081 = vshll.u32 %v1051, 16
        %v1083 = vrot.slane %v1081, 3
        %v1084 = vor.u32 %v1080, %v1083
        %v1085 = vsel %vm695, %v1076, %v1084
        %v1086 = vld [vmem:[#allocation3 + $0x8] sm:$0xf8]
        %v1087 = vld [vmem:[#allocation3 + $0x28] sm:$0xf8]
        %v1092 = vrot.slane %v1086, 3
        %v1093 = vrot.slane %v1050, 3
        %v1094 = vsel %vm736, %v1092, %v1093
        %v1095 = vrot.slane %v1087, 3
        %v1096 = vrot.slane %v1051, 3
        %v1097 = vsel %vm736, %v1095, %v1096
        %v1098 = vld [vmem:[#allocation3 + $0x10] sm:$0xf]
        %v1099 = vld [vmem:[#allocation3 + $0x30] sm:$0xf]
        %v1101 = vshrl.u32 %v1086, 16
        %v1103 = vrot.slane %v1101, 3
        %v1104 = vshll.u32 %v1086, 16
        %v1106 = vrot.slane %v1104, 4
        %v1107 = vor.u32 %v1103, %v1106
        %v1109 = vshrl.u32 %v1098, 16
        %v1111 = vrot.slane %v1109, 3
        %v1112 = vshll.u32 %v1098, 16
        %v1114 = vrot.slane %v1112, 4
        %v1115 = vor.u32 %v1111, %v1114
        %v1116 = vsel %vm745, %v1107, %v1115
        %v1118 = vshrl.u32 %v1087, 16
        %v1120 = vrot.slane %v1118, 3
        %v1121 = vshll.u32 %v1087, 16
        %v1123 = vrot.slane %v1121, 4
        %v1124 = vor.u32 %v1120, %v1123
        %v1126 = vshrl.u32 %v1099, 16
        %v1128 = vrot.slane %v1126, 3
        %v1129 = vshll.u32 %v1099, 16
        %v1131 = vrot.slane %v1129, 4
        %v1132 = vor.u32 %v1128, %v1131
        %v1133 = vsel %vm745, %v1124, %v1132
        %v1134 = vld [vmem:[#allocation3 + $0x8] sm:$0xf0]
        %v1135 = vld [vmem:[#allocation3 + $0x28] sm:$0xf0]
        %v1140 = vrot.slane %v1134, 4
        %v1141 = vrot.slane %v1098, 4
        %v1142 = vsel %vm786, %v1140, %v1141
        %v1143 = vrot.slane %v1135, 4
        %v1144 = vrot.slane %v1099, 4
        %v1145 = vsel %vm786, %v1143, %v1144
        %v1146 = vld [vmem:[#allocation3 + $0x10] sm:$0x1f]
        %v1147 = vld [vmem:[#allocation3 + $0x30] sm:$0x1f]
        %v1149 = vshrl.u32 %v1134, 16
        %v1151 = vrot.slane %v1149, 4
        %v1152 = vshll.u32 %v1134, 16
        %v1154 = vrot.slane %v1152, 5
        %v1155 = vor.u32 %v1151, %v1154
        %v1157 = vshrl.u32 %v1146, 16
        %v1159 = vrot.slane %v1157, 4
        %v1160 = vshll.u32 %v1146, 16
        %v1162 = vrot.slane %v1160, 5
        %v1163 = vor.u32 %v1159, %v1162
        %v1164 = vsel %vm795, %v1155, %v1163
        %v1166 = vshrl.u32 %v1135, 16
        %v1168 = vrot.slane %v1166, 4
        %v1169 = vshll.u32 %v1135, 16
        %v1171 = vrot.slane %v1169, 5
        %v1172 = vor.u32 %v1168, %v1171
        %v1174 = vshrl.u32 %v1147, 16
        %v1176 = vrot.slane %v1174, 4
        %v1177 = vshll.u32 %v1147, 16
        %v1179 = vrot.slane %v1177, 5
        %v1180 = vor.u32 %v1176, %v1179
        %v1181 = vsel %vm795, %v1172, %v1180
        %v1182 = vld [vmem:[#allocation3 + $0x8] sm:$0xe0]
        %v1183 = vld [vmem:[#allocation3 + $0x28] sm:$0xe0]
        %v1188 = vrot.slane %v1182, 5
        %v1189 = vrot.slane %v1146, 5
        %v1190 = vsel %vm836, %v1188, %v1189
        %v1191 = vrot.slane %v1183, 5
        %v1192 = vrot.slane %v1147, 5
        %v1193 = vsel %vm836, %v1191, %v1192
        %v1194 = vld [vmem:[#allocation3 + $0x10] sm:$0x3f]
        %v1195 = vld [vmem:[#allocation3 + $0x30] sm:$0x3f]
        %v1197 = vshrl.u32 %v1182, 16
        %v1199 = vrot.slane %v1197, 5
        %v1200 = vshll.u32 %v1182, 16
        %v1202 = vrot.slane %v1200, 6
        %v1203 = vor.u32 %v1199, %v1202
        %v1205 = vshrl.u32 %v1194, 16
        %v1207 = vrot.slane %v1205, 5
        %v1208 = vshll.u32 %v1194, 16
        %v1210 = vrot.slane %v1208, 6
        %v1211 = vor.u32 %v1207, %v1210
        %v1212 = vsel %vm845, %v1203, %v1211
        %v1214 = vshrl.u32 %v1183, 16
        %v1216 = vrot.slane %v1214, 5
        %v1217 = vshll.u32 %v1183, 16
        %v1219 = vrot.slane %v1217, 6
        %v1220 = vor.u32 %v1216, %v1219
        %v1222 = vshrl.u32 %v1195, 16
        %v1224 = vrot.slane %v1222, 5
        %v1225 = vshll.u32 %v1195, 16
        %v1227 = vrot.slane %v1225, 6
        %v1228 = vor.u32 %v1224, %v1227
        %v1229 = vsel %vm845, %v1220, %v1228
        %v1230 = vld [vmem:[#allocation3 + $0x8] sm:$0xc0]
        %v1231 = vld [vmem:[#allocation3 + $0x28] sm:$0xc0]
        %v1236 = vrot.slane %v1230, 6
        %v1237 = vrot.slane %v1194, 6
        %v1238 = vsel %vm886, %v1236, %v1237
        %v1239 = vrot.slane %v1231, 6
        %v1240 = vrot.slane %v1195, 6
        %v1241 = vsel %vm886, %v1239, %v1240
        %v1242 = vld [vmem:[#allocation3 + $0x10] sm:$0x7f]
        %v1243 = vld [vmem:[#allocation3 + $0x30] sm:$0x7f]
        %v1245 = vshrl.u32 %v1230, 16
        %v1247 = vrot.slane %v1245, 6
        %v1248 = vshll.u32 %v1230, 16
        %v1250 = vrot.slane %v1248, 7
        %v1251 = vor.u32 %v1247, %v1250
        %v1253 = vshrl.u32 %v1242, 16
        %v1255 = vrot.slane %v1253, 6
        %v1256 = vshll.u32 %v1242, 16
        %v1258 = vrot.slane %v1256, 7
        %v1259 = vor.u32 %v1255, %v1258
        %v1260 = vsel %vm895, %v1251, %v1259
        %v1262 = vshrl.u32 %v1231, 16
        %v1264 = vrot.slane %v1262, 6
        %v1265 = vshll.u32 %v1231, 16
        %v1267 = vrot.slane %v1265, 7
        %v1268 = vor.u32 %v1264, %v1267
        %v1270 = vshrl.u32 %v1243, 16
        %v1272 = vrot.slane %v1270, 6
        %v1273 = vshll.u32 %v1243, 16
        %v1275 = vrot.slane %v1273, 7
        %v1276 = vor.u32 %v1272, %v1275
        %v1277 = vsel %vm895, %v1268, %v1276
        %v1278 = vld [vmem:[#allocation3 + $0x8] sm:$0x80]
        %v1279 = vld [vmem:[#allocation3 + $0x28] sm:$0x80]
        %v1284 = vrot.slane %v1278, 7
        %v1285 = vrot.slane %v1242, 7
        %v1286 = vsel %vm936, %v1284, %v1285
        %v1287 = vrot.slane %v1279, 7
        %v1288 = vrot.slane %v1243, 7
        %v1289 = vsel %vm936, %v1287, %v1288
        %v1290 = vld [vmem:[#allocation3 + $0x10] sm:$0xff]
        %v1291 = vld [vmem:[#allocation3 + $0x30] sm:$0xff]
        %v1293 = vshrl.u32 %v1278, 16
        %v1295 = vrot.slane %v1293, 7
        %v1297 = vshrl.u32 %v1290, 16
        %v1299 = vrot.slane %v1297, 7
        %v1300 = vshll.u32 %v1290, 16
        %v1302 = vor.u32 %v1299, %v1300
        %v1303 = vsel %vm945, %v1295, %v1302
        %v1305 = vshrl.u32 %v1279, 16
        %v1307 = vrot.slane %v1305, 7
        %v1309 = vshrl.u32 %v1291, 16
        %v1311 = vrot.slane %v1309, 7
        %v1312 = vshll.u32 %v1291, 16
        %v1314 = vor.u32 %v1311, %v1312
        %v1315 = vsel %vm945, %v1307, %v1314
        %v1316 = vld [vmem:[#allocation3 + $0x18] sm:$0x1]
        %v1317 = vld [vmem:[#allocation3 + $0x38] sm:$0x1]
        %v1318 = vrot.slane %v1300, 1
        %v1319 = vor.u32 %v1297, %v1318
        %v1321 = vshll.u32 %v1316, 16
        %v1323 = vrot.slane %v1321, 1
        %v1324 = vsel %vm972, %v1319, %v1323
        %v1325 = vrot.slane %v1312, 1
        %v1326 = vor.u32 %v1309, %v1325
        %v1328 = vshll.u32 %v1317, 16
        %v1330 = vrot.slane %v1328, 1
        %v1331 = vsel %vm972, %v1326, %v1330
        %v1332 = vld [vmem:[#allocation3 + $0x10] sm:$0xfe]
        %v1333 = vld [vmem:[#allocation3 + $0x30] sm:$0xfe]
        %v1338 = vrot.slane %v1332, 1
        %v1339 = vrot.slane %v1316, 1
        %v1340 = vsel %vm993, %v1338, %v1339
        %v1341 = vrot.slane %v1333, 1
        %v1342 = vrot.slane %v1317, 1
        %v1343 = vsel %vm993, %v1341, %v1342
        %v1344 = vld [vmem:[#allocation3 + $0x18] sm:$0x3]
        %v1345 = vld [vmem:[#allocation3 + $0x38] sm:$0x3]
        %v1347 = vshrl.u32 %v1332, 16
        %v1349 = vrot.slane %v1347, 1
        %v1350 = vshll.u32 %v1332, 16
        %v1352 = vrot.slane %v1350, 2
        %v1353 = vor.u32 %v1349, %v1352
        %v1355 = vshrl.u32 %v1344, 16
        %v1357 = vrot.slane %v1355, 1
        %v1358 = vshll.u32 %v1344, 16
        %v1360 = vrot.slane %v1358, 2
        %v1361 = vor.u32 %v1357, %v1360
        %v1362 = vsel %vm1002, %v1353, %v1361
        %v1364 = vshrl.u32 %v1333, 16
        %v1366 = vrot.slane %v1364, 1
        %v1367 = vshll.u32 %v1333, 16
        %v1369 = vrot.slane %v1367, 2
        %v1370 = vor.u32 %v1366, %v1369
        %v1372 = vshrl.u32 %v1345, 16
        %v1374 = vrot.slane %v1372, 1
        %v1375 = vshll.u32 %v1345, 16
        %v1377 = vrot.slane %v1375, 2
        %v1378 = vor.u32 %v1374, %v1377
        %v1379 = vsel %vm1002, %v1370, %v1378
        %v1380 = vld [vmem:[#allocation3 + $0x10] sm:$0xfc]
        %v1381 = vld [vmem:[#allocation3 + $0x30] sm:$0xfc]
        %v1386 = vrot.slane %v1380, 2
        %v1387 = vrot.slane %v1344, 2
        %v1388 = vsel %vm1043, %v1386, %v1387
        %v1389 = vrot.slane %v1381, 2
        %v1390 = vrot.slane %v1345, 2
        %v1391 = vsel %vm1043, %v1389, %v1390
        %v1392 = vld [vmem:[#allocation3 + $0x18] sm:$0x7]
        %v1393 = vld [vmem:[#allocation3 + $0x38] sm:$0x7]
        %v1395 = vshrl.u32 %v1380, 16
        %v1397 = vrot.slane %v1395, 2
        %v1398 = vshll.u32 %v1380, 16
        %v1400 = vrot.slane %v1398, 3
        %v1401 = vor.u32 %v1397, %v1400
        %v1403 = vshrl.u32 %v1392, 16
        %v1405 = vrot.slane %v1403, 2
        %v1406 = vshll.u32 %v1392, 16
        %v1408 = vrot.slane %v1406, 3
        %v1409 = vor.u32 %v1405, %v1408
        %v1410 = vsel %vm695, %v1401, %v1409
        %v1412 = vshrl.u32 %v1381, 16
        %v1414 = vrot.slane %v1412, 2
        %v1415 = vshll.u32 %v1381, 16
        %v1417 = vrot.slane %v1415, 3
        %v1418 = vor.u32 %v1414, %v1417
        %v1420 = vshrl.u32 %v1393, 16
        %v1422 = vrot.slane %v1420, 2
        %v1423 = vshll.u32 %v1393, 16
        %v1425 = vrot.slane %v1423, 3
        %v1426 = vor.u32 %v1422, %v1425
        %v1427 = vsel %vm695, %v1418, %v1426
        %v1428 = vld [vmem:[#allocation3 + $0x10] sm:$0xf8]
        %v1429 = vld [vmem:[#allocation3 + $0x30] sm:$0xf8]
        %v1434 = vrot.slane %v1428, 3
        %v1435 = vrot.slane %v1392, 3
        %v1436 = vsel %vm736, %v1434, %v1435
        %v1437 = vrot.slane %v1429, 3
        %v1438 = vrot.slane %v1393, 3
        %v1439 = vsel %vm736, %v1437, %v1438
        %v1440 = vld [vmem:[#allocation3 + $0x18] sm:$0xf]
        %v1441 = vld [vmem:[#allocation3 + $0x38] sm:$0xf]
        %v1443 = vshrl.u32 %v1428, 16
        %v1445 = vrot.slane %v1443, 3
        %v1446 = vshll.u32 %v1428, 16
        %v1448 = vrot.slane %v1446, 4
        %v1449 = vor.u32 %v1445, %v1448
        %v1451 = vshrl.u32 %v1440, 16
        %v1453 = vrot.slane %v1451, 3
        %v1454 = vshll.u32 %v1440, 16
        %v1456 = vrot.slane %v1454, 4
        %v1457 = vor.u32 %v1453, %v1456
        %v1458 = vsel %vm745, %v1449, %v1457
        %v1460 = vshrl.u32 %v1429, 16
        %v1462 = vrot.slane %v1460, 3
        %v1463 = vshll.u32 %v1429, 16
        %v1465 = vrot.slane %v1463, 4
        %v1466 = vor.u32 %v1462, %v1465
        %v1468 = vshrl.u32 %v1441, 16
        %v1470 = vrot.slane %v1468, 3
        %v1471 = vshll.u32 %v1441, 16
        %v1473 = vrot.slane %v1471, 4
        %v1474 = vor.u32 %v1470, %v1473
        %v1475 = vsel %vm745, %v1466, %v1474
        %v1476 = vld [vmem:[#allocation3 + $0x10] sm:$0xf0]
        %v1477 = vld [vmem:[#allocation3 + $0x30] sm:$0xf0]
        %v1482 = vrot.slane %v1476, 4
        %v1483 = vrot.slane %v1440, 4
        %v1484 = vsel %vm786, %v1482, %v1483
        %v1485 = vrot.slane %v1477, 4
        %v1486 = vrot.slane %v1441, 4
        %v1487 = vsel %vm786, %v1485, %v1486
        %v1488 = vld [vmem:[#allocation3 + $0x18] sm:$0x1f]
        %v1489 = vld [vmem:[#allocation3 + $0x38] sm:$0x1f]
        %v1491 = vshrl.u32 %v1476, 16
        %v1493 = vrot.slane %v1491, 4
        %v1494 = vshll.u32 %v1476, 16
        %v1496 = vrot.slane %v1494, 5
        %v1497 = vor.u32 %v1493, %v1496
        %v1499 = vshrl.u32 %v1488, 16
        %v1501 = vrot.slane %v1499, 4
        %v1502 = vshll.u32 %v1488, 16
        %v1504 = vrot.slane %v1502, 5
        %v1505 = vor.u32 %v1501, %v1504
        %v1506 = vsel %vm795, %v1497, %v1505
        %v1508 = vshrl.u32 %v1477, 16
        %v1510 = vrot.slane %v1508, 4
        %v1511 = vshll.u32 %v1477, 16
        %v1513 = vrot.slane %v1511, 5
        %v1514 = vor.u32 %v1510, %v1513
        %v1516 = vshrl.u32 %v1489, 16
        %v1518 = vrot.slane %v1516, 4
        %v1519 = vshll.u32 %v1489, 16
        %v1521 = vrot.slane %v1519, 5
        %v1522 = vor.u32 %v1518, %v1521
        %v1523 = vsel %vm795, %v1514, %v1522
        %v1524 = vld [vmem:[#allocation3 + $0x10] sm:$0xe0]
        %v1525 = vld [vmem:[#allocation3 + $0x30] sm:$0xe0]
        %v1530 = vrot.slane %v1524, 5
        %v1531 = vrot.slane %v1488, 5
        %v1532 = vsel %vm836, %v1530, %v1531
        %v1533 = vrot.slane %v1525, 5
        %v1534 = vrot.slane %v1489, 5
        %v1535 = vsel %vm836, %v1533, %v1534
        %v1536 = vld [vmem:[#allocation3 + $0x18] sm:$0x3f]
        %v1537 = vld [vmem:[#allocation3 + $0x38] sm:$0x3f]
        %v1539 = vshrl.u32 %v1524, 16
        %v1541 = vrot.slane %v1539, 5
        %v1542 = vshll.u32 %v1524, 16
        %v1544 = vrot.slane %v1542, 6
        %v1545 = vor.u32 %v1541, %v1544
        %v1547 = vshrl.u32 %v1536, 16
        %v1549 = vrot.slane %v1547, 5
        %v1550 = vshll.u32 %v1536, 16
        %v1552 = vrot.slane %v1550, 6
        %v1553 = vor.u32 %v1549, %v1552
        %v1554 = vsel %vm845, %v1545, %v1553
        %v1556 = vshrl.u32 %v1525, 16
        %v1558 = vrot.slane %v1556, 5
        %v1559 = vshll.u32 %v1525, 16
        %v1561 = vrot.slane %v1559, 6
        %v1562 = vor.u32 %v1558, %v1561
        %v1564 = vshrl.u32 %v1537, 16
        %v1566 = vrot.slane %v1564, 5
        %v1567 = vshll.u32 %v1537, 16
        %v1569 = vrot.slane %v1567, 6
        %v1570 = vor.u32 %v1566, %v1569
        %v1571 = vsel %vm845, %v1562, %v1570
        %v1572 = vld [vmem:[#allocation3 + $0x10] sm:$0xc0]
        %v1573 = vld [vmem:[#allocation3 + $0x30] sm:$0xc0]
        %v1578 = vrot.slane %v1572, 6
        %v1579 = vrot.slane %v1536, 6
        %v1580 = vsel %vm886, %v1578, %v1579
        %v1581 = vrot.slane %v1573, 6
        %v1582 = vrot.slane %v1537, 6
        %v1583 = vsel %vm886, %v1581, %v1582
        %v1585 = vshrl.u32 %v557, 16
        %v1587 = vrot.slane %v1585, 7
        %v1588 = vshll.u32 %v557, 16
        %v1590 = vor.u32 %v1587, %v1588
        %v1592 = vshrl.u32 %v558, 16
        %v1594 = vrot.slane %v1592, 7
        %v1595 = vshll.u32 %v558, 16
        %v1597 = vor.u32 %v1594, %v1595
        %vm1600 = vmand %vm936, %vm945
        %v1601 = vsel %vm1600, %v557, %v1590
        %v1602 = vsel %vm1600, %v558, %v1597
        %v1603 = vrot.slane %v1588, 1
        %v1604 = vor.u32 %v1585, %v1603
        %v1605 = vrot.slane %v1595, 1
        %v1606 = vor.u32 %v1592, %v1605
        %vm1609 = vcmask 1047552
        %vm1610 = vmand %vm1609, %vm972
        %v1611 = vsel %vm1610, %v1604, %v557
        %v1612 = vsel %vm1610, %v1606, %v558
        %v1613 = vmax.bf16 %v1601, %v557
        %v1614 = vmax.bf16 %v1602, %v558
        %v1615 = vmax.bf16 %v1613, %v1611
        %v1616 = vmax.bf16 %v1614, %v1612
        %1617 = vrot.lane.b32.xlu0 %v739, 32
        %v1618 = vpop.permute.xlu0 %1617
        %1619 = vrot.lane.b32.xlu0 %v742, 32
        %v1620 = vpop.permute.xlu0 %1619
        %1621 = vrot.lane.b32.xlu0 %v762, 64
        %v1622 = vpop.permute.xlu0 %1621
        %1623 = vrot.lane.b32.xlu0 %v779, 64
        %v1624 = vpop.permute.xlu0 %1623
        %1625 = vrot.lane.b32.xlu0 %v789, 96
        %v1626 = vpop.permute.xlu0 %1625
        %1627 = vrot.lane.b32.xlu0 %v792, 96
        %v1628 = vpop.permute.xlu0 %1627
        %1629 = vrot.lane.b32.xlu0 %v839, 32
        %v1630 = vpop.permute.xlu0 %1629
        %1631 = vrot.lane.b32.xlu0 %v842, 32
        %v1632 = vpop.permute.xlu0 %1631
        %1633 = vrot.lane.b32.xlu0 %v862, 64
        %v1634 = vpop.permute.xlu0 %1633
        %1635 = vrot.lane.b32.xlu0 %v879, 64
        %v1636 = vpop.permute.xlu0 %1635
        %1637 = vrot.lane.b32.xlu0 %v889, 96
        %v1638 = vpop.permute.xlu0 %1637
        %1639 = vrot.lane.b32.xlu0 %v892, 96
        %v1640 = vpop.permute.xlu0 %1639
        %1641 = vrot.lane.b32.xlu0 %v939, 32
        %v1642 = vpop.permute.xlu0 %1641
        %1643 = vrot.lane.b32.xlu0 %v942, 32
        %v1644 = vpop.permute.xlu0 %1643
        %1645 = vrot.lane.b32.xlu0 %v957, 64
        %v1646 = vpop.permute.xlu0 %1645
        %1647 = vrot.lane.b32.xlu0 %v969, 64
        %v1648 = vpop.permute.xlu0 %1647
        %1651 = vrot.lane.b32.xlu0 %v943, 96
        %v1652 = vpop.permute.xlu0 %1651
        %1653 = vrot.lane.b32.xlu0 %v944, 96
        %v1654 = vpop.permute.xlu0 %1653
        %1655 = vrot.lane.b32.xlu0 %v996, 32
        %v1656 = vpop.permute.xlu0 %1655
        %1657 = vrot.lane.b32.xlu0 %v999, 32
        %v1658 = vpop.permute.xlu0 %1657
        %1659 = vrot.lane.b32.xlu0 %v1019, 64
        %v1660 = vpop.permute.xlu0 %1659
        %1661 = vrot.lane.b32.xlu0 %v1036, 64
        %v1662 = vpop.permute.xlu0 %1661
        %1663 = vrot.lane.b32.xlu0 %v1046, 96
        %v1664 = vpop.permute.xlu0 %1663
        %1665 = vrot.lane.b32.xlu0 %v1049, 96
        %v1666 = vpop.permute.xlu0 %1665
        %vm1667 = vcmask 261120
        %v1670 = vsel %vm1667, %v712, %v1618
        %v1673 = vsel %vm1667, %v729, %v1620
        %vm1674 = vcmask 523264
        %v1676 = vsel %vm1674, %v1670, %v1622
        %v1678 = vsel %vm1674, %v1673, %v1624
        %vm1679 = vcmask 785408
        %v1681 = vsel %vm1679, %v1676, %v1626
        %v1684 = vsel %vm1679, %v1678, %v1628
        %v1688 = vsel %vm1667, %v812, %v1630
        %v1691 = vsel %vm1667, %v829, %v1632
        %v1693 = vsel %vm1674, %v1688, %v1634
        %v1695 = vsel %vm1674, %v1691, %v1636
        %v1697 = vsel %vm1679, %v1693, %v1638
        %v1700 = vsel %vm1679, %v1695, %v1640
        %v1704 = vsel %vm1667, %v912, %v1642
        %v1707 = vsel %vm1667, %v929, %v1644
        %v1709 = vsel %vm1674, %v1704, %v1646
        %v1711 = vsel %vm1674, %v1707, %v1648
        %v1713 = vsel %vm1679, %v1709, %v1652
        %v1716 = vsel %vm1679, %v1711, %v1654
        %v1720 = vsel %vm1667, %v979, %v1656
        %v1723 = vsel %vm1667, %v986, %v1658
        %v1725 = vsel %vm1674, %v1720, %v1660
        %v1727 = vsel %vm1674, %v1723, %v1662
        %v1729 = vsel %vm1679, %v1725, %v1664
        %v1732 = vsel %vm1679, %v1727, %v1666
        %1734 = vrot.lane.b32.xlu0 %v1094, 32
        %v1735 = vpop.permute.xlu0 %1734
        %1736 = vrot.lane.b32.xlu0 %v1097, 32
        %v1737 = vpop.permute.xlu0 %1736
        %1738 = vrot.lane.b32.xlu0 %v1116, 64
        %v1739 = vpop.permute.xlu0 %1738
        %1740 = vrot.lane.b32.xlu0 %v1133, 64
        %v1741 = vpop.permute.xlu0 %1740
        %1742 = vrot.lane.b32.xlu0 %v1142, 96
        %v1743 = vpop.permute.xlu0 %1742
        %1744 = vrot.lane.b32.xlu0 %v1145, 96
        %v1745 = vpop.permute.xlu0 %1744
        %1746 = vrot.lane.b32.xlu0 %v1190, 32
        %v1747 = vpop.permute.xlu0 %1746
        %1748 = vrot.lane.b32.xlu0 %v1193, 32
        %v1749 = vpop.permute.xlu0 %1748
        %1750 = vrot.lane.b32.xlu0 %v1212, 64
        %v1751 = vpop.permute.xlu0 %1750
        %1752 = vrot.lane.b32.xlu0 %v1229, 64
        %v1753 = vpop.permute.xlu0 %1752
        %1754 = vrot.lane.b32.xlu0 %v1238, 96
        %v1755 = vpop.permute.xlu0 %1754
        %1756 = vrot.lane.b32.xlu0 %v1241, 96
        %v1757 = vpop.permute.xlu0 %1756
        %1758 = vrot.lane.b32.xlu0 %v1286, 32
        %v1759 = vpop.permute.xlu0 %1758
        %1760 = vrot.lane.b32.xlu0 %v1289, 32
        %v1761 = vpop.permute.xlu0 %1760
        %1762 = vrot.lane.b32.xlu0 %v1303, 64
        %v1763 = vpop.permute.xlu0 %1762
        %1764 = vrot.lane.b32.xlu0 %v1315, 64
        %v1765 = vpop.permute.xlu0 %1764
        %1768 = vrot.lane.b32.xlu0 %v1290, 96
        %v1769 = vpop.permute.xlu0 %1768
        %1770 = vrot.lane.b32.xlu0 %v1291, 96
        %v1771 = vpop.permute.xlu0 %1770
        %1772 = vrot.lane.b32.xlu0 %v1340, 32
        %v1773 = vpop.permute.xlu0 %1772
        %1774 = vrot.lane.b32.xlu0 %v1343, 32
        %v1775 = vpop.permute.xlu0 %1774
        %1776 = vrot.lane.b32.xlu0 %v1362, 64
        %v1777 = vpop.permute.xlu0 %1776
        %1778 = vrot.lane.b32.xlu0 %v1379, 64
        %v1779 = vpop.permute.xlu0 %1778
        %1780 = vrot.lane.b32.xlu0 %v1388, 96
        %v1781 = vpop.permute.xlu0 %1780
        %1782 = vrot.lane.b32.xlu0 %v1391, 96
        %v1783 = vpop.permute.xlu0 %1782
        %v1786 = vsel %vm1667, %v1068, %v1735
        %v1789 = vsel %vm1667, %v1085, %v1737
        %v1791 = vsel %vm1674, %v1786, %v1739
        %v1793 = vsel %vm1674, %v1789, %v1741
        %v1795 = vsel %vm1679, %v1791, %v1743
        %v1798 = vsel %vm1679, %v1793, %v1745
        %v1802 = vsel %vm1667, %v1164, %v1747
        %v1805 = vsel %vm1667, %v1181, %v1749
        %v1807 = vsel %vm1674, %v1802, %v1751
        %v1809 = vsel %vm1674, %v1805, %v1753
        %v1811 = vsel %vm1679, %v1807, %v1755
        %v1814 = vsel %vm1679, %v1809, %v1757
        %v1818 = vsel %vm1667, %v1260, %v1759
        %v1821 = vsel %vm1667, %v1277, %v1761
        %v1823 = vsel %vm1674, %v1818, %v1763
        %v1825 = vsel %vm1674, %v1821, %v1765
        %v1827 = vsel %vm1679, %v1823, %v1769
        %v1830 = vsel %vm1679, %v1825, %v1771
        %v1834 = vsel %vm1667, %v1324, %v1773
        %v1837 = vsel %vm1667, %v1331, %v1775
        %v1839 = vsel %vm1674, %v1834, %v1777
        %v1841 = vsel %vm1674, %v1837, %v1779
        %v1843 = vsel %vm1679, %v1839, %v1781
        %v1846 = vsel %vm1679, %v1841, %v1783
        %1848 = vrot.lane.b32.xlu0 %v1436, 32
        %v1849 = vpop.permute.xlu0 %1848
        %1850 = vrot.lane.b32.xlu0 %v1439, 32
        %v1851 = vpop.permute.xlu0 %1850
        %1852 = vrot.lane.b32.xlu0 %v1458, 64
        %v1853 = vpop.permute.xlu0 %1852
        %1854 = vrot.lane.b32.xlu0 %v1475, 64
        %v1855 = vpop.permute.xlu0 %1854
        %1856 = vrot.lane.b32.xlu0 %v1484, 96
        %v1857 = vpop.permute.xlu0 %1856
        %1858 = vrot.lane.b32.xlu0 %v1487, 96
        %v1859 = vpop.permute.xlu0 %1858
        %1860 = vrot.lane.b32.xlu0 %v1532, 32
        %v1861 = vpop.permute.xlu0 %1860
        %1862 = vrot.lane.b32.xlu0 %v1535, 32
        %v1863 = vpop.permute.xlu0 %1862
        %1864 = vrot.lane.b32.xlu0 %v1554, 64
        %v1865 = vpop.permute.xlu0 %1864
        %1866 = vrot.lane.b32.xlu0 %v1571, 64
        %v1867 = vpop.permute.xlu0 %1866
        %1868 = vrot.lane.b32.xlu0 %v1580, 96
        %v1869 = vpop.permute.xlu0 %1868
        %1870 = vrot.lane.b32.xlu0 %v1583, 96
        %v1871 = vpop.permute.xlu0 %1870
        %v1874 = vsel %vm1667, %v1410, %v1849
        %v1877 = vsel %vm1667, %v1427, %v1851
        %v1879 = vsel %vm1674, %v1874, %v1853
        %v1881 = vsel %vm1674, %v1877, %v1855
        %v1883 = vsel %vm1679, %v1879, %v1857
        %v1886 = vsel %vm1679, %v1881, %v1859
        %v1890 = vsel %vm1667, %v1506, %v1861
        %v1893 = vsel %vm1667, %v1523, %v1863
        %v1895 = vsel %vm1674, %v1890, %v1865
        %v1897 = vsel %vm1674, %v1893, %v1867
        %v1899 = vsel %vm1679, %v1895, %v1869
        %v1902 = vsel %vm1679, %v1897, %v1871
        %v1904 = vld [vmem:[%s428] sm:$0xf]
        %v1905 = vld [vmem:[%s428 + $0x4] sm:$0xf]
        %v1906 = vld [vmem:[%s428 + $0x8] sm:$0xf]
        %v1907 = vld [vmem:[%s428 + $0xc] sm:$0xf]
        %v1908 = vld [vmem:[%s428 + $0x10] sm:$0xf]
        %v1909 = vld [vmem:[%s428 + $0x14] sm:$0xf]
        %v1910 = vld [vmem:[%s428 + $0x18] sm:$0xf]
        %v1911 = vld [vmem:[%s428 + $0x1c] sm:$0xf]
        %v1912 = vld [vmem:[%s428 + $0x20] sm:$0xf]
        %v1913 = vld [vmem:[%s428 + $0x24] sm:$0xf]
        %v1914 = vld [vmem:[%s428 + $0x28] sm:$0xf]
        %v1915 = vld [vmem:[%s428 + $0x2c] sm:$0xf]
        %v1916 = vld [vmem:[%s428 + $0x30] sm:$0xf]
        %v1917 = vld [vmem:[%s428 + $0x34] sm:$0xf]
        %v1918 = vld [vmem:[%s428 + $0x38] sm:$0xf]
        %v1919 = vld [vmem:[%s428 + $0x3c] sm:$0xf]
        %v1920 = vld [vmem:[%s428 + $0x40] sm:$0xf]
        %v1921 = vld [vmem:[%s428 + $0x44] sm:$0xf]
        %v1922 = vld [vmem:[%s428 + $0x48] sm:$0xf]
        %v1923 = vld [vmem:[%s428 + $0x4c] sm:$0xf]
        %v1924 = vld [vmem:[%s428 + $0x50] sm:$0xf]
        %v1925 = vld [vmem:[%s428 + $0x54] sm:$0xf]
        %v1926 = vld [vmem:[%s428 + $0x58] sm:$0xf]
        %v1927 = vld [vmem:[%s428 + $0x5c] sm:$0xf]
        %v1928 = vld [vmem:[%s428 + $0x60] sm:$0xf]
        %v1929 = vld [vmem:[%s428 + $0x64] sm:$0xf]
        %v1930 = vld [vmem:[%s428 + $0x68] sm:$0xf]
        %v1931 = vld [vmem:[%s428 + $0x6c] sm:$0xf]
        %v1932 = vld [vmem:[%s428 + $0x70] sm:$0xf]
        %v1933 = vld [vmem:[%s428 + $0x74] sm:$0xf]
        %v1934 = vld [vmem:[%s428 + $0x78] sm:$0xf]
        %v1935 = vld [vmem:[%s428 + $0x7c] sm:$0xf]
        %v1936 = vld [vmem:[%s428 + $0x80] sm:$0xf]
        %v1937 = vld [vmem:[%s428 + $0x84] sm:$0xf]
        %v1938 = vld [vmem:[%s428 + $0x88] sm:$0xf]
        %v1939 = vld [vmem:[%s428 + $0x8c] sm:$0xf]
        %v1940 = vld [vmem:[%s428 + $0x90] sm:$0xf]
        %v1941 = vld [vmem:[%s428 + $0x94] sm:$0xf]
        %v1942 = vld [vmem:[%s428 + $0x98] sm:$0xf]
        %v1943 = vld [vmem:[%s428 + $0x9c] sm:$0xf]
        %v1944 = vld [vmem:[%s428 + $0xa0] sm:$0xf]
        %v1945 = vld [vmem:[%s428 + $0xa4] sm:$0xf]
        %v1946 = vld [vmem:[%s428 + $0xa8] sm:$0xf]
        %v1947 = vld [vmem:[%s428 + $0xac] sm:$0xf]
        %v1948 = vld [vmem:[%s428 + $0xb0] sm:$0xf]
        %v1949 = vld [vmem:[%s428 + $0xb4] sm:$0xf]
        %v1950 = vld [vmem:[%s428 + $0xb8] sm:$0xf]
        %v1951 = vld [vmem:[%s428 + $0xbc] sm:$0xf]
        %v1952 = vld [vmem:[%s428 + $0xc0] sm:$0xf]
        %v1953 = vld [vmem:[%s428 + $0xc4] sm:$0xf]
        %v1954 = vld [vmem:[%s428 + $0xc8] sm:$0xf]
        %v1955 = vld [vmem:[%s428 + $0xcc] sm:$0xf]
        %v1956 = vld [vmem:[%s428 + $0xd0] sm:$0xf]
        %v1957 = vld [vmem:[%s428 + $0xd4] sm:$0xf]
        %v1958 = vld [vmem:[%s428 + $0xd8] sm:$0xf]
        %v1959 = vld [vmem:[%s428 + $0xdc] sm:$0xf]
        %v1960 = vld [vmem:[%s428 + $0xe0] sm:$0xf]
        %v1961 = vld [vmem:[%s428 + $0xe4] sm:$0xf]
        %v1962 = vld [vmem:[%s428 + $0xe8] sm:$0xf]
        %v1963 = vld [vmem:[%s428 + $0xec] sm:$0xf]
        %v1964 = vld [vmem:[%s428 + $0xf0] sm:$0xf]
        %v1965 = vld [vmem:[%s428 + $0xf4] sm:$0xf]
        %v1966 = vld [vmem:[%s428 + $0xf8] sm:$0xf]
        %v1967 = vld [vmem:[%s428 + $0xfc] sm:$0xf]
        %v1968 = vld [vmem:[%s428 + $0x100] sm:$0xf]
        %v1969 = vld [vmem:[%s428 + $0x104] sm:$0xf]
        %v1970 = vld [vmem:[%s428 + $0x108] sm:$0xf]
        %v1971 = vld [vmem:[%s428 + $0x10c] sm:$0xf]
        %v1972 = vld [vmem:[%s428 + $0x110] sm:$0xf]
        %v1973 = vld [vmem:[%s428 + $0x114] sm:$0xf]
        %v1974 = vld [vmem:[%s428 + $0x118] sm:$0xf]
        %v1975 = vld [vmem:[%s428 + $0x11c] sm:$0xf]
        %v1976 = vld [vmem:[%s428 + $0x120] sm:$0xf]
        %v1977 = vld [vmem:[%s428 + $0x124] sm:$0xf]
        %v1978 = vld [vmem:[%s428 + $0x128] sm:$0xf]
        %v1979 = vld [vmem:[%s428 + $0x12c] sm:$0xf]
        %v1980 = vld [vmem:[%s428 + $0x130] sm:$0xf]
        %v1981 = vld [vmem:[%s428 + $0x134] sm:$0xf]
        %v1982 = vld [vmem:[%s428 + $0x138] sm:$0xf]
        %v1983 = vld [vmem:[%s428 + $0x13c] sm:$0xf]
        %v1984 = vld [vmem:[%s428 + $0x140] sm:$0xf]
        %v1985 = vld [vmem:[%s428 + $0x144] sm:$0xf]
        %v1986 = vld [vmem:[%s428 + $0x148] sm:$0xf]
        %v1987 = vld [vmem:[%s428 + $0x14c] sm:$0xf]
        %v1988 = vld [vmem:[%s428 + $0x150] sm:$0xf]
        %v1989 = vld [vmem:[%s428 + $0x154] sm:$0xf]
        %v1990 = vld [vmem:[%s428 + $0x158] sm:$0xf]
        %v1991 = vld [vmem:[%s428 + $0x15c] sm:$0xf]
        %v1992 = vld [vmem:[%s428 + $0x160] sm:$0xf]
        %v1993 = vld [vmem:[%s428 + $0x164] sm:$0xf]
        %v1994 = vld [vmem:[%s428 + $0x168] sm:$0xf]
        %v1995 = vld [vmem:[%s428 + $0x16c] sm:$0xf]
        %v1996 = vld [vmem:[%s428 + $0x170] sm:$0xf]
        %v1997 = vld [vmem:[%s428 + $0x174] sm:$0xf]
        %v1998 = vld [vmem:[%s428 + $0x178] sm:$0xf]
        %v1999 = vld [vmem:[%s428 + $0x17c] sm:$0xf]
        %v2000 = vld [vmem:[%s428 + $0x180] sm:$0xf]
        %v2001 = vld [vmem:[%s428 + $0x184] sm:$0xf]
        %v2002 = vld [vmem:[%s428 + $0x188] sm:$0xf]
        %v2003 = vld [vmem:[%s428 + $0x18c] sm:$0xf]
        %v2004 = vld [vmem:[%s428 + $0x190] sm:$0xf]
        %v2005 = vld [vmem:[%s428 + $0x194] sm:$0xf]
        %v2006 = vld [vmem:[%s428 + $0x198] sm:$0xf]
        %v2007 = vld [vmem:[%s428 + $0x19c] sm:$0xf]
        %v2008 = vld [vmem:[%s428 + $0x1a0] sm:$0xf]
        %v2009 = vld [vmem:[%s428 + $0x1a4] sm:$0xf]
        %v2010 = vld [vmem:[%s428 + $0x1a8] sm:$0xf]
        %v2011 = vld [vmem:[%s428 + $0x1ac] sm:$0xf]
        %v2012 = vld [vmem:[%s428 + $0x1b0] sm:$0xf]
        %v2013 = vld [vmem:[%s428 + $0x1b4] sm:$0xf]
        %v2014 = vld [vmem:[%s428 + $0x1b8] sm:$0xf]
        %v2015 = vld [vmem:[%s428 + $0x1bc] sm:$0xf]
        %v2016 = vld [vmem:[%s428 + $0x1c0] sm:$0xf]
        %v2017 = vld [vmem:[%s428 + $0x1c4] sm:$0xf]
        %v2018 = vld [vmem:[%s428 + $0x1c8] sm:$0xf]
        %v2019 = vld [vmem:[%s428 + $0x1cc] sm:$0xf]
        %v2020 = vld [vmem:[%s428 + $0x1d0] sm:$0xf]
        %v2021 = vld [vmem:[%s428 + $0x1d4] sm:$0xf]
        %v2022 = vld [vmem:[%s428 + $0x1d8] sm:$0xf]
        %v2023 = vld [vmem:[%s428 + $0x1dc] sm:$0xf]
        %v2024 = vld [vmem:[%s428 + $0x1e0] sm:$0xf]
        %v2025 = vld [vmem:[%s428 + $0x1e4] sm:$0xf]
        %v2026 = vld [vmem:[%s428 + $0x1e8] sm:$0xf]
        %v2027 = vld [vmem:[%s428 + $0x1ec] sm:$0xf]
        %v2028 = vld [vmem:[%s428 + $0x1f0] sm:$0xf]
        %v2029 = vld [vmem:[%s428 + $0x1f4] sm:$0xf]
        %v2030 = vld [vmem:[%s428 + $0x1f8] sm:$0xf]
        %v2031 = vld [vmem:[%s428 + $0x1fc] sm:$0xf]
        %v2032 = vld [vmem:[%s428 + $0x200] sm:$0xf]
        %v2033 = vld [vmem:[%s428 + $0x204] sm:$0xf]
        %v2034 = vld [vmem:[%s428 + $0x208] sm:$0xf]
        %v2035 = vld [vmem:[%s428 + $0x20c] sm:$0xf]
        %v2036 = vld [vmem:[%s428 + $0x210] sm:$0xf]
        %v2037 = vld [vmem:[%s428 + $0x214] sm:$0xf]
        %v2038 = vld [vmem:[%s428 + $0x218] sm:$0xf]
        %v2039 = vld [vmem:[%s428 + $0x21c] sm:$0xf]
        %v2040 = vld [vmem:[%s428 + $0x220] sm:$0xf]
        %v2041 = vld [vmem:[%s428 + $0x224] sm:$0xf]
        %v2042 = vld [vmem:[%s428 + $0x228] sm:$0xf]
        %v2043 = vld [vmem:[%s428 + $0x22c] sm:$0xf]
        %v2044 = vld [vmem:[%s428 + $0x230] sm:$0xf]
        %v2045 = vld [vmem:[%s428 + $0x234] sm:$0xf]
        %v2046 = vld [vmem:[%s428 + $0x238] sm:$0xf]
        %v2047 = vld [vmem:[%s428 + $0x23c] sm:$0xf]
        %v2048 = vld [vmem:[%s428 + $0x240] sm:$0xf]
        %v2049 = vld [vmem:[%s428 + $0x244] sm:$0xf]
        %v2050 = vld [vmem:[%s428 + $0x248] sm:$0xf]
        %v2051 = vld [vmem:[%s428 + $0x24c] sm:$0xf]
        %v2052 = vld [vmem:[%s428 + $0x250] sm:$0xf]
        %v2053 = vld [vmem:[%s428 + $0x254] sm:$0xf]
        %v2054 = vld [vmem:[%s428 + $0x258] sm:$0xf]
        %v2055 = vld [vmem:[%s428 + $0x25c] sm:$0xf]
        %v2056 = vld [vmem:[%s428 + $0x260] sm:$0xf]
        %v2057 = vld [vmem:[%s428 + $0x264] sm:$0xf]
        %v2058 = vld [vmem:[%s428 + $0x268] sm:$0xf]
        %v2059 = vld [vmem:[%s428 + $0x26c] sm:$0xf]
        %v2060 = vld [vmem:[%s428 + $0x270] sm:$0xf]
        %v2061 = vld [vmem:[%s428 + $0x274] sm:$0xf]
        %v2062 = vld [vmem:[%s428 + $0x278] sm:$0xf]
        %v2063 = vld [vmem:[%s428 + $0x27c] sm:$0xf]
        %v2064 = vld [vmem:[%s428 + $0x280] sm:$0xf]
        %v2065 = vld [vmem:[%s428 + $0x284] sm:$0xf]
        %v2066 = vld [vmem:[%s428 + $0x288] sm:$0xf]
        %v2067 = vld [vmem:[%s428 + $0x28c] sm:$0xf]
        %v2068 = vld [vmem:[%s428 + $0x290] sm:$0xf]
        %v2069 = vld [vmem:[%s428 + $0x294] sm:$0xf]
        %v2070 = vld [vmem:[%s428 + $0x298] sm:$0xf]
        %v2071 = vld [vmem:[%s428 + $0x29c] sm:$0xf]
        %v2072 = vld [vmem:[%s428 + $0x2a0] sm:$0xf]
        %v2073 = vld [vmem:[%s428 + $0x2a4] sm:$0xf]
        %v2074 = vld [vmem:[%s428 + $0x2a8] sm:$0xf]
        %v2075 = vld [vmem:[%s428 + $0x2ac] sm:$0xf]
        %v2076 = vld [vmem:[%s428 + $0x2b0] sm:$0xf]
        %v2077 = vld [vmem:[%s428 + $0x2b4] sm:$0xf]
        %v2078 = vld [vmem:[%s428 + $0x2b8] sm:$0xf]
        %v2079 = vld [vmem:[%s428 + $0x2bc] sm:$0xf]
        %v2256 = vunpack.c.l.b16 %v1904
        %v2257 = vunpack.c.l.b16 %v1905
        %v2258 = vunpack.c.l.b16 %v1906
        %v2259 = vunpack.c.l.b16 %v1907
        %v2260 = vunpack.c.l.b16 %v1908
        %v2261 = vunpack.c.l.b16 %v1909
        %v2262 = vunpack.c.l.b16 %v1910
        %v2263 = vunpack.c.l.b16 %v1911
        %v2264 = vunpack.c.l.b16 %v1912
        %v2265 = vunpack.c.l.b16 %v1913
        %v2266 = vunpack.c.l.b16 %v1914
        %v2267 = vunpack.c.l.b16 %v1915
        %v2268 = vunpack.c.l.b16 %v1916
        %v2269 = vunpack.c.l.b16 %v1917
        %v2270 = vunpack.c.l.b16 %v1918
        %v2271 = vunpack.c.l.b16 %v1919
        %v2272 = vunpack.c.l.b16 %v1920
        %v2273 = vunpack.c.l.b16 %v1921
        %v2274 = vunpack.c.l.b16 %v1922
        %v2275 = vunpack.c.l.b16 %v1923
        %v2276 = vunpack.c.l.b16 %v1924
        %v2277 = vunpack.c.l.b16 %v1925
        %v2278 = vunpack.c.l.b16 %v1926
        %v2279 = vunpack.c.l.b16 %v1927
        %v2280 = vunpack.c.l.b16 %v1928
        %v2281 = vunpack.c.l.b16 %v1929
        %v2282 = vunpack.c.l.b16 %v1930
        %v2283 = vunpack.c.l.b16 %v1931
        %v2284 = vunpack.c.l.b16 %v1932
        %v2285 = vunpack.c.l.b16 %v1933
        %v2286 = vunpack.c.l.b16 %v1934
        %v2287 = vunpack.c.l.b16 %v1935
        %v2288 = vunpack.c.l.b16 %v1936
        %v2289 = vunpack.c.l.b16 %v1937
        %v2290 = vunpack.c.l.b16 %v1938
        %v2291 = vunpack.c.l.b16 %v1939
        %v2292 = vunpack.c.l.b16 %v1940
        %v2293 = vunpack.c.l.b16 %v1941
        %v2294 = vunpack.c.l.b16 %v1942
        %v2295 = vunpack.c.l.b16 %v1943
        %v2296 = vunpack.c.l.b16 %v1944
        %v2297 = vunpack.c.l.b16 %v1945
        %v2298 = vunpack.c.l.b16 %v1946
        %v2299 = vunpack.c.l.b16 %v1947
        %v2300 = vunpack.c.l.b16 %v1948
        %v2301 = vunpack.c.l.b16 %v1949
        %v2302 = vunpack.c.l.b16 %v1950
        %v2303 = vunpack.c.l.b16 %v1951
        %v2304 = vunpack.c.l.b16 %v1952
        %v2305 = vunpack.c.l.b16 %v1953
        %v2306 = vunpack.c.l.b16 %v1954
        %v2307 = vunpack.c.l.b16 %v1955
        %v2308 = vunpack.c.l.b16 %v1956
        %v2309 = vunpack.c.l.b16 %v1957
        %v2310 = vunpack.c.l.b16 %v1958
        %v2311 = vunpack.c.l.b16 %v1959
        %v2312 = vunpack.c.l.b16 %v1960
        %v2313 = vunpack.c.l.b16 %v1961
        %v2314 = vunpack.c.l.b16 %v1962
        %v2315 = vunpack.c.l.b16 %v1963
        %v2316 = vunpack.c.l.b16 %v1964
        %v2317 = vunpack.c.l.b16 %v1965
        %v2318 = vunpack.c.l.b16 %v1966
        %v2319 = vunpack.c.l.b16 %v1967
        %v2320 = vunpack.c.l.b16 %v1968
        %v2321 = vunpack.c.l.b16 %v1969
        %v2322 = vunpack.c.l.b16 %v1970
        %v2323 = vunpack.c.l.b16 %v1971
        %v2324 = vunpack.c.l.b16 %v1972
        %v2325 = vunpack.c.l.b16 %v1973
        %v2326 = vunpack.c.l.b16 %v1974
        %v2327 = vunpack.c.l.b16 %v1975
        %v2328 = vunpack.c.l.b16 %v1976
        %v2329 = vunpack.c.l.b16 %v1977
        %v2330 = vunpack.c.l.b16 %v1978
        %v2331 = vunpack.c.l.b16 %v1979
        %v2332 = vunpack.c.l.b16 %v1980
        %v2333 = vunpack.c.l.b16 %v1981
        %v2334 = vunpack.c.l.b16 %v1982
        %v2335 = vunpack.c.l.b16 %v1983
        %v2336 = vunpack.c.l.b16 %v1984
        %v2337 = vunpack.c.l.b16 %v1985
        %v2338 = vunpack.c.l.b16 %v1986
        %v2339 = vunpack.c.l.b16 %v1987
        %v2340 = vunpack.c.l.b16 %v1988
        %v2341 = vunpack.c.l.b16 %v1989
        %v2342 = vunpack.c.l.b16 %v1990
        %v2343 = vunpack.c.l.b16 %v1991
        %v2344 = vunpack.c.l.b16 %v1992
        %v2345 = vunpack.c.l.b16 %v1993
        %v2346 = vunpack.c.l.b16 %v1994
        %v2347 = vunpack.c.l.b16 %v1995
        %v2348 = vunpack.c.l.b16 %v1996
        %v2349 = vunpack.c.l.b16 %v1997
        %v2350 = vunpack.c.l.b16 %v1998
        %v2351 = vunpack.c.l.b16 %v1999
        %v2352 = vunpack.c.l.b16 %v2000
        %v2353 = vunpack.c.l.b16 %v2001
        %v2354 = vunpack.c.l.b16 %v2002
        %v2355 = vunpack.c.l.b16 %v2003
        %v2356 = vunpack.c.l.b16 %v2004
        %v2357 = vunpack.c.l.b16 %v2005
        %v2358 = vunpack.c.l.b16 %v2006
        %v2359 = vunpack.c.l.b16 %v2007
        %v2360 = vunpack.c.l.b16 %v2008
        %v2361 = vunpack.c.l.b16 %v2009
        %v2362 = vunpack.c.l.b16 %v2010
        %v2363 = vunpack.c.l.b16 %v2011
        %v2364 = vunpack.c.l.b16 %v2012
        %v2365 = vunpack.c.l.b16 %v2013
        %v2366 = vunpack.c.l.b16 %v2014
        %v2367 = vunpack.c.l.b16 %v2015
        %v2368 = vunpack.c.l.b16 %v2016
        %v2369 = vunpack.c.l.b16 %v2017
        %v2370 = vunpack.c.l.b16 %v2018
        %v2371 = vunpack.c.l.b16 %v2019
        %v2372 = vunpack.c.l.b16 %v2020
        %v2373 = vunpack.c.l.b16 %v2021
        %v2374 = vunpack.c.l.b16 %v2022
        %v2375 = vunpack.c.l.b16 %v2023
        %v2376 = vunpack.c.l.b16 %v2024
        %v2377 = vunpack.c.l.b16 %v2025
        %v2378 = vunpack.c.l.b16 %v2026
        %v2379 = vunpack.c.l.b16 %v2027
        %v2380 = vunpack.c.l.b16 %v2028
        %v2381 = vunpack.c.l.b16 %v2029
        %v2382 = vunpack.c.l.b16 %v2030
        %v2383 = vunpack.c.l.b16 %v2031
        %v2384 = vunpack.c.l.b16 %v2032
        %v2385 = vunpack.c.l.b16 %v2033
        %v2386 = vunpack.c.l.b16 %v2034
        %v2387 = vunpack.c.l.b16 %v2035
        %v2388 = vunpack.c.l.b16 %v2036
        %v2389 = vunpack.c.l.b16 %v2037
        %v2390 = vunpack.c.l.b16 %v2038
        %v2391 = vunpack.c.l.b16 %v2039
        %v2392 = vunpack.c.l.b16 %v2040
        %v2393 = vunpack.c.l.b16 %v2041
        %v2394 = vunpack.c.l.b16 %v2042
        %v2395 = vunpack.c.l.b16 %v2043
        %v2396 = vunpack.c.l.b16 %v2044
        %v2397 = vunpack.c.l.b16 %v2045
        %v2398 = vunpack.c.l.b16 %v2046
        %v2399 = vunpack.c.l.b16 %v2047
        %v2400 = vunpack.c.l.b16 %v2048
        %v2401 = vunpack.c.l.b16 %v2049
        %v2402 = vunpack.c.l.b16 %v2050
        %v2403 = vunpack.c.l.b16 %v2051
        %v2404 = vunpack.c.l.b16 %v2052
        %v2405 = vunpack.c.l.b16 %v2053
        %v2406 = vunpack.c.l.b16 %v2054
        %v2407 = vunpack.c.l.b16 %v2055
        %v2408 = vunpack.c.l.b16 %v2056
        %v2409 = vunpack.c.l.b16 %v2057
        %v2410 = vunpack.c.l.b16 %v2058
        %v2411 = vunpack.c.l.b16 %v2059
        %v2412 = vunpack.c.l.b16 %v2060
        %v2413 = vunpack.c.l.b16 %v2061
        %v2414 = vunpack.c.l.b16 %v2062
        %v2415 = vunpack.c.l.b16 %v2063
        %v2416 = vunpack.c.l.b16 %v2064
        %v2417 = vunpack.c.l.b16 %v2065
        %v2418 = vunpack.c.l.b16 %v2066
        %v2419 = vunpack.c.l.b16 %v2067
        %v2420 = vunpack.c.l.b16 %v2068
        %v2421 = vunpack.c.l.b16 %v2069
        %v2422 = vunpack.c.l.b16 %v2070
        %v2423 = vunpack.c.l.b16 %v2071
        %v2424 = vunpack.c.l.b16 %v2072
        %v2425 = vunpack.c.l.b16 %v2073
        %v2426 = vunpack.c.l.b16 %v2074
        %v2427 = vunpack.c.l.b16 %v2075
        %v2428 = vunpack.c.l.b16 %v2076
        %v2429 = vunpack.c.l.b16 %v2077
        %v2430 = vunpack.c.l.b16 %v2078
        %v2431 = vunpack.c.l.b16 %v2079
        %v2432 = vpack.c.b16 %v2257, %v2256
        %v2433 = vpack.c.b16 %v2259, %v2258
        %v2434 = vpack.c.b16 %v2261, %v2260
        %v2435 = vpack.c.b16 %v2263, %v2262
        %v2436 = vpack.c.b16 %v2265, %v2264
        %v2437 = vpack.c.b16 %v2267, %v2266
        %v2438 = vpack.c.b16 %v2269, %v2268
        %v2439 = vpack.c.b16 %v2271, %v2270
        %v2440 = vpack.c.b16 %v2273, %v2272
        %v2441 = vpack.c.b16 %v2275, %v2274
        %v2442 = vpack.c.b16 %v2277, %v2276
        %v2443 = vpack.c.b16 %v2279, %v2278
        %v2444 = vpack.c.b16 %v2281, %v2280
        %v2445 = vpack.c.b16 %v2283, %v2282
        %v2446 = vpack.c.b16 %v2285, %v2284
        %v2447 = vpack.c.b16 %v2287, %v2286
        %v2448 = vpack.c.b16 %v2289, %v2288
        %v2449 = vpack.c.b16 %v2291, %v2290
        %v2450 = vpack.c.b16 %v2293, %v2292
        %v2451 = vpack.c.b16 %v2295, %v2294
        %v2452 = vpack.c.b16 %v2297, %v2296
        %v2453 = vpack.c.b16 %v2299, %v2298
        %v2454 = vpack.c.b16 %v2301, %v2300
        %v2455 = vpack.c.b16 %v2303, %v2302
        %v2456 = vpack.c.b16 %v2305, %v2304
        %v2457 = vpack.c.b16 %v2307, %v2306
        %v2458 = vpack.c.b16 %v2309, %v2308
        %v2459 = vpack.c.b16 %v2311, %v2310
        %v2460 = vpack.c.b16 %v2313, %v2312
        %v2461 = vpack.c.b16 %v2315, %v2314
        %v2462 = vpack.c.b16 %v2317, %v2316
        %v2463 = vpack.c.b16 %v2319, %v2318
        %v2464 = vpack.c.b16 %v2321, %v2320
        %v2465 = vpack.c.b16 %v2323, %v2322
        %v2466 = vpack.c.b16 %v2325, %v2324
        %v2467 = vpack.c.b16 %v2327, %v2326
        %v2468 = vpack.c.b16 %v2329, %v2328
        %v2469 = vpack.c.b16 %v2331, %v2330
        %v2470 = vpack.c.b16 %v2333, %v2332
        %v2471 = vpack.c.b16 %v2335, %v2334
        %v2472 = vpack.c.b16 %v2337, %v2336
        %v2473 = vpack.c.b16 %v2339, %v2338
        %v2474 = vpack.c.b16 %v2341, %v2340
        %v2475 = vpack.c.b16 %v2343, %v2342
        %v2476 = vpack.c.b16 %v2345, %v2344
        %v2477 = vpack.c.b16 %v2347, %v2346
        %v2478 = vpack.c.b16 %v2349, %v2348
        %v2479 = vpack.c.b16 %v2351, %v2350
        %v2480 = vpack.c.b16 %v2353, %v2352
        %v2481 = vpack.c.b16 %v2355, %v2354
        %v2482 = vpack.c.b16 %v2357, %v2356
        %v2483 = vpack.c.b16 %v2359, %v2358
        %v2484 = vpack.c.b16 %v2361, %v2360
        %v2485 = vpack.c.b16 %v2363, %v2362
        %v2486 = vpack.c.b16 %v2365, %v2364
        %v2487 = vpack.c.b16 %v2367, %v2366
        %v2488 = vpack.c.b16 %v2369, %v2368
        %v2489 = vpack.c.b16 %v2371, %v2370
        %v2490 = vpack.c.b16 %v2373, %v2372
        %v2491 = vpack.c.b16 %v2375, %v2374
        %v2492 = vpack.c.b16 %v2377, %v2376
        %v2493 = vpack.c.b16 %v2379, %v2378
        %v2494 = vpack.c.b16 %v2381, %v2380
        %v2495 = vpack.c.b16 %v2383, %v2382
        %v2496 = vpack.c.b16 %v2385, %v2384
        %v2497 = vpack.c.b16 %v2387, %v2386
        %v2498 = vpack.c.b16 %v2389, %v2388
        %v2499 = vpack.c.b16 %v2391, %v2390
        %v2500 = vpack.c.b16 %v2393, %v2392
        %v2501 = vpack.c.b16 %v2395, %v2394
        %v2502 = vpack.c.b16 %v2397, %v2396
        %v2503 = vpack.c.b16 %v2399, %v2398
        %v2504 = vpack.c.b16 %v2401, %v2400
        %v2505 = vpack.c.b16 %v2403, %v2402
        %v2506 = vpack.c.b16 %v2405, %v2404
        %v2507 = vpack.c.b16 %v2407, %v2406
        %v2508 = vpack.c.b16 %v2409, %v2408
        %v2509 = vpack.c.b16 %v2411, %v2410
        %v2510 = vpack.c.b16 %v2413, %v2412
        %v2511 = vpack.c.b16 %v2415, %v2414
        %v2512 = vpack.c.b16 %v2417, %v2416
        %v2513 = vpack.c.b16 %v2419, %v2418
        %v2514 = vpack.c.b16 %v2421, %v2420
        %v2515 = vpack.c.b16 %v2423, %v2422
        %v2516 = vpack.c.b16 %v2425, %v2424
        %v2517 = vpack.c.b16 %v2427, %v2426
        %v2518 = vpack.c.b16 %v2429, %v2428
        %v2519 = vpack.c.b16 %v2431, %v2430
        %2608 = vmatprep.subr.bf16.mxu0 0
        %2609 = vmatpush1.bf16.msra.mxu0 %v2432
        %2610 = vmatprep.subr.bf16.mxu0 0
        %2611 = vmatpush1.bf16.msra.mxu0 %v2433
        %2612 = vmatprep.subr.bf16.mxu0 0
        %2613 = vmatpush1.bf16.msra.mxu0 %v2434
        %2614 = vmatprep.subr.bf16.mxu0 0
        %2615 = vmatpush1.bf16.msra.mxu0 %v2435
        %2616 = vmatprep.subr.bf16.mxu0 0
        %2617 = vmatpush1.bf16.msra.mxu0 %v2436
        %2618 = vmatprep.subr.bf16.mxu0 0
        %2619 = vmatpush1.bf16.msra.mxu0 %v2437
        %2620 = vmatprep.subr.bf16.mxu0 0
        %2621 = vmatpush1.bf16.msra.mxu0 %v2438
        %2622 = vmatprep.subr.bf16.mxu0 0
        %2623 = vmatpush1.bf16.msra.mxu0 %v2439
        %2624 = vmatprep.subr.bf16.mxu0 0
        %2625 = vmatpush1.bf16.msra.mxu0 %v2440
        %2626 = vmatprep.subr.bf16.mxu0 0
        %2627 = vmatpush1.bf16.msra.mxu0 %v2441
        %2628 = vmatprep.subr.bf16.mxu0 0
        %2629 = vmatpush1.bf16.msra.mxu0 %v2442
        %2630 = vmatprep.subr.bf16.mxu0 0
        %2631 = vmatpush1.bf16.msra.mxu0 %v2443
        %2632 = vmatprep.subr.bf16.mxu0 0
        %2633 = vmatpush1.bf16.msra.mxu0 %v2444
        %2634 = vmatprep.subr.bf16.mxu0 0
        %2635 = vmatpush1.bf16.msra.mxu0 %v2445
        %2636 = vmatprep.subr.bf16.mxu0 0
        %2637 = vmatpush1.bf16.msra.mxu0 %v2446
        %2638 = vmatprep.subr.bf16.mxu0 0
        %2639 = vmatpush1.bf16.msra.mxu0 %v2447
        %2640 = vmatprep.mubr.bf16.mxu0 %v1697
        %2641 = vmatmul.mubr.bf16.gmra.mrb[0].mxu0 %v1681
        %v2642 = vpop.f32.mrb[0].mxu0
        %v2643 = vadd.f32 0.0, %v2642
        %v2644 = vpop.f32.mrb[0].mxu0
        %v2645 = vpop.f32.mrb[0].mxu0
        %v2646 = vadd.f32 0.0, %v2645
        %v2647 = vpop.f32.mrb[0].mxu0
        %2648 = vmatprep.mubr.bf16.mxu0 %v1700
        %2649 = vmatmul.mubr.bf16.gmra.mrb[0].mxu0 %v1684
        %v2650 = vpop.f32.mrb[0].mxu0
        %v2651 = vadd.f32 0.0, %v2650
        %v2652 = vpop.f32.mrb[0].mxu0
        %v2653 = vpop.f32.mrb[0].mxu0
        %v2654 = vadd.f32 0.0, %v2653
        %v2655 = vpop.f32.mrb[0].mxu0
        %2656 = vdwg.mxu0
        %2657 = vmatprep.subr.bf16.mxu0 0
        %2658 = vmatpush1.bf16.msra.mxu0 %v2448
        %2659 = vmatprep.subr.bf16.mxu0 0
        %2660 = vmatpush1.bf16.msra.mxu0 %v2449
        %2661 = vmatprep.subr.bf16.mxu0 0
        %2662 = vmatpush1.bf16.msra.mxu0 %v2450
        %2663 = vmatprep.subr.bf16.mxu0 0
        %2664 = vmatpush1.bf16.msra.mxu0 %v2451
        %2665 = vmatprep.subr.bf16.mxu0 0
        %2666 = vmatpush1.bf16.msra.mxu0 %v2452
        %2667 = vmatprep.subr.bf16.mxu0 0
        %2668 = vmatpush1.bf16.msra.mxu0 %v2453
        %2669 = vmatprep.subr.bf16.mxu0 0
        %2670 = vmatpush1.bf16.msra.mxu0 %v2454
        %2671 = vmatprep.subr.bf16.mxu0 0
        %2672 = vmatpush1.bf16.msra.mxu0 %v2455
        %2673 = vmatprep.subr.bf16.mxu0 0
        %2674 = vmatpush1.bf16.msra.mxu0 %v2456
        %2675 = vmatprep.subr.bf16.mxu0 0
        %2676 = vmatpush1.bf16.msra.mxu0 %v2457
        %2677 = vmatprep.subr.bf16.mxu0 0
        %2678 = vmatpush1.bf16.msra.mxu0 %v2458
        %2679 = vmatprep.subr.bf16.mxu0 0
        %2680 = vmatpush1.bf16.msra.mxu0 %v2459
        %2681 = vmatprep.subr.bf16.mxu0 0
        %2682 = vmatpush1.bf16.msra.mxu0 %v2460
        %2683 = vmatprep.subr.bf16.mxu0 0
        %2684 = vmatpush1.bf16.msra.mxu0 %v2461
        %2685 = vmatprep.subr.bf16.mxu0 0
        %2686 = vmatpush1.bf16.msra.mxu0 %v2462
        %2687 = vmatprep.subr.bf16.mxu0 0
        %2688 = vmatpush1.bf16.msra.mxu0 %v2463
        %2689 = vmatprep.mubr.bf16.mxu0 %v1729
        %2690 = vmatmul.mubr.bf16.gmra.mrb[0].mxu0 %v1713
        %v2691 = vpop.f32.mrb[0].mxu0
        %v2692 = vadd.f32 %v2643, %v2691
        %v2693 = vpop.f32.mrb[0].mxu0
        %v2694 = vpop.f32.mrb[0].mxu0
        %v2695 = vadd.f32 %v2646, %v2694
        %v2696 = vpop.f32.mrb[0].mxu0
        %2697 = vmatprep.mubr.bf16.mxu0 %v1732
        %2698 = vmatmul.mubr.bf16.gmra.mrb[0].mxu0 %v1716
        %v2699 = vpop.f32.mrb[0].mxu0
        %v2700 = vadd.f32 %v2651, %v2699
        %v2701 = vpop.f32.mrb[0].mxu0
        %v2702 = vpop.f32.mrb[0].mxu0
        %v2703 = vadd.f32 %v2654, %v2702
        %v2704 = vpop.f32.mrb[0].mxu0
        %2705 = vdwg.mxu0
        %2706 = vmatprep.subr.bf16.mxu0 0
        %2707 = vmatpush1.bf16.msra.mxu0 %v2464
        %2708 = vmatprep.subr.bf16.mxu0 0
        %2709 = vmatpush1.bf16.msra.mxu0 %v2465
        %2710 = vmatprep.subr.bf16.mxu0 0
        %2711 = vmatpush1.bf16.msra.mxu0 %v2466
        %2712 = vmatprep.subr.bf16.mxu0 0
        %2713 = vmatpush1.bf16.msra.mxu0 %v2467
        %2714 = vmatprep.subr.bf16.mxu0 0
        %2715 = vmatpush1.bf16.msra.mxu0 %v2468
        %2716 = vmatprep.subr.bf16.mxu0 0
        %2717 = vmatpush1.bf16.msra.mxu0 %v2469
        %2718 = vmatprep.subr.bf16.mxu0 0
        %2719 = vmatpush1.bf16.msra.mxu0 %v2470
        %2720 = vmatprep.subr.bf16.mxu0 0
        %2721 = vmatpush1.bf16.msra.mxu0 %v2471
        %2722 = vmatprep.subr.bf16.mxu0 0
        %2723 = vmatpush1.bf16.msra.mxu0 %v2472
        %2724 = vmatprep.subr.bf16.mxu0 0
        %2725 = vmatpush1.bf16.msra.mxu0 %v2473
        %2726 = vmatprep.subr.bf16.mxu0 0
        %2727 = vmatpush1.bf16.msra.mxu0 %v2474
        %2728 = vmatprep.subr.bf16.mxu0 0
        %2729 = vmatpush1.bf16.msra.mxu0 %v2475
        %2730 = vmatprep.subr.bf16.mxu0 0
        %2731 = vmatpush1.bf16.msra.mxu0 %v2476
        %2732 = vmatprep.subr.bf16.mxu0 0
        %2733 = vmatpush1.bf16.msra.mxu0 %v2477
        %2734 = vmatprep.subr.bf16.mxu0 0
        %2735 = vmatpush1.bf16.msra.mxu0 %v2478
        %2736 = vmatprep.subr.bf16.mxu0 0
        %2737 = vmatpush1.bf16.msra.mxu0 %v2479
        %2738 = vmatprep.mubr.bf16.mxu0 %v1811
        %2739 = vmatmul.mubr.bf16.gmra.mrb[0].mxu0 %v1795
        %v2740 = vpop.f32.mrb[0].mxu0
        %v2741 = vadd.f32 %v2692, %v2740
        %v2742 = vpop.f32.mrb[0].mxu0
        %v2743 = vpop.f32.mrb[0].mxu0
        %v2744 = vadd.f32 %v2695, %v2743
        %v2745 = vpop.f32.mrb[0].mxu0
        %2746 = vmatprep.mubr.bf16.mxu0 %v1814
        %2747 = vmatmul.mubr.bf16.gmra.mrb[0].mxu0 %v1798
        %v2748 = vpop.f32.mrb[0].mxu0
        %v2749 = vadd.f32 %v2700, %v2748
        %v2750 = vpop.f32.mrb[0].mxu0
        %v2751 = vpop.f32.mrb[0].mxu0
        %v2752 = vadd.f32 %v2703, %v2751
        %v2753 = vpop.f32.mrb[0].mxu0
        %2754 = vdwg.mxu0
        %2755 = vmatprep.subr.bf16.mxu0 0
        %2756 = vmatpush1.bf16.msra.mxu0 %v2480
        %2757 = vmatprep.subr.bf16.mxu0 0
        %2758 = vmatpush1.bf16.msra.mxu0 %v2481
        %2759 = vmatprep.subr.bf16.mxu0 0
        %2760 = vmatpush1.bf16.msra.mxu0 %v2482
        %2761 = vmatprep.subr.bf16.mxu0 0
        %2762 = vmatpush1.bf16.msra.mxu0 %v2483
        %2763 = vmatprep.subr.bf16.mxu0 0
        %2764 = vmatpush1.bf16.msra.mxu0 %v2484
        %2765 = vmatprep.subr.bf16.mxu0 0
        %2766 = vmatpush1.bf16.msra.mxu0 %v2485
        %2767 = vmatprep.subr.bf16.mxu0 0
        %2768 = vmatpush1.bf16.msra.mxu0 %v2486
        %2769 = vmatprep.subr.bf16.mxu0 0
        %2770 = vmatpush1.bf16.msra.mxu0 %v2487
        %2771 = vmatprep.subr.bf16.mxu0 0
        %2772 = vmatpush1.bf16.msra.mxu0 %v2488
        %2773 = vmatprep.subr.bf16.mxu0 0
        %2774 = vmatpush1.bf16.msra.mxu0 %v2489
        %2775 = vmatprep.subr.bf16.mxu0 0
        %2776 = vmatpush1.bf16.msra.mxu0 %v2490
        %2777 = vmatprep.subr.bf16.mxu0 0
        %2778 = vmatpush1.bf16.msra.mxu0 %v2491
        %2779 = vmatprep.subr.bf16.mxu0 0
        %2780 = vmatpush1.bf16.msra.mxu0 %v2492
        %2781 = vmatprep.subr.bf16.mxu0 0
        %2782 = vmatpush1.bf16.msra.mxu0 %v2493
        %2783 = vmatprep.subr.bf16.mxu0 0
        %2784 = vmatpush1.bf16.msra.mxu0 %v2494
        %2785 = vmatprep.subr.bf16.mxu0 0
        %2786 = vmatpush1.bf16.msra.mxu0 %v2495
        %2787 = vmatprep.mubr.bf16.mxu0 %v1843
        %2788 = vmatmul.mubr.bf16.gmra.mrb[0].mxu0 %v1827
        %v2789 = vpop.f32.mrb[0].mxu0
        %v2790 = vadd.f32 %v2741, %v2789
        %v2791 = vpop.f32.mrb[0].mxu0
        %v2792 = vpop.f32.mrb[0].mxu0
        %v2793 = vadd.f32 %v2744, %v2792
        %v2794 = vpop.f32.mrb[0].mxu0
        %2795 = vmatprep.mubr.bf16.mxu0 %v1846
        %2796 = vmatmul.mubr.bf16.gmra.mrb[0].mxu0 %v1830
        %v2797 = vpop.f32.mrb[0].mxu0
        %v2798 = vadd.f32 %v2749, %v2797
        %v2799 = vpop.f32.mrb[0].mxu0
        %v2800 = vpop.f32.mrb[0].mxu0
        %v2801 = vadd.f32 %v2752, %v2800
        %v2802 = vpop.f32.mrb[0].mxu0
        %2803 = vdwg.mxu0
        %2804 = vmatprep.subr.bf16.mxu0 0
        %2805 = vmatpush1.bf16.msra.mxu0 %v2496
        %2806 = vmatprep.subr.bf16.mxu0 0
        %2807 = vmatpush1.bf16.msra.mxu0 %v2497
        %2808 = vmatprep.subr.bf16.mxu0 0
        %2809 = vmatpush1.bf16.msra.mxu0 %v2498
        %2810 = vmatprep.subr.bf16.mxu0 0
        %2811 = vmatpush1.bf16.msra.mxu0 %v2499
        %2812 = vmatprep.subr.bf16.mxu0 0
        %2813 = vmatpush1.bf16.msra.mxu0 %v2500
        %2814 = vmatprep.subr.bf16.mxu0 0
        %2815 = vmatpush1.bf16.msra.mxu0 %v2501
        %2816 = vmatprep.subr.bf16.mxu0 0
        %2817 = vmatpush1.bf16.msra.mxu0 %v2502
        %2818 = vmatprep.subr.bf16.mxu0 0
        %2819 = vmatpush1.bf16.msra.mxu0 %v2503
        %2820 = vmatprep.subr.bf16.mxu0 0
        %2821 = vmatpush1.bf16.msra.mxu0 %v2504
        %2822 = vmatprep.subr.bf16.mxu0 0
        %2823 = vmatpush1.bf16.msra.mxu0 %v2505
        %2824 = vmatprep.subr.bf16.mxu0 0
        %2825 = vmatpush1.bf16.msra.mxu0 %v2506
        %2826 = vmatprep.subr.bf16.mxu0 0
        %2827 = vmatpush1.bf16.msra.mxu0 %v2507
        %2828 = vmatprep.subr.bf16.mxu0 0
        %2829 = vmatpush1.bf16.msra.mxu0 %v2508
        %2830 = vmatprep.subr.bf16.mxu0 0
        %2831 = vmatpush1.bf16.msra.mxu0 %v2509
        %2832 = vmatprep.subr.bf16.mxu0 0
        %2833 = vmatpush1.bf16.msra.mxu0 %v2510
        %2834 = vmatprep.subr.bf16.mxu0 0
        %2835 = vmatpush1.bf16.msra.mxu0 %v2511
        %2836 = vmatprep.mubr.bf16.mxu0 %v1899
        %2837 = vmatmul.mubr.bf16.gmra.mrb[0].mxu0 %v1883
        %v2838 = vpop.f32.mrb[0].mxu0
        %v2839 = vadd.f32 %v2790, %v2838
        %v2840 = vpop.f32.mrb[0].mxu0
        %v2841 = vpop.f32.mrb[0].mxu0
        %v2842 = vadd.f32 %v2793, %v2841
        %v2843 = vpop.f32.mrb[0].mxu0
        %2844 = vmatprep.mubr.bf16.mxu0 %v1902
        %2845 = vmatmul.mubr.bf16.gmra.mrb[0].mxu0 %v1886
        %v2846 = vpop.f32.mrb[0].mxu0
        %v2847 = vadd.f32 %v2798, %v2846
        %v2848 = vpop.f32.mrb[0].mxu0
        %v2849 = vpop.f32.mrb[0].mxu0
        %v2850 = vadd.f32 %v2801, %v2849
        %v2851 = vpop.f32.mrb[0].mxu0
        %2852 = vdwg.mxu0
        %2853 = vmatprep.subr.bf16.mxu0 0
        %2854 = vmatpush1.bf16.msra.mxu0 %v2512
        %2855 = vmatprep.subr.bf16.mxu0 0
        %2856 = vmatpush1.bf16.msra.mxu0 %v2513
        %2857 = vmatprep.subr.bf16.mxu0 0
        %2858 = vmatpush1.bf16.msra.mxu0 %v2514
        %2859 = vmatprep.subr.bf16.mxu0 0
        %2860 = vmatpush1.bf16.msra.mxu0 %v2515
        %2861 = vmatprep.subr.bf16.mxu0 0
        %2862 = vmatpush1.bf16.msra.mxu0 %v2516
        %2863 = vmatprep.subr.bf16.mxu0 0
        %2864 = vmatpush1.bf16.msra.mxu0 %v2517
        %2865 = vmatprep.subr.bf16.mxu0 0
        %2866 = vmatpush1.bf16.msra.mxu0 %v2518
        %2867 = vmatprep.subr.bf16.mxu0 0
        %2868 = vmatpush1.bf16.msra.mxu0 %v2519
        %2869 = vmatprep.subr.bf16.mxu0 0
        %2870 = vmatpush1.bf16.msra.mxu0 0
        %2871 = vmatprep.subr.bf16.mxu0 0
        %2872 = vmatpush1.bf16.msra.mxu0 0
        %2873 = vmatprep.subr.bf16.mxu0 0
        %2874 = vmatpush1.bf16.msra.mxu0 0
        %2875 = vmatprep.subr.bf16.mxu0 0
        %2876 = vmatpush1.bf16.msra.mxu0 0
        %2877 = vmatprep.subr.bf16.mxu0 0
        %2878 = vmatpush1.bf16.msra.mxu0 0
        %2879 = vmatprep.subr.bf16.mxu0 0
        %2880 = vmatpush1.bf16.msra.mxu0 0
        %2881 = vmatprep.subr.bf16.mxu0 0
        %2882 = vmatpush1.bf16.msra.mxu0 0
        %2883 = vmatprep.subr.bf16.mxu0 0
        %2884 = vmatpush1.bf16.msra.mxu0 0
        %2885 = vmatprep.mubr.bf16.mxu0 0
        %2886 = vmatmul.mubr.bf16.gmra.mrb[0].mxu0 %v1615
        %v2887 = vpop.f32.mrb[0].mxu0
        %v2888 = vadd.f32 %v2839, %v2887
        %v2889 = vpop.f32.mrb[0].mxu0
        %v2890 = vpop.f32.mrb[0].mxu0
        %v2891 = vadd.f32 %v2842, %v2890
        %v2892 = vpop.f32.mrb[0].mxu0
        %2893 = vmatprep.mubr.bf16.mxu0 0
        %2894 = vmatmul.mubr.bf16.gmra.mrb[0].mxu0 %v1616
        %v2895 = vpop.f32.mrb[0].mxu0
        %v2896 = vadd.f32 %v2847, %v2895
        %v2897 = vpop.f32.mrb[0].mxu0
        %v2898 = vpop.f32.mrb[0].mxu0
        %v2899 = vadd.f32 %v2850, %v2898
        %v2900 = vpop.f32.mrb[0].mxu0
        %2901 = vdwg.mxu0
        %v2902 = vld [vmem:[%s508] sm:$0x1]
        %v2904 = vlaneseq
        %v2905 = vshrl.u32 %v2904, 7
        %v2906 = vsub.s32 0, %v2905
        %v2907 = vrot.slane %v2902, %v2906
        %v2909 = vmul.f32 %v2888, %v2907
        %v2910 = vmul.f32 %v2891, %v2907
        %v2911 = vmul.f32 %v2896, %v2907
        %v2912 = vmul.f32 %v2899, %v2907
        %v2913 = vld [vmem:[%s515] sm:$0x1]
        %v2915 = vlaneseq
        %v2916 = vshrl.u32 %v2915, 7
        %v2917 = vsub.s32 0, %v2916
        %v2918 = vrot.slane %v2913, %v2917
        %v2920 = vadd.f32 %v2909, %v2918
        %v2921 = vadd.f32 %v2910, %v2918
        %v2922 = vadd.f32 %v2911, %v2918
        %v2923 = vadd.f32 %v2912, %v2918
        %v2924 = vmax.f32 %v2920, 0.0
        %v2925 = vmax.f32 %v2921, 0.0
        %v2926 = vmax.f32 %v2922, 0.0
        %v2927 = vmax.f32 %v2923, 0.0
        %p2928 = scmp.eq.s32.totalorder %s33, 5
        %p2929 = scmp.eq.s32.totalorder %s34, 2
        // Predicated region
        $region77: #{_lambda_.1} parent=51 // pred_check
          %p2930 = pneg %p2929
        $region78: #{_lambda_.1} parent=51 // pred_check_branch
          %2932 = sbr.rel (%p2930) target = $region80
        $region79: #{_lambda_.1} parent=51 // pred_region
          %v2933 = vld [vmem:[#allocation4] sm:$0xff]
          %v2934 = vld [vmem:[#allocation4 + $0x8] sm:$0xff]
          %v2935 = vld [vmem:[%s437] sm:$0xf]
          %v2936 = vld [vmem:[%s437 + $0x4] sm:$0xf]
          %v2937 = vld [vmem:[%s437 + $0x8] sm:$0xf]
          %v2938 = vld [vmem:[%s437 + $0xc] sm:$0xf]
          %v2939 = vld [vmem:[%s437 + $0x10] sm:$0xf]
          %v2940 = vld [vmem:[%s437 + $0x14] sm:$0xf]
          %v2941 = vld [vmem:[%s437 + $0x18] sm:$0xf]
          %v2942 = vld [vmem:[%s437 + $0x1c] sm:$0xf]
          %v2943 = vld [vmem:[%s437 + $0x20] sm:$0xf]
          %v2944 = vld [vmem:[%s437 + $0x24] sm:$0xf]
          %v2945 = vld [vmem:[%s437 + $0x28] sm:$0xf]
          %v2946 = vld [vmem:[%s437 + $0x2c] sm:$0xf]
          %v2947 = vld [vmem:[%s437 + $0x30] sm:$0xf]
          %v2948 = vld [vmem:[%s437 + $0x34] sm:$0xf]
          %v2949 = vld [vmem:[%s437 + $0x38] sm:$0xf]
          %v2950 = vld [vmem:[%s437 + $0x3c] sm:$0xf]
          %v2967 = vunpack.c.l.b16 %v2935
          %v2968 = vunpack.c.l.b16 %v2936
          %v2969 = vunpack.c.l.b16 %v2937
          %v2970 = vunpack.c.l.b16 %v2938
          %v2971 = vunpack.c.l.b16 %v2939
          %v2972 = vunpack.c.l.b16 %v2940
          %v2973 = vunpack.c.l.b16 %v2941
          %v2974 = vunpack.c.l.b16 %v2942
          %v2975 = vunpack.c.l.b16 %v2943
          %v2976 = vunpack.c.l.b16 %v2944
          %v2977 = vunpack.c.l.b16 %v2945
          %v2978 = vunpack.c.l.b16 %v2946
          %v2979 = vunpack.c.l.b16 %v2947
          %v2980 = vunpack.c.l.b16 %v2948
          %v2981 = vunpack.c.l.b16 %v2949
          %v2982 = vunpack.c.l.b16 %v2950
          %v2983 = vpack.c.b16 %v2968, %v2967
          %v2984 = vpack.c.b16 %v2970, %v2969
          %v2985 = vpack.c.b16 %v2972, %v2971
          %v2986 = vpack.c.b16 %v2974, %v2973
          %v2987 = vpack.c.b16 %v2976, %v2975
          %v2988 = vpack.c.b16 %v2978, %v2977
          %v2989 = vpack.c.b16 %v2980, %v2979
          %v2990 = vpack.c.b16 %v2982, %v2981
          %2999 = vmatprep.subr.bf16.mxu0 0
          %3000 = vmatpush1.bf16.msra.mxu0 %v2983
          %3001 = vmatprep.subr.bf16.mxu0 0
          %3002 = vmatpush1.bf16.msra.mxu0 %v2984
          %3003 = vmatprep.subr.bf16.mxu0 0
          %3004 = vmatpush1.bf16.msra.mxu0 %v2985
          %3005 = vmatprep.subr.bf16.mxu0 0
          %3006 = vmatpush1.bf16.msra.mxu0 %v2986
          %3007 = vmatprep.subr.bf16.mxu0 0
          %3008 = vmatpush1.bf16.msra.mxu0 %v2987
          %3009 = vmatprep.subr.bf16.mxu0 0
          %3010 = vmatpush1.bf16.msra.mxu0 %v2988
          %3011 = vmatprep.subr.bf16.mxu0 0
          %3012 = vmatpush1.bf16.msra.mxu0 %v2989
          %3013 = vmatprep.subr.bf16.mxu0 0
          %3014 = vmatpush1.bf16.msra.mxu0 %v2990
          %3015 = vmatprep.subr.bf16.mxu0 0
          %3016 = vmatpush1.bf16.msra.mxu0 0
          %3017 = vmatprep.subr.bf16.mxu0 0
          %3018 = vmatpush1.bf16.msra.mxu0 0
          %3019 = vmatprep.subr.bf16.mxu0 0
          %3020 = vmatpush1.bf16.msra.mxu0 0
          %3021 = vmatprep.subr.bf16.mxu0 0
          %3022 = vmatpush1.bf16.msra.mxu0 0
          %3023 = vmatprep.subr.bf16.mxu0 0
          %3024 = vmatpush1.bf16.msra.mxu0 0
          %3025 = vmatprep.subr.bf16.mxu0 0
          %3026 = vmatpush1.bf16.msra.mxu0 0
          %3027 = vmatprep.subr.bf16.mxu0 0
          %3028 = vmatpush1.bf16.msra.mxu0 0
          %3029 = vmatprep.subr.bf16.mxu0 0
          %3030 = vmatpush1.bf16.msra.mxu0 0
          %3031 = vmatprep.mubr.bf16.mxu0 0
          %3032 = vmatmul.mubr.bf16.gmra.mrb[0].mxu0 %v2933
          %v3033 = vpop.f32.mrb[0].mxu0
          %v3034 = vadd.f32 0.0, %v3033
          %v3035 = vpop.f32.mrb[0].mxu0
          %v3036 = vpop.f32.mrb[0].mxu0
          %v3037 = vadd.f32 0.0, %v3036
          %v3038 = vpop.f32.mrb[0].mxu0
          %3039 = vmatprep.mubr.bf16.mxu0 0
          %3040 = vmatmul.mubr.bf16.gmra.mrb[0].mxu0 %v2934
          %v3041 = vpop.f32.mrb[0].mxu0
          %v3042 = vadd.f32 0.0, %v3041
          %v3043 = vpop.f32.mrb[0].mxu0
          %v3044 = vpop.f32.mrb[0].mxu0
          %v3045 = vadd.f32 0.0, %v3044
          %v3046 = vpop.f32.mrb[0].mxu0
          %3047 = vdwg.mxu0
          %v3048 = vld [vmem:[%s520] sm:$0x1]
          %v3050 = vlaneseq
          %v3051 = vshrl.u32 %v3050, 7
          %v3052 = vsub.s32 0, %v3051
          %v3053 = vrot.slane %v3048, %v3052
          %v3055 = vmul.f32 %v3034, %v3053
          %v3056 = vmul.f32 %v3037, %v3053
          %v3057 = vmul.f32 %v3042, %v3053
          %v3058 = vmul.f32 %v3045, %v3053
          %v3059 = vld [vmem:[%s445] sm:$0x1]
          %v3061 = vlaneseq
          %v3062 = vshrl.u32 %v3061, 7
          %v3063 = vsub.s32 0, %v3062
          %v3064 = vrot.slane %v3059, %v3063
          %v3066 = vadd.f32 %v3055, %v3064
          %v3067 = vadd.f32 %v3056, %v3064
          %v3068 = vadd.f32 %v3057, %v3064
          %v3069 = vadd.f32 %v3058, %v3064
          %v3070 = vadd.f32 %v2924, %v3066
          %v3071 = vadd.f32 %v2925, %v3067
          %v3072 = vadd.f32 %v2926, %v3068
          %v3073 = vadd.f32 %v2927, %v3069
          %v3074 = vmax.f32 %v3070, 0.0
          %v3075 = vmax.f32 %v3071, 0.0
          %v3076 = vmax.f32 %v3072, 0.0
          %v3077 = vmax.f32 %v3073, 0.0
          %v3078 = vpack.c.bf16 %v3075, %v3074
          %v3079 = vpack.c.bf16 %v3077, %v3076
          %3080 = vst [vmem:[#allocation2] sm:$0xff] %v3078
          %3081 = vst [vmem:[#allocation2 + $0x8] sm:$0xff] %v3079
          // Predicated region
          $region81: #{_lambda_.1} parent=79 // pred_check
            %p3082 = pneg %p2928
          $region82: #{_lambda_.1} parent=79 // pred_check_branch
            %3084 = sbr.rel (%p3082) target = $region84
          $region83: #{_lambda_.1} parent=79 // pred_region
            %3085 = vst [vmem:[#allocation13] sm:$0xff] %v3074
            %3086 = vst [vmem:[#allocation13 + $0x8] sm:$0xff] %v3075
            %3087 = vst [vmem:[#allocation13 + $0x10] sm:$0xff] %v3076
            %3088 = vst [vmem:[#allocation13 + $0x18] sm:$0xff] %v3077
          $region84: #{_lambda_.1} parent=79 // pred_fallthru
            _
        $region80: #{_lambda_.1} parent=51 // pred_fallthru
          _
        %p3089 = scmp.ne.s32.totalorder %s34, 2
        // Predicated region
        $region85: #{_lambda_.1} parent=51 // pred_check
          %p3090 = pneg %p3089
        $region86: #{_lambda_.1} parent=51 // pred_check_branch
          %3092 = sbr.rel (%p3090) target = $region88
        $region87: #{_lambda_.1} parent=51 // pred_region
          %v3093 = vpack.c.bf16 %v2925, %v2924
          %v3094 = vpack.c.bf16 %v2927, %v2926
          %3095 = vst [vmem:[#allocation2] sm:$0xff] %v3093
          %3096 = vst [vmem:[#allocation2 + $0x8] sm:$0xff] %v3094
        $region88: #{_lambda_.1} parent=51 // pred_fallthru
          _
        // Predicated region
        $region89: #{_lambda_.1} parent=51 // pred_check
          %p3097 = pneg %p273
        $region90: #{_lambda_.1} parent=51 // pred_check_branch
          %3099 = sbr.rel (%p3097) target = $region92
        $region91: #{_lambda_.1} parent=51 // pred_region
          %s3101 = ssub.s32 512, 512
          %3102 = vsyncadd [#allocation7], %s3101
          %s3103 = sshll.u32 [#allocation13], 4
          %s3104 = int_to_ptr.vmem [resolvable:$true] %s3103
          %3109 = dma.vmem_to_hbm [thread:$0]  %s3104, 512, %s8, [#allocation7], 128, 128, 8
        $region92: #{_lambda_.1} parent=51 // pred_fallthru
          _
        // Predicated region
        $region93: #{_lambda_.1} parent=51 // pred_check
          %p3110 = pneg %p273
        $region94: #{_lambda_.1} parent=51 // pred_check_branch
          %3112 = sbr.rel (%p3110) target = $region96
        $region95: #{_lambda_.1} parent=51 // pred_region
          %3113 = dma.done [#allocation7], 512
        $region96: #{_lambda_.1} parent=51 // pred_fallthru
          _
      $region52: #{_lambda_.1} parent=5 // pred_fallthru
        _
      %p3114 = scmp.le.s32.totalorder 2, %s24
      // Predicated region
      $region97: #{_lambda_.1} parent=5 // pred_check
        %p3115 = pneg %p3114
      $region98: #{_lambda_.1} parent=5 // pred_check_branch
        %3117 = sbr.rel (%p3115) target = $region100
      $region99: #{_lambda_.1} parent=5 // pred_region
        %s3118 = ssub.s32 %s24, 2
      $region100: #{_lambda_.1} parent=5 // pred_fallthru
        _
    $region6: #{_lambda_.1} parent=1 // loop_footer
      %s28 = sadd.s32 1, %s24
    $region7: #{_lambda_.1} parent=1 // loop_footer_branch
      %23 = sbr.rel target = $region3
    $region8: #{_lambda_.1} parent=1 // loop_exit
      _
    %3119 = vsyncpa [#allocation6], 1
    %s3120 = scalar_lea.sflag [#allocation6], 1
    %3121 = vsyncpa %s3120, 1
    %3122 = vsyncpa [#allocation9], 1
    %s3123 = scalar_lea.sflag [#allocation9], 1
    %3124 = vsyncpa %s3123, 1
    %3125 = vsyncpa [#allocation12], 1
    %s3126 = scalar_lea.sflag [#allocation12], 1
    %3127 = vsyncpa %s3126, 1
    %3128 = vsyncpa [#allocation7], 1
    %s3129 = scalar_lea.sflag [#allocation7], 1
    %3130 = vsyncpa %s3129, 1

</llo_original>
